<compile_context>
chip_gen: v7x
topology: tpu7x:2x2x1
jax: 0.10.0
libtpu: 0.0.40
codegen_flags: <defaults>
</compile_context>

<pallas_src>
import functools

import jax
import jax.numpy as jnp
from jax.experimental import pallas as pl
from jax.experimental.pallas import tpu as pltpu


# ----------------------------------------------------------------------------
# align_corners=True 1-D bilinear interpolation matrix (dst, src).
# Resize(x) == M_rows @ x @ M_cols^T, matching F.interpolate(..., 'bilinear',
# align_corners=True) for both up- and down-sampling.
# ----------------------------------------------------------------------------
def _interp_matrix_1d(dst, src):
    scale = 0.0 if dst <= 1 else (src - 1) / (dst - 1)
    pos = jnp.arange(dst, dtype=jnp.float32) * scale
    i0 = jnp.clip(jnp.floor(pos).astype(jnp.int32), 0, src - 1)
    i1 = jnp.clip(i0 + 1, 0, src - 1)
    frac = pos - i0.astype(jnp.float32)
    rows = jnp.arange(dst)
    m = jnp.zeros((dst, src), jnp.float32)
    m = m.at[rows, i0].add(1.0 - frac)
    m = m.at[rows, i1].add(frac)
    return m


def _nearest_expand_matrix(dst, scale):
    """0/1 matrix R (dst, dst//scale) with R[y, y//scale] = 1 (nearest x-scale)."""
    rows = jnp.arange(dst)
    m = jnp.zeros((dst, dst // scale), jnp.float32)
    m = m.at[rows, rows // scale].set(1.0)
    return m


# ----------------------------------------------------------------------------
# Fused kernel: one grid step per batch element.
#   per channel c:
#     - depthwise 3x3 conv of hr -> key/value (VPU FMAs, scalar SMEM weights)
#     - key/value: (bilinear downsample -> nearest x2 upsample -> zero halo)
#       folded into two matmuls with Ah_pad / Aw_padT, stored to VMEM scratch
#     - bilinear upsample of lr (two matmuls) + depthwise 3x3 conv -> query
#   then local attention over kH*kW window taps at FULL resolution:
#     score_t[y,x] = sum_c q[c,y,x] * Kpad[c, 2*dy + y, 2*dx + x]
#     softmax over taps, weighted sum of Vpad taps, residual add of lr_up.
#   (Even tap offsets on the nearest-upsampled key/value reproduce exactly the
#    reference's stride-2 phase split; OOB taps are zero, as in the CUDA op.)
# ----------------------------------------------------------------------------
def fused_kernel(hr_ref, lr_ref, uh_ref, uwT_ref, ahp_ref, awpT_ref,
                 w_ref, b_ref, o_ref, pad_scr, kpad, vpad,
                 *, C, kH, kW, scale):
    H, W = hr_ref.shape[1], hr_ref.shape[2]
    f32 = jnp.float32

    uh = uh_ref[...]        # (H, h)
    uwT = uwT_ref[...]      # (h, W)  (wait: (w, W))
    ahp = ahp_ref[...]      # (PH, H)
    awpT = awpT_ref[...]    # (W, PW)

    # Conv halo scratch: zero ONCE per grid step; only the interior is ever
    # rewritten, so the 1-pixel border stays zero for all channels/branches.
    pad_scr[...] = jnp.zeros_like(pad_scr)

    up_planes = []
    q_planes = []
    for c in range(C):
        # ---- depthwise 3x3 "same" convs of hr -> key & value (full res) ----
        pad_scr[1:H + 1, 1:W + 1] = hr_ref[c].astype(f32)
        k_acc = jnp.zeros((H, W), f32)
        v_acc = jnp.zeros((H, W), f32)
        for t in range(9):
            dy, dx = divmod(t, 3)
            tap = pad_scr[dy:dy + H, dx:dx + W]
            k_acc = k_acc + w_ref[(1 * C + c) * 9 + t] * tap   # key conv
            v_acc = v_acc + w_ref[(2 * C + c) * 9 + t] * tap   # value conv
        k_acc = k_acc + b_ref[1 * C + c]
        v_acc = v_acc + b_ref[2 * C + c]

        # ---- folded downsample->nearest-upsample->zero-halo (full stores) ----
        kpad[c] = jnp.dot(jnp.dot(ahp, k_acc, preferred_element_type=f32),
                          awpT, preferred_element_type=f32)
        vpad[c] = jnp.dot(jnp.dot(ahp, v_acc, preferred_element_type=f32),
                          awpT, preferred_element_type=f32)

        # ---- bilinear upsample of lr (align_corners=True) + query conv ----
        up = jnp.dot(jnp.dot(uh, lr_ref[c].astype(f32),
                             preferred_element_type=f32),
                     uwT, preferred_element_type=f32)
        up_planes.append(up)

        pad_scr[1:H + 1, 1:W + 1] = up
        q_acc = jnp.zeros((H, W), f32)
        for t in range(9):
            dy, dx = divmod(t, 3)
            q_acc = q_acc + (w_ref[(0 * C + c) * 9 + t]
                             * pad_scr[dy:dy + H, dx:dx + W])   # query conv
        q_acc = q_acc + b_ref[0 * C + c]
        q_planes.append(q_acc)

    # ---- local attention, two-pass softmax over the kH*kW window taps ----
    scores = []
    for dy in range(kH):
        for dx in range(kW):
            y0, x0 = scale * dy, scale * dx
            s = q_planes[0] * kpad[0, y0:y0 + H, x0:x0 + W]
            for c in range(1, C):
                s = s + q_planes[c] * kpad[c, y0:y0 + H, x0:x0 + W]
            scores.append(s)

    m = scores[0]
    for s in scores[1:]:
        m = jnp.maximum(m, s)

    z = jnp.zeros((H, W), f32)
    acc = [jnp.zeros((H, W), f32) for _ in range(C)]
    t = 0
    for dy in range(kH):
        for dx in range(kW):
            e = jnp.exp(scores[t] - m)
            z = z + e
            y0, x0 = scale * dy, scale * dx
            for c in range(C):
                acc[c] = acc[c] + e * vpad[c, y0:y0 + H, x0:x0 + W]
            t += 1

    inv_z = pl.reciprocal(z, approx=False)
    for c in range(C):
        o_ref[c] = (up_planes[c] + acc[c] * inv_z).astype(o_ref.dtype)


# ----------------------------------------------------------------------------
# Module wrapper (parameters self-initialized: kaiming_normal_(a=1) on
# depthwise (C,1,3,3) weights -> std = 1/3; biases zero).
# ----------------------------------------------------------------------------
class MyAttentionV5Pallas:
    SCALE = 2  # scale_factor hard-coded in the reference forward

    def __init__(self, feat_dim, kW, kH, key):
        self.kW, self.kH, self.C = kW, kH, feat_dim
        C = feat_dim
        std = 1.0 / 3.0  # gain=1 (a=1), fan_in = 1*3*3 for groups=C conv
        kq, kk, kv = jax.random.split(key, 3)
        # Layout: [query(C*9), key(C*9), value(C*9)] flattened for 1-D SMEM.
        wq = jax.random.normal(kq, (C, 9), jnp.float32) * std
        wk = jax.random.normal(kk, (C, 9), jnp.float32) * std
        wv = jax.random.normal(kv, (C, 9), jnp.float32) * std
        self.w_flat = jnp.concatenate(
            [wq.reshape(-1), wk.reshape(-1), wv.reshape(-1)])   # (3*C*9,)
        self.b_flat = jnp.zeros((3 * C,), jnp.float32)          # (3*C,)

    def __call__(self, hr_feat, lr_feat):   # NCHW in, NCHW out
        N, C, H, W = hr_feat.shape
        _, _, h, w = lr_feat.shape
        s = self.SCALE
        assert H % s == 0 and W % s == 0
        assert self.kH % 2 == 1 and self.kW % 2 == 1
        Hs, Ws = H // s, W // s
        rH, rW = self.kH // 2, self.kW // 2
        PH, PW = H + 2 * s * rH, W + 2 * s * rW

        # align_corners=True interpolation matrices (host-side constants).
        uh = _interp_matrix_1d(H, h)            # (H, h)   upsample rows
        uwT = _interp_matrix_1d(W, w).T         # (w, W)   upsample cols
        dh = _interp_matrix_1d(Hs, H)           # (Hs, H)  downsample rows
        dw = _interp_matrix_1d(Ws, W)           # (Ws, W)  downsample cols
        rh = _nearest_expand_matrix(H, s)       # (H, Hs)  nearest x2 rows
        rw = _nearest_expand_matrix(W, s)       # (W, Ws)  nearest x2 cols
        # downsample -> nearest-upsample, plus the attention zero-halo,
        # folded into one pair of matrices:
        ahp = jnp.pad(rh @ dh, ((s * rH, s * rH), (0, 0)))      # (PH, H)
        awpT = jnp.pad(rw @ dw, ((s * rW, s * rW), (0, 0))).T   # (W, PW)

        kern = functools.partial(fused_kernel, C=C, kH=self.kH, kW=self.kW,
                                 scale=s)
        return pl.pallas_call(
            kern,
            out_shape=jax.ShapeDtypeStruct((N, C, H, W), jnp.float32),
            grid=(N,),
            in_specs=[
                pl.BlockSpec((None, C, H, W), lambda n: (n, 0, 0, 0)),   # hr
                pl.BlockSpec((None, C, h, w), lambda n: (n, 0, 0, 0)),   # lr
                pl.BlockSpec((H, h), lambda n: (0, 0)),                  # uh
                pl.BlockSpec((w, W), lambda n: (0, 0)),                  # uwT
                pl.BlockSpec((PH, H), lambda n: (0, 0)),                 # ahp
                pl.BlockSpec((W, PW), lambda n: (0, 0)),                 # awpT
                pl.BlockSpec(memory_space=pltpu.MemorySpace.SMEM),       # w
                pl.BlockSpec(memory_space=pltpu.MemorySpace.SMEM),       # b
            ],
            out_specs=pl.BlockSpec((None, C, H, W), lambda n: (n, 0, 0, 0)),
            scratch_shapes=[
                pltpu.VMEM((H + 2, W + 2), jnp.float32),   # conv halo
                pltpu.VMEM((C, PH, PW), jnp.float32),      # padded key
                pltpu.VMEM((C, PH, PW), jnp.float32),      # padded value
            ],
            compiler_params=pltpu.CompilerParams(
                dimension_semantics=("parallel",),
                vmem_limit_bytes=48 * 1024 * 1024),
        )(hr_feat, lr_feat, uh, uwT, ahp, awpT, self.w_flat, self.b_flat)


if __name__ == "__main__":
    key = jax.random.PRNGKey(0)
    kp, kx, ky = jax.random.split(key, 3)

    feat_dim = 4
    kH = kW = 3
    N, H, W = 2, 16, 16
    h, w = 8, 8

    hr_feat = jax.random.normal(kx, (N, feat_dim, H, W), jnp.float32)
    lr_feat = jax.random.normal(ky, (N, feat_dim, h, w), jnp.float32)

    module = MyAttentionV5Pallas(feat_dim, kW, kH, kp)
    forward = jax.jit(module.__call__)
    result = forward(hr_feat, lr_feat)
    jax.block_until_ready(result)

    assert result.shape == (N, feat_dim, H, W)
    assert bool(jnp.all(jnp.isfinite(result)))
    print("KERNEL_OK")
</pallas_src>

<mosaic_0001>
module attributes {stable_mosaic.version = 11 : i64} {
  func.func private @main(%arg0: i32) attributes {dimension_semantics = [#tpu.dimension_semantics<core_parallel>], iteration_bounds = array<i64: 2>, tpu.core_type = #tpu.core_type<sc_scalar_subcore>, window_params = []} {
    return
  }
}

module attributes {stable_mosaic.version = 11 : i64} {
  func.func private @main(%arg0: i32) attributes {dimension_semantics = [#tpu.dimension_semantics<core_parallel>], iteration_bounds = array<i64: 2>, tpu.core_type = #tpu.core_type<sc_scalar_subcore>, window_params = []} {
    return
  }
}

module attributes {stable_mosaic.version = 11 : i64} {
  func.func @fused_kernel(%arg0: i32, %arg1: memref<1x4x16x16xf32, #tpu.memory_space<vmem>>, %arg2: memref<1x4x8x8xf32, #tpu.memory_space<vmem>>, %arg3: memref<16x8xf32, #tpu.memory_space<vmem>>, %arg4: memref<8x16xf32, #tpu.memory_space<vmem>>, %arg5: memref<20x16xf32, #tpu.memory_space<vmem>>, %arg6: memref<16x20xf32, #tpu.memory_space<vmem>>, %arg7: memref<108xf32, #tpu.memory_space<smem>>, %arg8: memref<12xf32, #tpu.memory_space<smem>>, %arg9: memref<1x4x16x16xf32, #tpu.memory_space<vmem>>, %arg10: memref<18x18xf32, #tpu.memory_space<vmem>>, %arg11: memref<4x20x20xf32, #tpu.memory_space<vmem>>, %arg12: memref<4x20x20xf32, #tpu.memory_space<vmem>>) attributes {dimension_semantics = [#tpu.dimension_semantics<parallel>], iteration_bounds = array<i64: 2>, scalar_prefetch = 0 : i64, scratch_operands = 3 : i64, tpu.core_type = #tpu.core_type<tc>, window_params = [{transform_indices = @transform_0, window_bounds = array<i64: 1, 4, 16, 16>}, {transform_indices = @transform_1, window_bounds = array<i64: 1, 4, 8, 8>}, {pipeline_mode = #tpu.pipeline_mode<synchronous>, transform_indices = @transform_2, window_bounds = array<i64: 16, 8>}, {pipeline_mode = #tpu.pipeline_mode<synchronous>, transform_indices = @transform_3, window_bounds = array<i64: 8, 16>}, {pipeline_mode = #tpu.pipeline_mode<synchronous>, transform_indices = @transform_4, window_bounds = array<i64: 20, 16>}, {pipeline_mode = #tpu.pipeline_mode<synchronous>, transform_indices = @transform_5, window_bounds = array<i64: 16, 20>}, {transform_indices = @transform_6, window_bounds = array<i64: 108>}, {transform_indices = @transform_7, window_bounds = array<i64: 12>}, {transform_indices = @transform_8, window_bounds = array<i64: 1, 4, 16, 16>}]} {
    %c0 = arith.constant 0 : index
    %c0_0 = arith.constant 0 : index
    %0 = vector.load %arg3[%c0, %c0_0] : memref<16x8xf32, #tpu.memory_space<vmem>>, vector<16x8xf32>
    %c0_1 = arith.constant 0 : index
    %c0_2 = arith.constant 0 : index
    %1 = vector.load %arg4[%c0_1, %c0_2] : memref<8x16xf32, #tpu.memory_space<vmem>>, vector<8x16xf32>
    %c0_3 = arith.constant 0 : index
    %c0_4 = arith.constant 0 : index
    %2 = vector.load %arg5[%c0_3, %c0_4] : memref<20x16xf32, #tpu.memory_space<vmem>>, vector<20x16xf32>
    %c0_5 = arith.constant 0 : index
    %c0_6 = arith.constant 0 : index
    %3 = vector.load %arg6[%c0_5, %c0_6] : memref<16x20xf32, #tpu.memory_space<vmem>>, vector<16x20xf32>
    %cst = arith.constant 0.000000e+00 : f32
    %4 = vector.broadcast %cst : f32 to vector<18x18xf32>
    %c0_7 = arith.constant 0 : index
    %c0_8 = arith.constant 0 : index
    %5 = vector.load %arg10[%c0_7, %c0_8] : memref<18x18xf32, #tpu.memory_space<vmem>>, vector<18x18xf32>
    tpu.vector_store %arg10[%c0_7, %c0_8], %4 {strides = array<i32>} : memref<18x18xf32, #tpu.memory_space<vmem>>, vector<18x18xf32>,
    %c0_9 = arith.constant 0 : index
    %c0_10 = arith.constant 0 : index
    %c0_11 = arith.constant 0 : index
    %c0_12 = arith.constant 0 : index
    %6 = vector.load %arg1[%c0_9, %c0_10, %c0_11, %c0_12] : memref<1x4x16x16xf32, #tpu.memory_space<vmem>>, vector<1x1x16x16xf32>
    %7 = vector.shape_cast %6 : vector<1x1x16x16xf32> to vector<16x16xf32>
    %c1 = arith.constant 1 : index
    %c1_13 = arith.constant 1 : index
    %8 = vector.load %arg10[%c1, %c1_13] : memref<18x18xf32, #tpu.memory_space<vmem>>, vector<16x16xf32>
    tpu.vector_store %arg10[%c1, %c1_13], %7 {strides = array<i32>} : memref<18x18xf32, #tpu.memory_space<vmem>>, vector<16x16xf32>,
    %cst_14 = arith.constant 0.000000e+00 : f32
    %9 = vector.broadcast %cst_14 : f32 to vector<16x16xf32>
    %cst_15 = arith.constant 0.000000e+00 : f32
    %10 = vector.broadcast %cst_15 : f32 to vector<16x16xf32>
    %c0_16 = arith.constant 0 : index
    %c0_17 = arith.constant 0 : index
    %11 = vector.load %arg10[%c0_16, %c0_17] : memref<18x18xf32, #tpu.memory_space<vmem>>, vector<16x16xf32>
    %c36 = arith.constant 36 : index
    %12 = memref.load %arg7[%c36] : memref<108xf32, #tpu.memory_space<smem>>
    %13 = vector.broadcast %12 : f32 to vector<16x16xf32>
    %14 = arith.mulf %13, %11 : vector<16x16xf32>
    %15 = arith.addf %9, %14 : vector<16x16xf32>
    %c72 = arith.constant 72 : index
    %16 = memref.load %arg7[%c72] : memref<108xf32, #tpu.memory_space<smem>>
    %17 = vector.broadcast %16 : f32 to vector<16x16xf32>
    %18 = arith.mulf %17, %11 : vector<16x16xf32>
    %19 = arith.addf %10, %18 : vector<16x16xf32>
    %c0_18 = arith.constant 0 : index
    %c1_19 = arith.constant 1 : index
    %20 = vector.load %arg10[%c0_18, %c1_19] : memref<18x18xf32, #tpu.memory_space<vmem>>, vector<16x16xf32>
    %c37 = arith.constant 37 : index
    %21 = memref.load %arg7[%c37] : memref<108xf32, #tpu.memory_space<smem>>
    %22 = vector.broadcast %21 : f32 to vector<16x16xf32>
    %23 = arith.mulf %22, %20 : vector<16x16xf32>
    %24 = arith.addf %15, %23 : vector<16x16xf32>
    %c73 = arith.constant 73 : index
    %25 = memref.load %arg7[%c73] : memref<108xf32, #tpu.memory_space<smem>>
    %26 = vector.broadcast %25 : f32 to vector<16x16xf32>
    %27 = arith.mulf %26, %20 : vector<16x16xf32>
    %28 = arith.addf %19, %27 : vector<16x16xf32>
    %c0_20 = arith.constant 0 : index
    %c2 = arith.constant 2 : index
    %29 = vector.load %arg10[%c0_20, %c2] : memref<18x18xf32, #tpu.memory_space<vmem>>, vector<16x16xf32>
    %c38 = arith.constant 38 : index
    %30 = memref.load %arg7[%c38] : memref<108xf32, #tpu.memory_space<smem>>
    %31 = vector.broadcast %30 : f32 to vector<16x16xf32>
    %32 = arith.mulf %31, %29 : vector<16x16xf32>
    %33 = arith.addf %24, %32 : vector<16x16xf32>
    %c74 = arith.constant 74 : index
    %34 = memref.load %arg7[%c74] : memref<108xf32, #tpu.memory_space<smem>>
    %35 = vector.broadcast %34 : f32 to vector<16x16xf32>
    %36 = arith.mulf %35, %29 : vector<16x16xf32>
    %37 = arith.addf %28, %36 : vector<16x16xf32>
    %c1_21 = arith.constant 1 : index
    %c0_22 = arith.constant 0 : index
    %38 = vector.load %arg10[%c1_21, %c0_22] : memref<18x18xf32, #tpu.memory_space<vmem>>, vector<16x16xf32>
    %c39 = arith.constant 39 : index
    %39 = memref.load %arg7[%c39] : memref<108xf32, #tpu.memory_space<smem>>
    %40 = vector.broadcast %39 : f32 to vector<16x16xf32>
    %41 = arith.mulf %40, %38 : vector<16x16xf32>
    %42 = arith.addf %33, %41 : vector<16x16xf32>
    %c75 = arith.constant 75 : index
    %43 = memref.load %arg7[%c75] : memref<108xf32, #tpu.memory_space<smem>>
    %44 = vector.broadcast %43 : f32 to vector<16x16xf32>
    %45 = arith.mulf %44, %38 : vector<16x16xf32>
    %46 = arith.addf %37, %45 : vector<16x16xf32>
    %c1_23 = arith.constant 1 : index
    %c1_24 = arith.constant 1 : index
    %47 = vector.load %arg10[%c1_23, %c1_24] : memref<18x18xf32, #tpu.memory_space<vmem>>, vector<16x16xf32>
    %c40 = arith.constant 40 : index
    %48 = memref.load %arg7[%c40] : memref<108xf32, #tpu.memory_space<smem>>
    %49 = vector.broadcast %48 : f32 to vector<16x16xf32>
    %50 = arith.mulf %49, %47 : vector<16x16xf32>
    %51 = arith.addf %42, %50 : vector<16x16xf32>
    %c76 = arith.constant 76 : index
    %52 = memref.load %arg7[%c76] : memref<108xf32, #tpu.memory_space<smem>>
    %53 = vector.broadcast %52 : f32 to vector<16x16xf32>
    %54 = arith.mulf %53, %47 : vector<16x16xf32>
    %55 = arith.addf %46, %54 : vector<16x16xf32>
    %c1_25 = arith.constant 1 : index
    %c2_26 = arith.constant 2 : index
    %56 = vector.load %arg10[%c1_25, %c2_26] : memref<18x18xf32, #tpu.memory_space<vmem>>, vector<16x16xf32>
    %c41 = arith.constant 41 : index
    %57 = memref.load %arg7[%c41] : memref<108xf32, #tpu.memory_space<smem>>
    %58 = vector.broadcast %57 : f32 to vector<16x16xf32>
    %59 = arith.mulf %58, %56 : vector<16x16xf32>
    %60 = arith.addf %51, %59 : vector<16x16xf32>
    %c77 = arith.constant 77 : index
    %61 = memref.load %arg7[%c77] : memref<108xf32, #tpu.memory_space<smem>>
    %62 = vector.broadcast %61 : f32 to vector<16x16xf32>
    %63 = arith.mulf %62, %56 : vector<16x16xf32>
    %64 = arith.addf %55, %63 : vector<16x16xf32>
    %c2_27 = arith.constant 2 : index
    %c0_28 = arith.constant 0 : index
    %65 = vector.load %arg10[%c2_27, %c0_28] : memref<18x18xf32, #tpu.memory_space<vmem>>, vector<16x16xf32>
    %c42 = arith.constant 42 : index
    %66 = memref.load %arg7[%c42] : memref<108xf32, #tpu.memory_space<smem>>
    %67 = vector.broadcast %66 : f32 to vector<16x16xf32>
    %68 = arith.mulf %67, %65 : vector<16x16xf32>
    %69 = arith.addf %60, %68 : vector<16x16xf32>
    %c78 = arith.constant 78 : index
    %70 = memref.load %arg7[%c78] : memref<108xf32, #tpu.memory_space<smem>>
    %71 = vector.broadcast %70 : f32 to vector<16x16xf32>
    %72 = arith.mulf %71, %65 : vector<16x16xf32>
    %73 = arith.addf %64, %72 : vector<16x16xf32>
    %c2_29 = arith.constant 2 : index
    %c1_30 = arith.constant 1 : index
    %74 = vector.load %arg10[%c2_29, %c1_30] : memref<18x18xf32, #tpu.memory_space<vmem>>, vector<16x16xf32>
    %c43 = arith.constant 43 : index
    %75 = memref.load %arg7[%c43] : memref<108xf32, #tpu.memory_space<smem>>
    %76 = vector.broadcast %75 : f32 to vector<16x16xf32>
    %77 = arith.mulf %76, %74 : vector<16x16xf32>
    %78 = arith.addf %69, %77 : vector<16x16xf32>
    %c79 = arith.constant 79 : index
    %79 = memref.load %arg7[%c79] : memref<108xf32, #tpu.memory_space<smem>>
    %80 = vector.broadcast %79 : f32 to vector<16x16xf32>
    %81 = arith.mulf %80, %74 : vector<16x16xf32>
    %82 = arith.addf %73, %81 : vector<16x16xf32>
    %c2_31 = arith.constant 2 : index
    %c2_32 = arith.constant 2 : index
    %83 = vector.load %arg10[%c2_31, %c2_32] : memref<18x18xf32, #tpu.memory_space<vmem>>, vector<16x16xf32>
    %c44 = arith.constant 44 : index
    %84 = memref.load %arg7[%c44] : memref<108xf32, #tpu.memory_space<smem>>
    %85 = vector.broadcast %84 : f32 to vector<16x16xf32>
    %86 = arith.mulf %85, %83 : vector<16x16xf32>
    %87 = arith.addf %78, %86 : vector<16x16xf32>
    %c80 = arith.constant 80 : index
    %88 = memref.load %arg7[%c80] : memref<108xf32, #tpu.memory_space<smem>>
    %89 = vector.broadcast %88 : f32 to vector<16x16xf32>
    %90 = arith.mulf %89, %83 : vector<16x16xf32>
    %91 = arith.addf %82, %90 : vector<16x16xf32>
    %c4 = arith.constant 4 : index
    %92 = memref.load %arg8[%c4] : memref<12xf32, #tpu.memory_space<smem>>
    %93 = vector.broadcast %92 : f32 to vector<16x16xf32>
    %94 = arith.addf %87, %93 : vector<16x16xf32>
    %c8 = arith.constant 8 : index
    %95 = memref.load %arg8[%c8] : memref<12xf32, #tpu.memory_space<smem>>
    %96 = vector.broadcast %95 : f32 to vector<16x16xf32>
    %97 = arith.addf %91, %96 : vector<16x16xf32>
    %cst_33 = arith.constant dense<0.000000e+00> : vector<20x16xf32>
    %98 = tpu.matmul %2, %94, %cst_33 {dimension_numbers = #tpu.dot_dimension_numbers<[1], [0], [0], [1], [0, 0, 1, 1], [], []>} : vector<20x16xf32>, vector<16x16xf32>, vector<20x16xf32> -> vector<20x16xf32>
    %cst_34 = arith.constant dense<0.000000e+00> : vector<20x20xf32>
    %99 = tpu.matmul %98, %3, %cst_34 {dimension_numbers = #tpu.dot_dimension_numbers<[1], [0], [0], [1], [0, 0, 1, 1], [], []>} : vector<20x16xf32>, vector<16x20xf32>, vector<20x20xf32> -> vector<20x20xf32>
    %c0_35 = arith.constant 0 : index
    %c0_36 = arith.constant 0 : index
    %c0_37 = arith.constant 0 : index
    %100 = vector.load %arg11[%c0_35, %c0_36, %c0_37] : memref<4x20x20xf32, #tpu.memory_space<vmem>>, vector<1x20x20xf32>
    %101 = vector.shape_cast %100 : vector<1x20x20xf32> to vector<20x20xf32>
    %102 = vector.shape_cast %99 : vector<20x20xf32> to vector<1x20x20xf32>
    tpu.vector_store %arg11[%c0_35, %c0_36, %c0_37], %102 {strides = array<i32>} : memref<4x20x20xf32, #tpu.memory_space<vmem>>, vector<1x20x20xf32>,
    %cst_38 = arith.constant dense<0.000000e+00> : vector<20x16xf32>
    %103 = tpu.matmul %2, %97, %cst_38 {dimension_numbers = #tpu.dot_dimension_numbers<[1], [0], [0], [1], [0, 0, 1, 1], [], []>} : vector<20x16xf32>, vector<16x16xf32>, vector<20x16xf32> -> vector<20x16xf32>
    %cst_39 = arith.constant dense<0.000000e+00> : vector<20x20xf32>
    %104 = tpu.matmul %103, %3, %cst_39 {dimension_numbers = #tpu.dot_dimension_numbers<[1], [0], [0], [1], [0, 0, 1, 1], [], []>} : vector<20x16xf32>, vector<16x20xf32>, vector<20x20xf32> -> vector<20x20xf32>
    %c0_40 = arith.constant 0 : index
    %c0_41 = arith.constant 0 : index
    %c0_42 = arith.constant 0 : index
    %105 = vector.load %arg12[%c0_40, %c0_41, %c0_42] : memref<4x20x20xf32, #tpu.memory_space<vmem>>, vector<1x20x20xf32>
    %106 = vector.shape_cast %105 : vector<1x20x20xf32> to vector<20x20xf32>
    %107 = vector.shape_cast %104 : vector<20x20xf32> to vector<1x20x20xf32>
    tpu.vector_store %arg12[%c0_40, %c0_41, %c0_42], %107 {strides = array<i32>} : memref<4x20x20xf32, #tpu.memory_space<vmem>>, vector<1x20x20xf32>,
    %c0_43 = arith.constant 0 : index
    %c0_44 = arith.constant 0 : index
    %c0_45 = arith.constant 0 : index
    %c0_46 = arith.constant 0 : index
    %108 = vector.load %arg2[%c0_43, %c0_44, %c0_45, %c0_46] : memref<1x4x8x8xf32, #tpu.memory_space<vmem>>, vector<1x1x8x8xf32>
    %109 = vector.shape_cast %108 : vector<1x1x8x8xf32> to vector<8x8xf32>
    %cst_47 = arith.constant dense<0.000000e+00> : vector<16x8xf32>
    %110 = tpu.matmul %0, %109, %cst_47 {dimension_numbers = #tpu.dot_dimension_numbers<[1], [0], [0], [1], [0, 0, 1, 1], [], []>} : vector<16x8xf32>, vector<8x8xf32>, vector<16x8xf32> -> vector<16x8xf32>
    %cst_48 = arith.constant dense<0.000000e+00> : vector<16x16xf32>
    %111 = tpu.matmul %110, %1, %cst_48 {dimension_numbers = #tpu.dot_dimension_numbers<[1], [0], [0], [1], [0, 0, 1, 1], [], []>} : vector<16x8xf32>, vector<8x16xf32>, vector<16x16xf32> -> vector<16x16xf32>
    %c1_49 = arith.constant 1 : index
    %c1_50 = arith.constant 1 : index
    %112 = vector.load %arg10[%c1_49, %c1_50] : memref<18x18xf32, #tpu.memory_space<vmem>>, vector<16x16xf32>
    tpu.vector_store %arg10[%c1_49, %c1_50], %111 {strides = array<i32>} : memref<18x18xf32, #tpu.memory_space<vmem>>, vector<16x16xf32>,
    %cst_51 = arith.constant 0.000000e+00 : f32
    %113 = vector.broadcast %cst_51 : f32 to vector<16x16xf32>
    %c0_52 = arith.constant 0 : index
    %114 = memref.load %arg7[%c0_52] : memref<108xf32, #tpu.memory_space<smem>>
    %c0_53 = arith.constant 0 : index
    %c0_54 = arith.constant 0 : index
    %115 = vector.load %arg10[%c0_53, %c0_54] : memref<18x18xf32, #tpu.memory_space<vmem>>, vector<16x16xf32>
    %116 = vector.broadcast %114 : f32 to vector<16x16xf32>
    %117 = arith.mulf %116, %115 : vector<16x16xf32>
    %118 = arith.addf %113, %117 : vector<16x16xf32>
    %c1_55 = arith.constant 1 : index
    %119 = memref.load %arg7[%c1_55] : memref<108xf32, #tpu.memory_space<smem>>
    %c0_56 = arith.constant 0 : index
    %c1_57 = arith.constant 1 : index
    %120 = vector.load %arg10[%c0_56, %c1_57] : memref<18x18xf32, #tpu.memory_space<vmem>>, vector<16x16xf32>
    %121 = vector.broadcast %119 : f32 to vector<16x16xf32>
    %122 = arith.mulf %121, %120 : vector<16x16xf32>
    %123 = arith.addf %118, %122 : vector<16x16xf32>
    %c2_58 = arith.constant 2 : index
    %124 = memref.load %arg7[%c2_58] : memref<108xf32, #tpu.memory_space<smem>>
    %c0_59 = arith.constant 0 : index
    %c2_60 = arith.constant 2 : index
    %125 = vector.load %arg10[%c0_59, %c2_60] : memref<18x18xf32, #tpu.memory_space<vmem>>, vector<16x16xf32>
    %126 = vector.broadcast %124 : f32 to vector<16x16xf32>
    %127 = arith.mulf %126, %125 : vector<16x16xf32>
    %128 = arith.addf %123, %127 : vector<16x16xf32>
    %c3 = arith.constant 3 : index
    %129 = memref.load %arg7[%c3] : memref<108xf32, #tpu.memory_space<smem>>
    %c1_61 = arith.constant 1 : index
    %c0_62 = arith.constant 0 : index
    %130 = vector.load %arg10[%c1_61, %c0_62] : memref<18x18xf32, #tpu.memory_space<vmem>>, vector<16x16xf32>
    %131 = vector.broadcast %129 : f32 to vector<16x16xf32>
    %132 = arith.mulf %131, %130 : vector<16x16xf32>
    %133 = arith.addf %128, %132 : vector<16x16xf32>
    %c4_63 = arith.constant 4 : index
    %134 = memref.load %arg7[%c4_63] : memref<108xf32, #tpu.memory_space<smem>>
    %c1_64 = arith.constant 1 : index
    %c1_65 = arith.constant 1 : index
    %135 = vector.load %arg10[%c1_64, %c1_65] : memref<18x18xf32, #tpu.memory_space<vmem>>, vector<16x16xf32>
    %136 = vector.broadcast %134 : f32 to vector<16x16xf32>
    %137 = arith.mulf %136, %135 : vector<16x16xf32>
    %138 = arith.addf %133, %137 : vector<16x16xf32>
    %c5 = arith.constant 5 : index
    %139 = memref.load %arg7[%c5] : memref<108xf32, #tpu.memory_space<smem>>
    %c1_66 = arith.constant 1 : index
    %c2_67 = arith.constant 2 : index
    %140 = vector.load %arg10[%c1_66, %c2_67] : memref<18x18xf32, #tpu.memory_space<vmem>>, vector<16x16xf32>
    %141 = vector.broadcast %139 : f32 to vector<16x16xf32>
    %142 = arith.mulf %141, %140 : vector<16x16xf32>
    %143 = arith.addf %138, %142 : vector<16x16xf32>
    %c6 = arith.constant 6 : index
    %144 = memref.load %arg7[%c6] : memref<108xf32, #tpu.memory_space<smem>>
    %c2_68 = arith.constant 2 : index
    %c0_69 = arith.constant 0 : index
    %145 = vector.load %arg10[%c2_68, %c0_69] : memref<18x18xf32, #tpu.memory_space<vmem>>, vector<16x16xf32>
    %146 = vector.broadcast %144 : f32 to vector<16x16xf32>
    %147 = arith.mulf %146, %145 : vector<16x16xf32>
    %148 = arith.addf %143, %147 : vector<16x16xf32>
    %c7 = arith.constant 7 : index
    %149 = memref.load %arg7[%c7] : memref<108xf32, #tpu.memory_space<smem>>
    %c2_70 = arith.constant 2 : index
    %c1_71 = arith.constant 1 : index
    %150 = vector.load %arg10[%c2_70, %c1_71] : memref<18x18xf32, #tpu.memory_space<vmem>>, vector<16x16xf32>
    %151 = vector.broadcast %149 : f32 to vector<16x16xf32>
    %152 = arith.mulf %151, %150 : vector<16x16xf32>
    %153 = arith.addf %148, %152 : vector<16x16xf32>
    %c8_72 = arith.constant 8 : index
    %154 = memref.load %arg7[%c8_72] : memref<108xf32, #tpu.memory_space<smem>>
    %c2_73 = arith.constant 2 : index
    %c2_74 = arith.constant 2 : index
    %155 = vector.load %arg10[%c2_73, %c2_74] : memref<18x18xf32, #tpu.memory_space<vmem>>, vector<16x16xf32>
    %156 = vector.broadcast %154 : f32 to vector<16x16xf32>
    %157 = arith.mulf %156, %155 : vector<16x16xf32>
    %158 = arith.addf %153, %157 : vector<16x16xf32>
    %c0_75 = arith.constant 0 : index
    %159 = memref.load %arg8[%c0_75] : memref<12xf32, #tpu.memory_space<smem>>
    %160 = vector.broadcast %159 : f32 to vector<16x16xf32>
    %161 = arith.addf %158, %160 : vector<16x16xf32>
    %c0_76 = arith.constant 0 : index
    %c1_77 = arith.constant 1 : index
    %c0_78 = arith.constant 0 : index
    %c0_79 = arith.constant 0 : index
    %162 = vector.load %arg1[%c0_76, %c1_77, %c0_78, %c0_79] : memref<1x4x16x16xf32, #tpu.memory_space<vmem>>, vector<1x1x16x16xf32>
    %163 = vector.shape_cast %162 : vector<1x1x16x16xf32> to vector<16x16xf32>
    %c1_80 = arith.constant 1 : index
    %c1_81 = arith.constant 1 : index
    %164 = vector.load %arg10[%c1_80, %c1_81] : memref<18x18xf32, #tpu.memory_space<vmem>>, vector<16x16xf32>
    tpu.vector_store %arg10[%c1_80, %c1_81], %163 {strides = array<i32>} : memref<18x18xf32, #tpu.memory_space<vmem>>, vector<16x16xf32>,
    %cst_82 = arith.constant 0.000000e+00 : f32
    %165 = vector.broadcast %cst_82 : f32 to vector<16x16xf32>
    %cst_83 = arith.constant 0.000000e+00 : f32
    %166 = vector.broadcast %cst_83 : f32 to vector<16x16xf32>
    %c0_84 = arith.constant 0 : index
    %c0_85 = arith.constant 0 : index
    %167 = vector.load %arg10[%c0_84, %c0_85] : memref<18x18xf32, #tpu.memory_space<vmem>>, vector<16x16xf32>
    %c45 = arith.constant 45 : index
    %168 = memref.load %arg7[%c45] : memref<108xf32, #tpu.memory_space<smem>>
    %169 = vector.broadcast %168 : f32 to vector<16x16xf32>
    %170 = arith.mulf %169, %167 : vector<16x16xf32>
    %171 = arith.addf %165, %170 : vector<16x16xf32>
    %c81 = arith.constant 81 : index
    %172 = memref.load %arg7[%c81] : memref<108xf32, #tpu.memory_space<smem>>
    %173 = vector.broadcast %172 : f32 to vector<16x16xf32>
    %174 = arith.mulf %173, %167 : vector<16x16xf32>
    %175 = arith.addf %166, %174 : vector<16x16xf32>
    %c0_86 = arith.constant 0 : index
    %c1_87 = arith.constant 1 : index
    %176 = vector.load %arg10[%c0_86, %c1_87] : memref<18x18xf32, #tpu.memory_space<vmem>>, vector<16x16xf32>
    %c46 = arith.constant 46 : index
    %177 = memref.load %arg7[%c46] : memref<108xf32, #tpu.memory_space<smem>>
    %178 = vector.broadcast %177 : f32 to vector<16x16xf32>
    %179 = arith.mulf %178, %176 : vector<16x16xf32>
    %180 = arith.addf %171, %179 : vector<16x16xf32>
    %c82 = arith.constant 82 : index
    %181 = memref.load %arg7[%c82] : memref<108xf32, #tpu.memory_space<smem>>
    %182 = vector.broadcast %181 : f32 to vector<16x16xf32>
    %183 = arith.mulf %182, %176 : vector<16x16xf32>
    %184 = arith.addf %175, %183 : vector<16x16xf32>
    %c0_88 = arith.constant 0 : index
    %c2_89 = arith.constant 2 : index
    %185 = vector.load %arg10[%c0_88, %c2_89] : memref<18x18xf32, #tpu.memory_space<vmem>>, vector<16x16xf32>
    %c47 = arith.constant 47 : index
    %186 = memref.load %arg7[%c47] : memref<108xf32, #tpu.memory_space<smem>>
    %187 = vector.broadcast %186 : f32 to vector<16x16xf32>
    %188 = arith.mulf %187, %185 : vector<16x16xf32>
    %189 = arith.addf %180, %188 : vector<16x16xf32>
    %c83 = arith.constant 83 : index
    %190 = memref.load %arg7[%c83] : memref<108xf32, #tpu.memory_space<smem>>
    %191 = vector.broadcast %190 : f32 to vector<16x16xf32>
    %192 = arith.mulf %191, %185 : vector<16x16xf32>
    %193 = arith.addf %184, %192 : vector<16x16xf32>
    %c1_90 = arith.constant 1 : index
    %c0_91 = arith.constant 0 : index
    %194 = vector.load %arg10[%c1_90, %c0_91] : memref<18x18xf32, #tpu.memory_space<vmem>>, vector<16x16xf32>
    %c48 = arith.constant 48 : index
    %195 = memref.load %arg7[%c48] : memref<108xf32, #tpu.memory_space<smem>>
    %196 = vector.broadcast %195 : f32 to vector<16x16xf32>
    %197 = arith.mulf %196, %194 : vector<16x16xf32>
    %198 = arith.addf %189, %197 : vector<16x16xf32>
    %c84 = arith.constant 84 : index
    %199 = memref.load %arg7[%c84] : memref<108xf32, #tpu.memory_space<smem>>
    %200 = vector.broadcast %199 : f32 to vector<16x16xf32>
    %201 = arith.mulf %200, %194 : vector<16x16xf32>
    %202 = arith.addf %193, %201 : vector<16x16xf32>
    %c1_92 = arith.constant 1 : index
    %c1_93 = arith.constant 1 : index
    %203 = vector.load %arg10[%c1_92, %c1_93] : memref<18x18xf32, #tpu.memory_space<vmem>>, vector<16x16xf32>
    %c49 = arith.constant 49 : index
    %204 = memref.load %arg7[%c49] : memref<108xf32, #tpu.memory_space<smem>>
    %205 = vector.broadcast %204 : f32 to vector<16x16xf32>
    %206 = arith.mulf %205, %203 : vector<16x16xf32>
    %207 = arith.addf %198, %206 : vector<16x16xf32>
    %c85 = arith.constant 85 : index
    %208 = memref.load %arg7[%c85] : memref<108xf32, #tpu.memory_space<smem>>
    %209 = vector.broadcast %208 : f32 to vector<16x16xf32>
    %210 = arith.mulf %209, %203 : vector<16x16xf32>
    %211 = arith.addf %202, %210 : vector<16x16xf32>
    %c1_94 = arith.constant 1 : index
    %c2_95 = arith.constant 2 : index
    %212 = vector.load %arg10[%c1_94, %c2_95] : memref<18x18xf32, #tpu.memory_space<vmem>>, vector<16x16xf32>
    %c50 = arith.constant 50 : index
    %213 = memref.load %arg7[%c50] : memref<108xf32, #tpu.memory_space<smem>>
    %214 = vector.broadcast %213 : f32 to vector<16x16xf32>
    %215 = arith.mulf %214, %212 : vector<16x16xf32>
    %216 = arith.addf %207, %215 : vector<16x16xf32>
    %c86 = arith.constant 86 : index
    %217 = memref.load %arg7[%c86] : memref<108xf32, #tpu.memory_space<smem>>
    %218 = vector.broadcast %217 : f32 to vector<16x16xf32>
    %219 = arith.mulf %218, %212 : vector<16x16xf32>
    %220 = arith.addf %211, %219 : vector<16x16xf32>
    %c2_96 = arith.constant 2 : index
    %c0_97 = arith.constant 0 : index
    %221 = vector.load %arg10[%c2_96, %c0_97] : memref<18x18xf32, #tpu.memory_space<vmem>>, vector<16x16xf32>
    %c51 = arith.constant 51 : index
    %222 = memref.load %arg7[%c51] : memref<108xf32, #tpu.memory_space<smem>>
    %223 = vector.broadcast %222 : f32 to vector<16x16xf32>
    %224 = arith.mulf %223, %221 : vector<16x16xf32>
    %225 = arith.addf %216, %224 : vector<16x16xf32>
    %c87 = arith.constant 87 : index
    %226 = memref.load %arg7[%c87] : memref<108xf32, #tpu.memory_space<smem>>
    %227 = vector.broadcast %226 : f32 to vector<16x16xf32>
    %228 = arith.mulf %227, %221 : vector<16x16xf32>
    %229 = arith.addf %220, %228 : vector<16x16xf32>
    %c2_98 = arith.constant 2 : index
    %c1_99 = arith.constant 1 : index
    %230 = vector.load %arg10[%c2_98, %c1_99] : memref<18x18xf32, #tpu.memory_space<vmem>>, vector<16x16xf32>
    %c52 = arith.constant 52 : index
    %231 = memref.load %arg7[%c52] : memref<108xf32, #tpu.memory_space<smem>>
    %232 = vector.broadcast %231 : f32 to vector<16x16xf32>
    %233 = arith.mulf %232, %230 : vector<16x16xf32>
    %234 = arith.addf %225, %233 : vector<16x16xf32>
    %c88 = arith.constant 88 : index
    %235 = memref.load %arg7[%c88] : memref<108xf32, #tpu.memory_space<smem>>
    %236 = vector.broadcast %235 : f32 to vector<16x16xf32>
    %237 = arith.mulf %236, %230 : vector<16x16xf32>
    %238 = arith.addf %229, %237 : vector<16x16xf32>
    %c2_100 = arith.constant 2 : index
    %c2_101 = arith.constant 2 : index
    %239 = vector.load %arg10[%c2_100, %c2_101] : memref<18x18xf32, #tpu.memory_space<vmem>>, vector<16x16xf32>
    %c53 = arith.constant 53 : index
    %240 = memref.load %arg7[%c53] : memref<108xf32, #tpu.memory_space<smem>>
    %241 = vector.broadcast %240 : f32 to vector<16x16xf32>
    %242 = arith.mulf %241, %239 : vector<16x16xf32>
    %243 = arith.addf %234, %242 : vector<16x16xf32>
    %c89 = arith.constant 89 : index
    %244 = memref.load %arg7[%c89] : memref<108xf32, #tpu.memory_space<smem>>
    %245 = vector.broadcast %244 : f32 to vector<16x16xf32>
    %246 = arith.mulf %245, %239 : vector<16x16xf32>
    %247 = arith.addf %238, %246 : vector<16x16xf32>
    %c5_102 = arith.constant 5 : index
    %248 = memref.load %arg8[%c5_102] : memref<12xf32, #tpu.memory_space<smem>>
    %249 = vector.broadcast %248 : f32 to vector<16x16xf32>
    %250 = arith.addf %243, %249 : vector<16x16xf32>
    %c9 = arith.constant 9 : index
    %251 = memref.load %arg8[%c9] : memref<12xf32, #tpu.memory_space<smem>>
    %252 = vector.broadcast %251 : f32 to vector<16x16xf32>
    %253 = arith.addf %247, %252 : vector<16x16xf32>
    %cst_103 = arith.constant dense<0.000000e+00> : vector<20x16xf32>
    %254 = tpu.matmul %2, %250, %cst_103 {dimension_numbers = #tpu.dot_dimension_numbers<[1], [0], [0], [1], [0, 0, 1, 1], [], []>} : vector<20x16xf32>, vector<16x16xf32>, vector<20x16xf32> -> vector<20x16xf32>
    %cst_104 = arith.constant dense<0.000000e+00> : vector<20x20xf32>
    %255 = tpu.matmul %254, %3, %cst_104 {dimension_numbers = #tpu.dot_dimension_numbers<[1], [0], [0], [1], [0, 0, 1, 1], [], []>} : vector<20x16xf32>, vector<16x20xf32>, vector<20x20xf32> -> vector<20x20xf32>
    %c1_105 = arith.constant 1 : index
    %c0_106 = arith.constant 0 : index
    %c0_107 = arith.constant 0 : index
    %256 = vector.load %arg11[%c1_105, %c0_106, %c0_107] : memref<4x20x20xf32, #tpu.memory_space<vmem>>, vector<1x20x20xf32>
    %257 = vector.shape_cast %256 : vector<1x20x20xf32> to vector<20x20xf32>
    %258 = vector.shape_cast %255 : vector<20x20xf32> to vector<1x20x20xf32>
    tpu.vector_store %arg11[%c1_105, %c0_106, %c0_107], %258 {strides = array<i32>} : memref<4x20x20xf32, #tpu.memory_space<vmem>>, vector<1x20x20xf32>,
    %cst_108 = arith.constant dense<0.000000e+00> : vector<20x16xf32>
    %259 = tpu.matmul %2, %253, %cst_108 {dimension_numbers = #tpu.dot_dimension_numbers<[1], [0], [0], [1], [0, 0, 1, 1], [], []>} : vector<20x16xf32>, vector<16x16xf32>, vector<20x16xf32> -> vector<20x16xf32>
    %cst_109 = arith.constant dense<0.000000e+00> : vector<20x20xf32>
    %260 = tpu.matmul %259, %3, %cst_109 {dimension_numbers = #tpu.dot_dimension_numbers<[1], [0], [0], [1], [0, 0, 1, 1], [], []>} : vector<20x16xf32>, vector<16x20xf32>, vector<20x20xf32> -> vector<20x20xf32>
    %c1_110 = arith.constant 1 : index
    %c0_111 = arith.constant 0 : index
    %c0_112 = arith.constant 0 : index
    %261 = vector.load %arg12[%c1_110, %c0_111, %c0_112] : memref<4x20x20xf32, #tpu.memory_space<vmem>>, vector<1x20x20xf32>
    %262 = vector.shape_cast %261 : vector<1x20x20xf32> to vector<20x20xf32>
    %263 = vector.shape_cast %260 : vector<20x20xf32> to vector<1x20x20xf32>
    tpu.vector_store %arg12[%c1_110, %c0_111, %c0_112], %263 {strides = array<i32>} : memref<4x20x20xf32, #tpu.memory_space<vmem>>, vector<1x20x20xf32>,
    %c0_113 = arith.constant 0 : index
    %c1_114 = arith.constant 1 : index
    %c0_115 = arith.constant 0 : index
    %c0_116 = arith.constant 0 : index
    %264 = vector.load %arg2[%c0_113, %c1_114, %c0_115, %c0_116] : memref<1x4x8x8xf32, #tpu.memory_space<vmem>>, vector<1x1x8x8xf32>
    %265 = vector.shape_cast %264 : vector<1x1x8x8xf32> to vector<8x8xf32>
    %cst_117 = arith.constant dense<0.000000e+00> : vector<16x8xf32>
    %266 = tpu.matmul %0, %265, %cst_117 {dimension_numbers = #tpu.dot_dimension_numbers<[1], [0], [0], [1], [0, 0, 1, 1], [], []>} : vector<16x8xf32>, vector<8x8xf32>, vector<16x8xf32> -> vector<16x8xf32>
    %cst_118 = arith.constant dense<0.000000e+00> : vector<16x16xf32>
    %267 = tpu.matmul %266, %1, %cst_118 {dimension_numbers = #tpu.dot_dimension_numbers<[1], [0], [0], [1], [0, 0, 1, 1], [], []>} : vector<16x8xf32>, vector<8x16xf32>, vector<16x16xf32> -> vector<16x16xf32>
    %c1_119 = arith.constant 1 : index
    %c1_120 = arith.constant 1 : index
    %268 = vector.load %arg10[%c1_119, %c1_120] : memref<18x18xf32, #tpu.memory_space<vmem>>, vector<16x16xf32>
    tpu.vector_store %arg10[%c1_119, %c1_120], %267 {strides = array<i32>} : memref<18x18xf32, #tpu.memory_space<vmem>>, vector<16x16xf32>,
    %cst_121 = arith.constant 0.000000e+00 : f32
    %269 = vector.broadcast %cst_121 : f32 to vector<16x16xf32>
    %c9_122 = arith.constant 9 : index
    %270 = memref.load %arg7[%c9_122] : memref<108xf32, #tpu.memory_space<smem>>
    %c0_123 = arith.constant 0 : index
    %c0_124 = arith.constant 0 : index
    %271 = vector.load %arg10[%c0_123, %c0_124] : memref<18x18xf32, #tpu.memory_space<vmem>>, vector<16x16xf32>
    %272 = vector.broadcast %270 : f32 to vector<16x16xf32>
    %273 = arith.mulf %272, %271 : vector<16x16xf32>
    %274 = arith.addf %269, %273 : vector<16x16xf32>
    %c10 = arith.constant 10 : index
    %275 = memref.load %arg7[%c10] : memref<108xf32, #tpu.memory_space<smem>>
    %c0_125 = arith.constant 0 : index
    %c1_126 = arith.constant 1 : index
    %276 = vector.load %arg10[%c0_125, %c1_126] : memref<18x18xf32, #tpu.memory_space<vmem>>, vector<16x16xf32>
    %277 = vector.broadcast %275 : f32 to vector<16x16xf32>
    %278 = arith.mulf %277, %276 : vector<16x16xf32>
    %279 = arith.addf %274, %278 : vector<16x16xf32>
    %c11 = arith.constant 11 : index
    %280 = memref.load %arg7[%c11] : memref<108xf32, #tpu.memory_space<smem>>
    %c0_127 = arith.constant 0 : index
    %c2_128 = arith.constant 2 : index
    %281 = vector.load %arg10[%c0_127, %c2_128] : memref<18x18xf32, #tpu.memory_space<vmem>>, vector<16x16xf32>
    %282 = vector.broadcast %280 : f32 to vector<16x16xf32>
    %283 = arith.mulf %282, %281 : vector<16x16xf32>
    %284 = arith.addf %279, %283 : vector<16x16xf32>
    %c12 = arith.constant 12 : index
    %285 = memref.load %arg7[%c12] : memref<108xf32, #tpu.memory_space<smem>>
    %c1_129 = arith.constant 1 : index
    %c0_130 = arith.constant 0 : index
    %286 = vector.load %arg10[%c1_129, %c0_130] : memref<18x18xf32, #tpu.memory_space<vmem>>, vector<16x16xf32>
    %287 = vector.broadcast %285 : f32 to vector<16x16xf32>
    %288 = arith.mulf %287, %286 : vector<16x16xf32>
    %289 = arith.addf %284, %288 : vector<16x16xf32>
    %c13 = arith.constant 13 : index
    %290 = memref.load %arg7[%c13] : memref<108xf32, #tpu.memory_space<smem>>
    %c1_131 = arith.constant 1 : index
    %c1_132 = arith.constant 1 : index
    %291 = vector.load %arg10[%c1_131, %c1_132] : memref<18x18xf32, #tpu.memory_space<vmem>>, vector<16x16xf32>
    %292 = vector.broadcast %290 : f32 to vector<16x16xf32>
    %293 = arith.mulf %292, %291 : vector<16x16xf32>
    %294 = arith.addf %289, %293 : vector<16x16xf32>
    %c14 = arith.constant 14 : index
    %295 = memref.load %arg7[%c14] : memref<108xf32, #tpu.memory_space<smem>>
    %c1_133 = arith.constant 1 : index
    %c2_134 = arith.constant 2 : index
    %296 = vector.load %arg10[%c1_133, %c2_134] : memref<18x18xf32, #tpu.memory_space<vmem>>, vector<16x16xf32>
    %297 = vector.broadcast %295 : f32 to vector<16x16xf32>
    %298 = arith.mulf %297, %296 : vector<16x16xf32>
    %299 = arith.addf %294, %298 : vector<16x16xf32>
    %c15 = arith.constant 15 : index
    %300 = memref.load %arg7[%c15] : memref<108xf32, #tpu.memory_space<smem>>
    %c2_135 = arith.constant 2 : index
    %c0_136 = arith.constant 0 : index
    %301 = vector.load %arg10[%c2_135, %c0_136] : memref<18x18xf32, #tpu.memory_space<vmem>>, vector<16x16xf32>
    %302 = vector.broadcast %300 : f32 to vector<16x16xf32>
    %303 = arith.mulf %302, %301 : vector<16x16xf32>
    %304 = arith.addf %299, %303 : vector<16x16xf32>
    %c16 = arith.constant 16 : index
    %305 = memref.load %arg7[%c16] : memref<108xf32, #tpu.memory_space<smem>>
    %c2_137 = arith.constant 2 : index
    %c1_138 = arith.constant 1 : index
    %306 = vector.load %arg10[%c2_137, %c1_138] : memref<18x18xf32, #tpu.memory_space<vmem>>, vector<16x16xf32>
    %307 = vector.broadcast %305 : f32 to vector<16x16xf32>
    %308 = arith.mulf %307, %306 : vector<16x16xf32>
    %309 = arith.addf %304, %308 : vector<16x16xf32>
    %c17 = arith.constant 17 : index
    %310 = memref.load %arg7[%c17] : memref<108xf32, #tpu.memory_space<smem>>
    %c2_139 = arith.constant 2 : index
    %c2_140 = arith.constant 2 : index
    %311 = vector.load %arg10[%c2_139, %c2_140] : memref<18x18xf32, #tpu.memory_space<vmem>>, vector<16x16xf32>
    %312 = vector.broadcast %310 : f32 to vector<16x16xf32>
    %313 = arith.mulf %312, %311 : vector<16x16xf32>
    %314 = arith.addf %309, %313 : vector<16x16xf32>
    %c1_141 = arith.constant 1 : index
    %315 = memref.load %arg8[%c1_141] : memref<12xf32, #tpu.memory_space<smem>>
    %316 = vector.broadcast %315 : f32 to vector<16x16xf32>
    %317 = arith.addf %314, %316 : vector<16x16xf32>
    %c0_142 = arith.constant 0 : index
    %c2_143 = arith.constant 2 : index
    %c0_144 = arith.constant 0 : index
    %c0_145 = arith.constant 0 : index
    %318 = vector.load %arg1[%c0_142, %c2_143, %c0_144, %c0_145] : memref<1x4x16x16xf32, #tpu.memory_space<vmem>>, vector<1x1x16x16xf32>
    %319 = vector.shape_cast %318 : vector<1x1x16x16xf32> to vector<16x16xf32>
    %c1_146 = arith.constant 1 : index
    %c1_147 = arith.constant 1 : index
    %320 = vector.load %arg10[%c1_146, %c1_147] : memref<18x18xf32, #tpu.memory_space<vmem>>, vector<16x16xf32>
    tpu.vector_store %arg10[%c1_146, %c1_147], %319 {strides = array<i32>} : memref<18x18xf32, #tpu.memory_space<vmem>>, vector<16x16xf32>,
    %cst_148 = arith.constant 0.000000e+00 : f32
    %321 = vector.broadcast %cst_148 : f32 to vector<16x16xf32>
    %cst_149 = arith.constant 0.000000e+00 : f32
    %322 = vector.broadcast %cst_149 : f32 to vector<16x16xf32>
    %c0_150 = arith.constant 0 : index
    %c0_151 = arith.constant 0 : index
    %323 = vector.load %arg10[%c0_150, %c0_151] : memref<18x18xf32, #tpu.memory_space<vmem>>, vector<16x16xf32>
    %c54 = arith.constant 54 : index
    %324 = memref.load %arg7[%c54] : memref<108xf32, #tpu.memory_space<smem>>
    %325 = vector.broadcast %324 : f32 to vector<16x16xf32>
    %326 = arith.mulf %325, %323 : vector<16x16xf32>
    %327 = arith.addf %321, %326 : vector<16x16xf32>
    %c90 = arith.constant 90 : index
    %328 = memref.load %arg7[%c90] : memref<108xf32, #tpu.memory_space<smem>>
    %329 = vector.broadcast %328 : f32 to vector<16x16xf32>
    %330 = arith.mulf %329, %323 : vector<16x16xf32>
    %331 = arith.addf %322, %330 : vector<16x16xf32>
    %c0_152 = arith.constant 0 : index
    %c1_153 = arith.constant 1 : index
    %332 = vector.load %arg10[%c0_152, %c1_153] : memref<18x18xf32, #tpu.memory_space<vmem>>, vector<16x16xf32>
    %c55 = arith.constant 55 : index
    %333 = memref.load %arg7[%c55] : memref<108xf32, #tpu.memory_space<smem>>
    %334 = vector.broadcast %333 : f32 to vector<16x16xf32>
    %335 = arith.mulf %334, %332 : vector<16x16xf32>
    %336 = arith.addf %327, %335 : vector<16x16xf32>
    %c91 = arith.constant 91 : index
    %337 = memref.load %arg7[%c91] : memref<108xf32, #tpu.memory_space<smem>>
    %338 = vector.broadcast %337 : f32 to vector<16x16xf32>
    %339 = arith.mulf %338, %332 : vector<16x16xf32>
    %340 = arith.addf %331, %339 : vector<16x16xf32>
    %c0_154 = arith.constant 0 : index
    %c2_155 = arith.constant 2 : index
    %341 = vector.load %arg10[%c0_154, %c2_155] : memref<18x18xf32, #tpu.memory_space<vmem>>, vector<16x16xf32>
    %c56 = arith.constant 56 : index
    %342 = memref.load %arg7[%c56] : memref<108xf32, #tpu.memory_space<smem>>
    %343 = vector.broadcast %342 : f32 to vector<16x16xf32>
    %344 = arith.mulf %343, %341 : vector<16x16xf32>
    %345 = arith.addf %336, %344 : vector<16x16xf32>
    %c92 = arith.constant 92 : index
    %346 = memref.load %arg7[%c92] : memref<108xf32, #tpu.memory_space<smem>>
    %347 = vector.broadcast %346 : f32 to vector<16x16xf32>
    %348 = arith.mulf %347, %341 : vector<16x16xf32>
    %349 = arith.addf %340, %348 : vector<16x16xf32>
    %c1_156 = arith.constant 1 : index
    %c0_157 = arith.constant 0 : index
    %350 = vector.load %arg10[%c1_156, %c0_157] : memref<18x18xf32, #tpu.memory_space<vmem>>, vector<16x16xf32>
    %c57 = arith.constant 57 : index
    %351 = memref.load %arg7[%c57] : memref<108xf32, #tpu.memory_space<smem>>
    %352 = vector.broadcast %351 : f32 to vector<16x16xf32>
    %353 = arith.mulf %352, %350 : vector<16x16xf32>
    %354 = arith.addf %345, %353 : vector<16x16xf32>
    %c93 = arith.constant 93 : index
    %355 = memref.load %arg7[%c93] : memref<108xf32, #tpu.memory_space<smem>>
    %356 = vector.broadcast %355 : f32 to vector<16x16xf32>
    %357 = arith.mulf %356, %350 : vector<16x16xf32>
    %358 = arith.addf %349, %357 : vector<16x16xf32>
    %c1_158 = arith.constant 1 : index
    %c1_159 = arith.constant 1 : index
    %359 = vector.load %arg10[%c1_158, %c1_159] : memref<18x18xf32, #tpu.memory_space<vmem>>, vector<16x16xf32>
    %c58 = arith.constant 58 : index
    %360 = memref.load %arg7[%c58] : memref<108xf32, #tpu.memory_space<smem>>
    %361 = vector.broadcast %360 : f32 to vector<16x16xf32>
    %362 = arith.mulf %361, %359 : vector<16x16xf32>
    %363 = arith.addf %354, %362 : vector<16x16xf32>
    %c94 = arith.constant 94 : index
    %364 = memref.load %arg7[%c94] : memref<108xf32, #tpu.memory_space<smem>>
    %365 = vector.broadcast %364 : f32 to vector<16x16xf32>
    %366 = arith.mulf %365, %359 : vector<16x16xf32>
    %367 = arith.addf %358, %366 : vector<16x16xf32>
    %c1_160 = arith.constant 1 : index
    %c2_161 = arith.constant 2 : index
    %368 = vector.load %arg10[%c1_160, %c2_161] : memref<18x18xf32, #tpu.memory_space<vmem>>, vector<16x16xf32>
    %c59 = arith.constant 59 : index
    %369 = memref.load %arg7[%c59] : memref<108xf32, #tpu.memory_space<smem>>
    %370 = vector.broadcast %369 : f32 to vector<16x16xf32>
    %371 = arith.mulf %370, %368 : vector<16x16xf32>
    %372 = arith.addf %363, %371 : vector<16x16xf32>
    %c95 = arith.constant 95 : index
    %373 = memref.load %arg7[%c95] : memref<108xf32, #tpu.memory_space<smem>>
    %374 = vector.broadcast %373 : f32 to vector<16x16xf32>
    %375 = arith.mulf %374, %368 : vector<16x16xf32>
    %376 = arith.addf %367, %375 : vector<16x16xf32>
    %c2_162 = arith.constant 2 : index
    %c0_163 = arith.constant 0 : index
    %377 = vector.load %arg10[%c2_162, %c0_163] : memref<18x18xf32, #tpu.memory_space<vmem>>, vector<16x16xf32>
    %c60 = arith.constant 60 : index
    %378 = memref.load %arg7[%c60] : memref<108xf32, #tpu.memory_space<smem>>
    %379 = vector.broadcast %378 : f32 to vector<16x16xf32>
    %380 = arith.mulf %379, %377 : vector<16x16xf32>
    %381 = arith.addf %372, %380 : vector<16x16xf32>
    %c96 = arith.constant 96 : index
    %382 = memref.load %arg7[%c96] : memref<108xf32, #tpu.memory_space<smem>>
    %383 = vector.broadcast %382 : f32 to vector<16x16xf32>
    %384 = arith.mulf %383, %377 : vector<16x16xf32>
    %385 = arith.addf %376, %384 : vector<16x16xf32>
    %c2_164 = arith.constant 2 : index
    %c1_165 = arith.constant 1 : index
    %386 = vector.load %arg10[%c2_164, %c1_165] : memref<18x18xf32, #tpu.memory_space<vmem>>, vector<16x16xf32>
    %c61 = arith.constant 61 : index
    %387 = memref.load %arg7[%c61] : memref<108xf32, #tpu.memory_space<smem>>
    %388 = vector.broadcast %387 : f32 to vector<16x16xf32>
    %389 = arith.mulf %388, %386 : vector<16x16xf32>
    %390 = arith.addf %381, %389 : vector<16x16xf32>
    %c97 = arith.constant 97 : index
    %391 = memref.load %arg7[%c97] : memref<108xf32, #tpu.memory_space<smem>>
    %392 = vector.broadcast %391 : f32 to vector<16x16xf32>
    %393 = arith.mulf %392, %386 : vector<16x16xf32>
    %394 = arith.addf %385, %393 : vector<16x16xf32>
    %c2_166 = arith.constant 2 : index
    %c2_167 = arith.constant 2 : index
    %395 = vector.load %arg10[%c2_166, %c2_167] : memref<18x18xf32, #tpu.memory_space<vmem>>, vector<16x16xf32>
    %c62 = arith.constant 62 : index
    %396 = memref.load %arg7[%c62] : memref<108xf32, #tpu.memory_space<smem>>
    %397 = vector.broadcast %396 : f32 to vector<16x16xf32>
    %398 = arith.mulf %397, %395 : vector<16x16xf32>
    %399 = arith.addf %390, %398 : vector<16x16xf32>
    %c98 = arith.constant 98 : index
    %400 = memref.load %arg7[%c98] : memref<108xf32, #tpu.memory_space<smem>>
    %401 = vector.broadcast %400 : f32 to vector<16x16xf32>
    %402 = arith.mulf %401, %395 : vector<16x16xf32>
    %403 = arith.addf %394, %402 : vector<16x16xf32>
    %c6_168 = arith.constant 6 : index
    %404 = memref.load %arg8[%c6_168] : memref<12xf32, #tpu.memory_space<smem>>
    %405 = vector.broadcast %404 : f32 to vector<16x16xf32>
    %406 = arith.addf %399, %405 : vector<16x16xf32>
    %c10_169 = arith.constant 10 : index
    %407 = memref.load %arg8[%c10_169] : memref<12xf32, #tpu.memory_space<smem>>
    %408 = vector.broadcast %407 : f32 to vector<16x16xf32>
    %409 = arith.addf %403, %408 : vector<16x16xf32>
    %cst_170 = arith.constant dense<0.000000e+00> : vector<20x16xf32>
    %410 = tpu.matmul %2, %406, %cst_170 {dimension_numbers = #tpu.dot_dimension_numbers<[1], [0], [0], [1], [0, 0, 1, 1], [], []>} : vector<20x16xf32>, vector<16x16xf32>, vector<20x16xf32> -> vector<20x16xf32>
    %cst_171 = arith.constant dense<0.000000e+00> : vector<20x20xf32>
    %411 = tpu.matmul %410, %3, %cst_171 {dimension_numbers = #tpu.dot_dimension_numbers<[1], [0], [0], [1], [0, 0, 1, 1], [], []>} : vector<20x16xf32>, vector<16x20xf32>, vector<20x20xf32> -> vector<20x20xf32>
    %c2_172 = arith.constant 2 : index
    %c0_173 = arith.constant 0 : index
    %c0_174 = arith.constant 0 : index
    %412 = vector.load %arg11[%c2_172, %c0_173, %c0_174] : memref<4x20x20xf32, #tpu.memory_space<vmem>>, vector<1x20x20xf32>
    %413 = vector.shape_cast %412 : vector<1x20x20xf32> to vector<20x20xf32>
    %414 = vector.shape_cast %411 : vector<20x20xf32> to vector<1x20x20xf32>
    tpu.vector_store %arg11[%c2_172, %c0_173, %c0_174], %414 {strides = array<i32>} : memref<4x20x20xf32, #tpu.memory_space<vmem>>, vector<1x20x20xf32>,
    %cst_175 = arith.constant dense<0.000000e+00> : vector<20x16xf32>
    %415 = tpu.matmul %2, %409, %cst_175 {dimension_numbers = #tpu.dot_dimension_numbers<[1], [0], [0], [1], [0, 0, 1, 1], [], []>} : vector<20x16xf32>, vector<16x16xf32>, vector<20x16xf32> -> vector<20x16xf32>
    %cst_176 = arith.constant dense<0.000000e+00> : vector<20x20xf32>
    %416 = tpu.matmul %415, %3, %cst_176 {dimension_numbers = #tpu.dot_dimension_numbers<[1], [0], [0], [1], [0, 0, 1, 1], [], []>} : vector<20x16xf32>, vector<16x20xf32>, vector<20x20xf32> -> vector<20x20xf32>
    %c2_177 = arith.constant 2 : index
    %c0_178 = arith.constant 0 : index
    %c0_179 = arith.constant 0 : index
    %417 = vector.load %arg12[%c2_177, %c0_178, %c0_179] : memref<4x20x20xf32, #tpu.memory_space<vmem>>, vector<1x20x20xf32>
    %418 = vector.shape_cast %417 : vector<1x20x20xf32> to vector<20x20xf32>
    %419 = vector.shape_cast %416 : vector<20x20xf32> to vector<1x20x20xf32>
    tpu.vector_store %arg12[%c2_177, %c0_178, %c0_179], %419 {strides = array<i32>} : memref<4x20x20xf32, #tpu.memory_space<vmem>>, vector<1x20x20xf32>,
    %c0_180 = arith.constant 0 : index
    %c2_181 = arith.constant 2 : index
    %c0_182 = arith.constant 0 : index
    %c0_183 = arith.constant 0 : index
    %420 = vector.load %arg2[%c0_180, %c2_181, %c0_182, %c0_183] : memref<1x4x8x8xf32, #tpu.memory_space<vmem>>, vector<1x1x8x8xf32>
    %421 = vector.shape_cast %420 : vector<1x1x8x8xf32> to vector<8x8xf32>
    %cst_184 = arith.constant dense<0.000000e+00> : vector<16x8xf32>
    %422 = tpu.matmul %0, %421, %cst_184 {dimension_numbers = #tpu.dot_dimension_numbers<[1], [0], [0], [1], [0, 0, 1, 1], [], []>} : vector<16x8xf32>, vector<8x8xf32>, vector<16x8xf32> -> vector<16x8xf32>
    %cst_185 = arith.constant dense<0.000000e+00> : vector<16x16xf32>
    %423 = tpu.matmul %422, %1, %cst_185 {dimension_numbers = #tpu.dot_dimension_numbers<[1], [0], [0], [1], [0, 0, 1, 1], [], []>} : vector<16x8xf32>, vector<8x16xf32>, vector<16x16xf32> -> vector<16x16xf32>
    %c1_186 = arith.constant 1 : index
    %c1_187 = arith.constant 1 : index
    %424 = vector.load %arg10[%c1_186, %c1_187] : memref<18x18xf32, #tpu.memory_space<vmem>>, vector<16x16xf32>
    tpu.vector_store %arg10[%c1_186, %c1_187], %423 {strides = array<i32>} : memref<18x18xf32, #tpu.memory_space<vmem>>, vector<16x16xf32>,
    %cst_188 = arith.constant 0.000000e+00 : f32
    %425 = vector.broadcast %cst_188 : f32 to vector<16x16xf32>
    %c18 = arith.constant 18 : index
    %426 = memref.load %arg7[%c18] : memref<108xf32, #tpu.memory_space<smem>>
    %c0_189 = arith.constant 0 : index
    %c0_190 = arith.constant 0 : index
    %427 = vector.load %arg10[%c0_189, %c0_190] : memref<18x18xf32, #tpu.memory_space<vmem>>, vector<16x16xf32>
    %428 = vector.broadcast %426 : f32 to vector<16x16xf32>
    %429 = arith.mulf %428, %427 : vector<16x16xf32>
    %430 = arith.addf %425, %429 : vector<16x16xf32>
    %c19 = arith.constant 19 : index
    %431 = memref.load %arg7[%c19] : memref<108xf32, #tpu.memory_space<smem>>
    %c0_191 = arith.constant 0 : index
    %c1_192 = arith.constant 1 : index
    %432 = vector.load %arg10[%c0_191, %c1_192] : memref<18x18xf32, #tpu.memory_space<vmem>>, vector<16x16xf32>
    %433 = vector.broadcast %431 : f32 to vector<16x16xf32>
    %434 = arith.mulf %433, %432 : vector<16x16xf32>
    %435 = arith.addf %430, %434 : vector<16x16xf32>
    %c20 = arith.constant 20 : index
    %436 = memref.load %arg7[%c20] : memref<108xf32, #tpu.memory_space<smem>>
    %c0_193 = arith.constant 0 : index
    %c2_194 = arith.constant 2 : index
    %437 = vector.load %arg10[%c0_193, %c2_194] : memref<18x18xf32, #tpu.memory_space<vmem>>, vector<16x16xf32>
    %438 = vector.broadcast %436 : f32 to vector<16x16xf32>
    %439 = arith.mulf %438, %437 : vector<16x16xf32>
    %440 = arith.addf %435, %439 : vector<16x16xf32>
    %c21 = arith.constant 21 : index
    %441 = memref.load %arg7[%c21] : memref<108xf32, #tpu.memory_space<smem>>
    %c1_195 = arith.constant 1 : index
    %c0_196 = arith.constant 0 : index
    %442 = vector.load %arg10[%c1_195, %c0_196] : memref<18x18xf32, #tpu.memory_space<vmem>>, vector<16x16xf32>
    %443 = vector.broadcast %441 : f32 to vector<16x16xf32>
    %444 = arith.mulf %443, %442 : vector<16x16xf32>
    %445 = arith.addf %440, %444 : vector<16x16xf32>
    %c22 = arith.constant 22 : index
    %446 = memref.load %arg7[%c22] : memref<108xf32, #tpu.memory_space<smem>>
    %c1_197 = arith.constant 1 : index
    %c1_198 = arith.constant 1 : index
    %447 = vector.load %arg10[%c1_197, %c1_198] : memref<18x18xf32, #tpu.memory_space<vmem>>, vector<16x16xf32>
    %448 = vector.broadcast %446 : f32 to vector<16x16xf32>
    %449 = arith.mulf %448, %447 : vector<16x16xf32>
    %450 = arith.addf %445, %449 : vector<16x16xf32>
    %c23 = arith.constant 23 : index
    %451 = memref.load %arg7[%c23] : memref<108xf32, #tpu.memory_space<smem>>
    %c1_199 = arith.constant 1 : index
    %c2_200 = arith.constant 2 : index
    %452 = vector.load %arg10[%c1_199, %c2_200] : memref<18x18xf32, #tpu.memory_space<vmem>>, vector<16x16xf32>
    %453 = vector.broadcast %451 : f32 to vector<16x16xf32>
    %454 = arith.mulf %453, %452 : vector<16x16xf32>
    %455 = arith.addf %450, %454 : vector<16x16xf32>
    %c24 = arith.constant 24 : index
    %456 = memref.load %arg7[%c24] : memref<108xf32, #tpu.memory_space<smem>>
    %c2_201 = arith.constant 2 : index
    %c0_202 = arith.constant 0 : index
    %457 = vector.load %arg10[%c2_201, %c0_202] : memref<18x18xf32, #tpu.memory_space<vmem>>, vector<16x16xf32>
    %458 = vector.broadcast %456 : f32 to vector<16x16xf32>
    %459 = arith.mulf %458, %457 : vector<16x16xf32>
    %460 = arith.addf %455, %459 : vector<16x16xf32>
    %c25 = arith.constant 25 : index
    %461 = memref.load %arg7[%c25] : memref<108xf32, #tpu.memory_space<smem>>
    %c2_203 = arith.constant 2 : index
    %c1_204 = arith.constant 1 : index
    %462 = vector.load %arg10[%c2_203, %c1_204] : memref<18x18xf32, #tpu.memory_space<vmem>>, vector<16x16xf32>
    %463 = vector.broadcast %461 : f32 to vector<16x16xf32>
    %464 = arith.mulf %463, %462 : vector<16x16xf32>
    %465 = arith.addf %460, %464 : vector<16x16xf32>
    %c26 = arith.constant 26 : index
    %466 = memref.load %arg7[%c26] : memref<108xf32, #tpu.memory_space<smem>>
    %c2_205 = arith.constant 2 : index
    %c2_206 = arith.constant 2 : index
    %467 = vector.load %arg10[%c2_205, %c2_206] : memref<18x18xf32, #tpu.memory_space<vmem>>, vector<16x16xf32>
    %468 = vector.broadcast %466 : f32 to vector<16x16xf32>
    %469 = arith.mulf %468, %467 : vector<16x16xf32>
    %470 = arith.addf %465, %469 : vector<16x16xf32>
    %c2_207 = arith.constant 2 : index
    %471 = memref.load %arg8[%c2_207] : memref<12xf32, #tpu.memory_space<smem>>
    %472 = vector.broadcast %471 : f32 to vector<16x16xf32>
    %473 = arith.addf %470, %472 : vector<16x16xf32>
    %c0_208 = arith.constant 0 : index
    %c3_209 = arith.constant 3 : index
    %c0_210 = arith.constant 0 : index
    %c0_211 = arith.constant 0 : index
    %474 = vector.load %arg1[%c0_208, %c3_209, %c0_210, %c0_211] : memref<1x4x16x16xf32, #tpu.memory_space<vmem>>, vector<1x1x16x16xf32>
    %475 = vector.shape_cast %474 : vector<1x1x16x16xf32> to vector<16x16xf32>
    %c1_212 = arith.constant 1 : index
    %c1_213 = arith.constant 1 : index
    %476 = vector.load %arg10[%c1_212, %c1_213] : memref<18x18xf32, #tpu.memory_space<vmem>>, vector<16x16xf32>
    tpu.vector_store %arg10[%c1_212, %c1_213], %475 {strides = array<i32>} : memref<18x18xf32, #tpu.memory_space<vmem>>, vector<16x16xf32>,
    %cst_214 = arith.constant 0.000000e+00 : f32
    %477 = vector.broadcast %cst_214 : f32 to vector<16x16xf32>
    %cst_215 = arith.constant 0.000000e+00 : f32
    %478 = vector.broadcast %cst_215 : f32 to vector<16x16xf32>
    %c0_216 = arith.constant 0 : index
    %c0_217 = arith.constant 0 : index
    %479 = vector.load %arg10[%c0_216, %c0_217] : memref<18x18xf32, #tpu.memory_space<vmem>>, vector<16x16xf32>
    %c63 = arith.constant 63 : index
    %480 = memref.load %arg7[%c63] : memref<108xf32, #tpu.memory_space<smem>>
    %481 = vector.broadcast %480 : f32 to vector<16x16xf32>
    %482 = arith.mulf %481, %479 : vector<16x16xf32>
    %483 = arith.addf %477, %482 : vector<16x16xf32>
    %c99 = arith.constant 99 : index
    %484 = memref.load %arg7[%c99] : memref<108xf32, #tpu.memory_space<smem>>
    %485 = vector.broadcast %484 : f32 to vector<16x16xf32>
    %486 = arith.mulf %485, %479 : vector<16x16xf32>
    %487 = arith.addf %478, %486 : vector<16x16xf32>
    %c0_218 = arith.constant 0 : index
    %c1_219 = arith.constant 1 : index
    %488 = vector.load %arg10[%c0_218, %c1_219] : memref<18x18xf32, #tpu.memory_space<vmem>>, vector<16x16xf32>
    %c64 = arith.constant 64 : index
    %489 = memref.load %arg7[%c64] : memref<108xf32, #tpu.memory_space<smem>>
    %490 = vector.broadcast %489 : f32 to vector<16x16xf32>
    %491 = arith.mulf %490, %488 : vector<16x16xf32>
    %492 = arith.addf %483, %491 : vector<16x16xf32>
    %c100 = arith.constant 100 : index
    %493 = memref.load %arg7[%c100] : memref<108xf32, #tpu.memory_space<smem>>
    %494 = vector.broadcast %493 : f32 to vector<16x16xf32>
    %495 = arith.mulf %494, %488 : vector<16x16xf32>
    %496 = arith.addf %487, %495 : vector<16x16xf32>
    %c0_220 = arith.constant 0 : index
    %c2_221 = arith.constant 2 : index
    %497 = vector.load %arg10[%c0_220, %c2_221] : memref<18x18xf32, #tpu.memory_space<vmem>>, vector<16x16xf32>
    %c65 = arith.constant 65 : index
    %498 = memref.load %arg7[%c65] : memref<108xf32, #tpu.memory_space<smem>>
    %499 = vector.broadcast %498 : f32 to vector<16x16xf32>
    %500 = arith.mulf %499, %497 : vector<16x16xf32>
    %501 = arith.addf %492, %500 : vector<16x16xf32>
    %c101 = arith.constant 101 : index
    %502 = memref.load %arg7[%c101] : memref<108xf32, #tpu.memory_space<smem>>
    %503 = vector.broadcast %502 : f32 to vector<16x16xf32>
    %504 = arith.mulf %503, %497 : vector<16x16xf32>
    %505 = arith.addf %496, %504 : vector<16x16xf32>
    %c1_222 = arith.constant 1 : index
    %c0_223 = arith.constant 0 : index
    %506 = vector.load %arg10[%c1_222, %c0_223] : memref<18x18xf32, #tpu.memory_space<vmem>>, vector<16x16xf32>
    %c66 = arith.constant 66 : index
    %507 = memref.load %arg7[%c66] : memref<108xf32, #tpu.memory_space<smem>>
    %508 = vector.broadcast %507 : f32 to vector<16x16xf32>
    %509 = arith.mulf %508, %506 : vector<16x16xf32>
    %510 = arith.addf %501, %509 : vector<16x16xf32>
    %c102 = arith.constant 102 : index
    %511 = memref.load %arg7[%c102] : memref<108xf32, #tpu.memory_space<smem>>
    %512 = vector.broadcast %511 : f32 to vector<16x16xf32>
    %513 = arith.mulf %512, %506 : vector<16x16xf32>
    %514 = arith.addf %505, %513 : vector<16x16xf32>
    %c1_224 = arith.constant 1 : index
    %c1_225 = arith.constant 1 : index
    %515 = vector.load %arg10[%c1_224, %c1_225] : memref<18x18xf32, #tpu.memory_space<vmem>>, vector<16x16xf32>
    %c67 = arith.constant 67 : index
    %516 = memref.load %arg7[%c67] : memref<108xf32, #tpu.memory_space<smem>>
    %517 = vector.broadcast %516 : f32 to vector<16x16xf32>
    %518 = arith.mulf %517, %515 : vector<16x16xf32>
    %519 = arith.addf %510, %518 : vector<16x16xf32>
    %c103 = arith.constant 103 : index
    %520 = memref.load %arg7[%c103] : memref<108xf32, #tpu.memory_space<smem>>
    %521 = vector.broadcast %520 : f32 to vector<16x16xf32>
    %522 = arith.mulf %521, %515 : vector<16x16xf32>
    %523 = arith.addf %514, %522 : vector<16x16xf32>
    %c1_226 = arith.constant 1 : index
    %c2_227 = arith.constant 2 : index
    %524 = vector.load %arg10[%c1_226, %c2_227] : memref<18x18xf32, #tpu.memory_space<vmem>>, vector<16x16xf32>
    %c68 = arith.constant 68 : index
    %525 = memref.load %arg7[%c68] : memref<108xf32, #tpu.memory_space<smem>>
    %526 = vector.broadcast %525 : f32 to vector<16x16xf32>
    %527 = arith.mulf %526, %524 : vector<16x16xf32>
    %528 = arith.addf %519, %527 : vector<16x16xf32>
    %c104 = arith.constant 104 : index
    %529 = memref.load %arg7[%c104] : memref<108xf32, #tpu.memory_space<smem>>
    %530 = vector.broadcast %529 : f32 to vector<16x16xf32>
    %531 = arith.mulf %530, %524 : vector<16x16xf32>
    %532 = arith.addf %523, %531 : vector<16x16xf32>
    %c2_228 = arith.constant 2 : index
    %c0_229 = arith.constant 0 : index
    %533 = vector.load %arg10[%c2_228, %c0_229] : memref<18x18xf32, #tpu.memory_space<vmem>>, vector<16x16xf32>
    %c69 = arith.constant 69 : index
    %534 = memref.load %arg7[%c69] : memref<108xf32, #tpu.memory_space<smem>>
    %535 = vector.broadcast %534 : f32 to vector<16x16xf32>
    %536 = arith.mulf %535, %533 : vector<16x16xf32>
    %537 = arith.addf %528, %536 : vector<16x16xf32>
    %c105 = arith.constant 105 : index
    %538 = memref.load %arg7[%c105] : memref<108xf32, #tpu.memory_space<smem>>
    %539 = vector.broadcast %538 : f32 to vector<16x16xf32>
    %540 = arith.mulf %539, %533 : vector<16x16xf32>
    %541 = arith.addf %532, %540 : vector<16x16xf32>
    %c2_230 = arith.constant 2 : index
    %c1_231 = arith.constant 1 : index
    %542 = vector.load %arg10[%c2_230, %c1_231] : memref<18x18xf32, #tpu.memory_space<vmem>>, vector<16x16xf32>
    %c70 = arith.constant 70 : index
    %543 = memref.load %arg7[%c70] : memref<108xf32, #tpu.memory_space<smem>>
    %544 = vector.broadcast %543 : f32 to vector<16x16xf32>
    %545 = arith.mulf %544, %542 : vector<16x16xf32>
    %546 = arith.addf %537, %545 : vector<16x16xf32>
    %c106 = arith.constant 106 : index
    %547 = memref.load %arg7[%c106] : memref<108xf32, #tpu.memory_space<smem>>
    %548 = vector.broadcast %547 : f32 to vector<16x16xf32>
    %549 = arith.mulf %548, %542 : vector<16x16xf32>
    %550 = arith.addf %541, %549 : vector<16x16xf32>
    %c2_232 = arith.constant 2 : index
    %c2_233 = arith.constant 2 : index
    %551 = vector.load %arg10[%c2_232, %c2_233] : memref<18x18xf32, #tpu.memory_space<vmem>>, vector<16x16xf32>
    %c71 = arith.constant 71 : index
    %552 = memref.load %arg7[%c71] : memref<108xf32, #tpu.memory_space<smem>>
    %553 = vector.broadcast %552 : f32 to vector<16x16xf32>
    %554 = arith.mulf %553, %551 : vector<16x16xf32>
    %555 = arith.addf %546, %554 : vector<16x16xf32>
    %c107 = arith.constant 107 : index
    %556 = memref.load %arg7[%c107] : memref<108xf32, #tpu.memory_space<smem>>
    %557 = vector.broadcast %556 : f32 to vector<16x16xf32>
    %558 = arith.mulf %557, %551 : vector<16x16xf32>
    %559 = arith.addf %550, %558 : vector<16x16xf32>
    %c7_234 = arith.constant 7 : index
    %560 = memref.load %arg8[%c7_234] : memref<12xf32, #tpu.memory_space<smem>>
    %561 = vector.broadcast %560 : f32 to vector<16x16xf32>
    %562 = arith.addf %555, %561 : vector<16x16xf32>
    %c11_235 = arith.constant 11 : index
    %563 = memref.load %arg8[%c11_235] : memref<12xf32, #tpu.memory_space<smem>>
    %564 = vector.broadcast %563 : f32 to vector<16x16xf32>
    %565 = arith.addf %559, %564 : vector<16x16xf32>
    %cst_236 = arith.constant dense<0.000000e+00> : vector<20x16xf32>
    %566 = tpu.matmul %2, %562, %cst_236 {dimension_numbers = #tpu.dot_dimension_numbers<[1], [0], [0], [1], [0, 0, 1, 1], [], []>} : vector<20x16xf32>, vector<16x16xf32>, vector<20x16xf32> -> vector<20x16xf32>
    %cst_237 = arith.constant dense<0.000000e+00> : vector<20x20xf32>
    %567 = tpu.matmul %566, %3, %cst_237 {dimension_numbers = #tpu.dot_dimension_numbers<[1], [0], [0], [1], [0, 0, 1, 1], [], []>} : vector<20x16xf32>, vector<16x20xf32>, vector<20x20xf32> -> vector<20x20xf32>
    %c3_238 = arith.constant 3 : index
    %c0_239 = arith.constant 0 : index
    %c0_240 = arith.constant 0 : index
    %568 = vector.load %arg11[%c3_238, %c0_239, %c0_240] : memref<4x20x20xf32, #tpu.memory_space<vmem>>, vector<1x20x20xf32>
    %569 = vector.shape_cast %568 : vector<1x20x20xf32> to vector<20x20xf32>
    %570 = vector.shape_cast %567 : vector<20x20xf32> to vector<1x20x20xf32>
    tpu.vector_store %arg11[%c3_238, %c0_239, %c0_240], %570 {strides = array<i32>} : memref<4x20x20xf32, #tpu.memory_space<vmem>>, vector<1x20x20xf32>,
    %cst_241 = arith.constant dense<0.000000e+00> : vector<20x16xf32>
    %571 = tpu.matmul %2, %565, %cst_241 {dimension_numbers = #tpu.dot_dimension_numbers<[1], [0], [0], [1], [0, 0, 1, 1], [], []>} : vector<20x16xf32>, vector<16x16xf32>, vector<20x16xf32> -> vector<20x16xf32>
    %cst_242 = arith.constant dense<0.000000e+00> : vector<20x20xf32>
    %572 = tpu.matmul %571, %3, %cst_242 {dimension_numbers = #tpu.dot_dimension_numbers<[1], [0], [0], [1], [0, 0, 1, 1], [], []>} : vector<20x16xf32>, vector<16x20xf32>, vector<20x20xf32> -> vector<20x20xf32>
    %c3_243 = arith.constant 3 : index
    %c0_244 = arith.constant 0 : index
    %c0_245 = arith.constant 0 : index
    %573 = vector.load %arg12[%c3_243, %c0_244, %c0_245] : memref<4x20x20xf32, #tpu.memory_space<vmem>>, vector<1x20x20xf32>
    %574 = vector.shape_cast %573 : vector<1x20x20xf32> to vector<20x20xf32>
    %575 = vector.shape_cast %572 : vector<20x20xf32> to vector<1x20x20xf32>
    tpu.vector_store %arg12[%c3_243, %c0_244, %c0_245], %575 {strides = array<i32>} : memref<4x20x20xf32, #tpu.memory_space<vmem>>, vector<1x20x20xf32>,
    %c0_246 = arith.constant 0 : index
    %c3_247 = arith.constant 3 : index
    %c0_248 = arith.constant 0 : index
    %c0_249 = arith.constant 0 : index
    %576 = vector.load %arg2[%c0_246, %c3_247, %c0_248, %c0_249] : memref<1x4x8x8xf32, #tpu.memory_space<vmem>>, vector<1x1x8x8xf32>
    %577 = vector.shape_cast %576 : vector<1x1x8x8xf32> to vector<8x8xf32>
    %cst_250 = arith.constant dense<0.000000e+00> : vector<16x8xf32>
    %578 = tpu.matmul %0, %577, %cst_250 {dimension_numbers = #tpu.dot_dimension_numbers<[1], [0], [0], [1], [0, 0, 1, 1], [], []>} : vector<16x8xf32>, vector<8x8xf32>, vector<16x8xf32> -> vector<16x8xf32>
    %cst_251 = arith.constant dense<0.000000e+00> : vector<16x16xf32>
    %579 = tpu.matmul %578, %1, %cst_251 {dimension_numbers = #tpu.dot_dimension_numbers<[1], [0], [0], [1], [0, 0, 1, 1], [], []>} : vector<16x8xf32>, vector<8x16xf32>, vector<16x16xf32> -> vector<16x16xf32>
    %c1_252 = arith.constant 1 : index
    %c1_253 = arith.constant 1 : index
    %580 = vector.load %arg10[%c1_252, %c1_253] : memref<18x18xf32, #tpu.memory_space<vmem>>, vector<16x16xf32>
    tpu.vector_store %arg10[%c1_252, %c1_253], %579 {strides = array<i32>} : memref<18x18xf32, #tpu.memory_space<vmem>>, vector<16x16xf32>,
    %cst_254 = arith.constant 0.000000e+00 : f32
    %581 = vector.broadcast %cst_254 : f32 to vector<16x16xf32>
    %c27 = arith.constant 27 : index
    %582 = memref.load %arg7[%c27] : memref<108xf32, #tpu.memory_space<smem>>
    %c0_255 = arith.constant 0 : index
    %c0_256 = arith.constant 0 : index
    %583 = vector.load %arg10[%c0_255, %c0_256] : memref<18x18xf32, #tpu.memory_space<vmem>>, vector<16x16xf32>
    %584 = vector.broadcast %582 : f32 to vector<16x16xf32>
    %585 = arith.mulf %584, %583 : vector<16x16xf32>
    %586 = arith.addf %581, %585 : vector<16x16xf32>
    %c28 = arith.constant 28 : index
    %587 = memref.load %arg7[%c28] : memref<108xf32, #tpu.memory_space<smem>>
    %c0_257 = arith.constant 0 : index
    %c1_258 = arith.constant 1 : index
    %588 = vector.load %arg10[%c0_257, %c1_258] : memref<18x18xf32, #tpu.memory_space<vmem>>, vector<16x16xf32>
    %589 = vector.broadcast %587 : f32 to vector<16x16xf32>
    %590 = arith.mulf %589, %588 : vector<16x16xf32>
    %591 = arith.addf %586, %590 : vector<16x16xf32>
    %c29 = arith.constant 29 : index
    %592 = memref.load %arg7[%c29] : memref<108xf32, #tpu.memory_space<smem>>
    %c0_259 = arith.constant 0 : index
    %c2_260 = arith.constant 2 : index
    %593 = vector.load %arg10[%c0_259, %c2_260] : memref<18x18xf32, #tpu.memory_space<vmem>>, vector<16x16xf32>
    %594 = vector.broadcast %592 : f32 to vector<16x16xf32>
    %595 = arith.mulf %594, %593 : vector<16x16xf32>
    %596 = arith.addf %591, %595 : vector<16x16xf32>
    %c30 = arith.constant 30 : index
    %597 = memref.load %arg7[%c30] : memref<108xf32, #tpu.memory_space<smem>>
    %c1_261 = arith.constant 1 : index
    %c0_262 = arith.constant 0 : index
    %598 = vector.load %arg10[%c1_261, %c0_262] : memref<18x18xf32, #tpu.memory_space<vmem>>, vector<16x16xf32>
    %599 = vector.broadcast %597 : f32 to vector<16x16xf32>
    %600 = arith.mulf %599, %598 : vector<16x16xf32>
    %601 = arith.addf %596, %600 : vector<16x16xf32>
    %c31 = arith.constant 31 : index
    %602 = memref.load %arg7[%c31] : memref<108xf32, #tpu.memory_space<smem>>
    %c1_263 = arith.constant 1 : index
    %c1_264 = arith.constant 1 : index
    %603 = vector.load %arg10[%c1_263, %c1_264] : memref<18x18xf32, #tpu.memory_space<vmem>>, vector<16x16xf32>
    %604 = vector.broadcast %602 : f32 to vector<16x16xf32>
    %605 = arith.mulf %604, %603 : vector<16x16xf32>
    %606 = arith.addf %601, %605 : vector<16x16xf32>
    %c32 = arith.constant 32 : index
    %607 = memref.load %arg7[%c32] : memref<108xf32, #tpu.memory_space<smem>>
    %c1_265 = arith.constant 1 : index
    %c2_266 = arith.constant 2 : index
    %608 = vector.load %arg10[%c1_265, %c2_266] : memref<18x18xf32, #tpu.memory_space<vmem>>, vector<16x16xf32>
    %609 = vector.broadcast %607 : f32 to vector<16x16xf32>
    %610 = arith.mulf %609, %608 : vector<16x16xf32>
    %611 = arith.addf %606, %610 : vector<16x16xf32>
    %c33 = arith.constant 33 : index
    %612 = memref.load %arg7[%c33] : memref<108xf32, #tpu.memory_space<smem>>
    %c2_267 = arith.constant 2 : index
    %c0_268 = arith.constant 0 : index
    %613 = vector.load %arg10[%c2_267, %c0_268] : memref<18x18xf32, #tpu.memory_space<vmem>>, vector<16x16xf32>
    %614 = vector.broadcast %612 : f32 to vector<16x16xf32>
    %615 = arith.mulf %614, %613 : vector<16x16xf32>
    %616 = arith.addf %611, %615 : vector<16x16xf32>
    %c34 = arith.constant 34 : index
    %617 = memref.load %arg7[%c34] : memref<108xf32, #tpu.memory_space<smem>>
    %c2_269 = arith.constant 2 : index
    %c1_270 = arith.constant 1 : index
    %618 = vector.load %arg10[%c2_269, %c1_270] : memref<18x18xf32, #tpu.memory_space<vmem>>, vector<16x16xf32>
    %619 = vector.broadcast %617 : f32 to vector<16x16xf32>
    %620 = arith.mulf %619, %618 : vector<16x16xf32>
    %621 = arith.addf %616, %620 : vector<16x16xf32>
    %c35 = arith.constant 35 : index
    %622 = memref.load %arg7[%c35] : memref<108xf32, #tpu.memory_space<smem>>
    %c2_271 = arith.constant 2 : index
    %c2_272 = arith.constant 2 : index
    %623 = vector.load %arg10[%c2_271, %c2_272] : memref<18x18xf32, #tpu.memory_space<vmem>>, vector<16x16xf32>
    %624 = vector.broadcast %622 : f32 to vector<16x16xf32>
    %625 = arith.mulf %624, %623 : vector<16x16xf32>
    %626 = arith.addf %621, %625 : vector<16x16xf32>
    %c3_273 = arith.constant 3 : index
    %627 = memref.load %arg8[%c3_273] : memref<12xf32, #tpu.memory_space<smem>>
    %628 = vector.broadcast %627 : f32 to vector<16x16xf32>
    %629 = arith.addf %626, %628 : vector<16x16xf32>
    %c0_274 = arith.constant 0 : index
    %c0_275 = arith.constant 0 : index
    %c0_276 = arith.constant 0 : index
    %630 = vector.load %arg11[%c0_274, %c0_275, %c0_276] : memref<4x20x20xf32, #tpu.memory_space<vmem>>, vector<1x16x16xf32>
    %631 = vector.shape_cast %630 : vector<1x16x16xf32> to vector<16x16xf32>
    %632 = arith.mulf %161, %631 : vector<16x16xf32>
    %c1_277 = arith.constant 1 : index
    %c0_278 = arith.constant 0 : index
    %c0_279 = arith.constant 0 : index
    %633 = vector.load %arg11[%c1_277, %c0_278, %c0_279] : memref<4x20x20xf32, #tpu.memory_space<vmem>>, vector<1x16x16xf32>
    %634 = vector.shape_cast %633 : vector<1x16x16xf32> to vector<16x16xf32>
    %635 = arith.mulf %317, %634 : vector<16x16xf32>
    %636 = arith.addf %632, %635 : vector<16x16xf32>
    %c2_280 = arith.constant 2 : index
    %c0_281 = arith.constant 0 : index
    %c0_282 = arith.constant 0 : index
    %637 = vector.load %arg11[%c2_280, %c0_281, %c0_282] : memref<4x20x20xf32, #tpu.memory_space<vmem>>, vector<1x16x16xf32>
    %638 = vector.shape_cast %637 : vector<1x16x16xf32> to vector<16x16xf32>
    %639 = arith.mulf %473, %638 : vector<16x16xf32>
    %640 = arith.addf %636, %639 : vector<16x16xf32>
    %c3_283 = arith.constant 3 : index
    %c0_284 = arith.constant 0 : index
    %c0_285 = arith.constant 0 : index
    %641 = vector.load %arg11[%c3_283, %c0_284, %c0_285] : memref<4x20x20xf32, #tpu.memory_space<vmem>>, vector<1x16x16xf32>
    %642 = vector.shape_cast %641 : vector<1x16x16xf32> to vector<16x16xf32>
    %643 = arith.mulf %629, %642 : vector<16x16xf32>
    %644 = arith.addf %640, %643 : vector<16x16xf32>
    %c0_286 = arith.constant 0 : index
    %c0_287 = arith.constant 0 : index
    %c2_288 = arith.constant 2 : index
    %645 = vector.load %arg11[%c0_286, %c0_287, %c2_288] : memref<4x20x20xf32, #tpu.memory_space<vmem>>, vector<1x16x16xf32>
    %646 = vector.shape_cast %645 : vector<1x16x16xf32> to vector<16x16xf32>
    %647 = arith.mulf %161, %646 : vector<16x16xf32>
    %c1_289 = arith.constant 1 : index
    %c0_290 = arith.constant 0 : index
    %c2_291 = arith.constant 2 : index
    %648 = vector.load %arg11[%c1_289, %c0_290, %c2_291] : memref<4x20x20xf32, #tpu.memory_space<vmem>>, vector<1x16x16xf32>
    %649 = vector.shape_cast %648 : vector<1x16x16xf32> to vector<16x16xf32>
    %650 = arith.mulf %317, %649 : vector<16x16xf32>
    %651 = arith.addf %647, %650 : vector<16x16xf32>
    %c2_292 = arith.constant 2 : index
    %c0_293 = arith.constant 0 : index
    %c2_294 = arith.constant 2 : index
    %652 = vector.load %arg11[%c2_292, %c0_293, %c2_294] : memref<4x20x20xf32, #tpu.memory_space<vmem>>, vector<1x16x16xf32>
    %653 = vector.shape_cast %652 : vector<1x16x16xf32> to vector<16x16xf32>
    %654 = arith.mulf %473, %653 : vector<16x16xf32>
    %655 = arith.addf %651, %654 : vector<16x16xf32>
    %c3_295 = arith.constant 3 : index
    %c0_296 = arith.constant 0 : index
    %c2_297 = arith.constant 2 : index
    %656 = vector.load %arg11[%c3_295, %c0_296, %c2_297] : memref<4x20x20xf32, #tpu.memory_space<vmem>>, vector<1x16x16xf32>
    %657 = vector.shape_cast %656 : vector<1x16x16xf32> to vector<16x16xf32>
    %658 = arith.mulf %629, %657 : vector<16x16xf32>
    %659 = arith.addf %655, %658 : vector<16x16xf32>
    %c0_298 = arith.constant 0 : index
    %c0_299 = arith.constant 0 : index
    %c4_300 = arith.constant 4 : index
    %660 = vector.load %arg11[%c0_298, %c0_299, %c4_300] : memref<4x20x20xf32, #tpu.memory_space<vmem>>, vector<1x16x16xf32>
    %661 = vector.shape_cast %660 : vector<1x16x16xf32> to vector<16x16xf32>
    %662 = arith.mulf %161, %661 : vector<16x16xf32>
    %c1_301 = arith.constant 1 : index
    %c0_302 = arith.constant 0 : index
    %c4_303 = arith.constant 4 : index
    %663 = vector.load %arg11[%c1_301, %c0_302, %c4_303] : memref<4x20x20xf32, #tpu.memory_space<vmem>>, vector<1x16x16xf32>
    %664 = vector.shape_cast %663 : vector<1x16x16xf32> to vector<16x16xf32>
    %665 = arith.mulf %317, %664 : vector<16x16xf32>
    %666 = arith.addf %662, %665 : vector<16x16xf32>
    %c2_304 = arith.constant 2 : index
    %c0_305 = arith.constant 0 : index
    %c4_306 = arith.constant 4 : index
    %667 = vector.load %arg11[%c2_304, %c0_305, %c4_306] : memref<4x20x20xf32, #tpu.memory_space<vmem>>, vector<1x16x16xf32>
    %668 = vector.shape_cast %667 : vector<1x16x16xf32> to vector<16x16xf32>
    %669 = arith.mulf %473, %668 : vector<16x16xf32>
    %670 = arith.addf %666, %669 : vector<16x16xf32>
    %c3_307 = arith.constant 3 : index
    %c0_308 = arith.constant 0 : index
    %c4_309 = arith.constant 4 : index
    %671 = vector.load %arg11[%c3_307, %c0_308, %c4_309] : memref<4x20x20xf32, #tpu.memory_space<vmem>>, vector<1x16x16xf32>
    %672 = vector.shape_cast %671 : vector<1x16x16xf32> to vector<16x16xf32>
    %673 = arith.mulf %629, %672 : vector<16x16xf32>
    %674 = arith.addf %670, %673 : vector<16x16xf32>
    %c0_310 = arith.constant 0 : index
    %c2_311 = arith.constant 2 : index
    %c0_312 = arith.constant 0 : index
    %675 = vector.load %arg11[%c0_310, %c2_311, %c0_312] : memref<4x20x20xf32, #tpu.memory_space<vmem>>, vector<1x16x16xf32>
    %676 = vector.shape_cast %675 : vector<1x16x16xf32> to vector<16x16xf32>
    %677 = arith.mulf %161, %676 : vector<16x16xf32>
    %c1_313 = arith.constant 1 : index
    %c2_314 = arith.constant 2 : index
    %c0_315 = arith.constant 0 : index
    %678 = vector.load %arg11[%c1_313, %c2_314, %c0_315] : memref<4x20x20xf32, #tpu.memory_space<vmem>>, vector<1x16x16xf32>
    %679 = vector.shape_cast %678 : vector<1x16x16xf32> to vector<16x16xf32>
    %680 = arith.mulf %317, %679 : vector<16x16xf32>
    %681 = arith.addf %677, %680 : vector<16x16xf32>
    %c2_316 = arith.constant 2 : index
    %c2_317 = arith.constant 2 : index
    %c0_318 = arith.constant 0 : index
    %682 = vector.load %arg11[%c2_316, %c2_317, %c0_318] : memref<4x20x20xf32, #tpu.memory_space<vmem>>, vector<1x16x16xf32>
    %683 = vector.shape_cast %682 : vector<1x16x16xf32> to vector<16x16xf32>
    %684 = arith.mulf %473, %683 : vector<16x16xf32>
    %685 = arith.addf %681, %684 : vector<16x16xf32>
    %c3_319 = arith.constant 3 : index
    %c2_320 = arith.constant 2 : index
    %c0_321 = arith.constant 0 : index
    %686 = vector.load %arg11[%c3_319, %c2_320, %c0_321] : memref<4x20x20xf32, #tpu.memory_space<vmem>>, vector<1x16x16xf32>
    %687 = vector.shape_cast %686 : vector<1x16x16xf32> to vector<16x16xf32>
    %688 = arith.mulf %629, %687 : vector<16x16xf32>
    %689 = arith.addf %685, %688 : vector<16x16xf32>
    %c0_322 = arith.constant 0 : index
    %c2_323 = arith.constant 2 : index
    %c2_324 = arith.constant 2 : index
    %690 = vector.load %arg11[%c0_322, %c2_323, %c2_324] : memref<4x20x20xf32, #tpu.memory_space<vmem>>, vector<1x16x16xf32>
    %691 = vector.shape_cast %690 : vector<1x16x16xf32> to vector<16x16xf32>
    %692 = arith.mulf %161, %691 : vector<16x16xf32>
    %c1_325 = arith.constant 1 : index
    %c2_326 = arith.constant 2 : index
    %c2_327 = arith.constant 2 : index
    %693 = vector.load %arg11[%c1_325, %c2_326, %c2_327] : memref<4x20x20xf32, #tpu.memory_space<vmem>>, vector<1x16x16xf32>
    %694 = vector.shape_cast %693 : vector<1x16x16xf32> to vector<16x16xf32>
    %695 = arith.mulf %317, %694 : vector<16x16xf32>
    %696 = arith.addf %692, %695 : vector<16x16xf32>
    %c2_328 = arith.constant 2 : index
    %c2_329 = arith.constant 2 : index
    %c2_330 = arith.constant 2 : index
    %697 = vector.load %arg11[%c2_328, %c2_329, %c2_330] : memref<4x20x20xf32, #tpu.memory_space<vmem>>, vector<1x16x16xf32>
    %698 = vector.shape_cast %697 : vector<1x16x16xf32> to vector<16x16xf32>
    %699 = arith.mulf %473, %698 : vector<16x16xf32>
    %700 = arith.addf %696, %699 : vector<16x16xf32>
    %c3_331 = arith.constant 3 : index
    %c2_332 = arith.constant 2 : index
    %c2_333 = arith.constant 2 : index
    %701 = vector.load %arg11[%c3_331, %c2_332, %c2_333] : memref<4x20x20xf32, #tpu.memory_space<vmem>>, vector<1x16x16xf32>
    %702 = vector.shape_cast %701 : vector<1x16x16xf32> to vector<16x16xf32>
    %703 = arith.mulf %629, %702 : vector<16x16xf32>
    %704 = arith.addf %700, %703 : vector<16x16xf32>
    %c0_334 = arith.constant 0 : index
    %c2_335 = arith.constant 2 : index
    %c4_336 = arith.constant 4 : index
    %705 = vector.load %arg11[%c0_334, %c2_335, %c4_336] : memref<4x20x20xf32, #tpu.memory_space<vmem>>, vector<1x16x16xf32>
    %706 = vector.shape_cast %705 : vector<1x16x16xf32> to vector<16x16xf32>
    %707 = arith.mulf %161, %706 : vector<16x16xf32>
    %c1_337 = arith.constant 1 : index
    %c2_338 = arith.constant 2 : index
    %c4_339 = arith.constant 4 : index
    %708 = vector.load %arg11[%c1_337, %c2_338, %c4_339] : memref<4x20x20xf32, #tpu.memory_space<vmem>>, vector<1x16x16xf32>
    %709 = vector.shape_cast %708 : vector<1x16x16xf32> to vector<16x16xf32>
    %710 = arith.mulf %317, %709 : vector<16x16xf32>
    %711 = arith.addf %707, %710 : vector<16x16xf32>
    %c2_340 = arith.constant 2 : index
    %c2_341 = arith.constant 2 : index
    %c4_342 = arith.constant 4 : index
    %712 = vector.load %arg11[%c2_340, %c2_341, %c4_342] : memref<4x20x20xf32, #tpu.memory_space<vmem>>, vector<1x16x16xf32>
    %713 = vector.shape_cast %712 : vector<1x16x16xf32> to vector<16x16xf32>
    %714 = arith.mulf %473, %713 : vector<16x16xf32>
    %715 = arith.addf %711, %714 : vector<16x16xf32>
    %c3_343 = arith.constant 3 : index
    %c2_344 = arith.constant 2 : index
    %c4_345 = arith.constant 4 : index
    %716 = vector.load %arg11[%c3_343, %c2_344, %c4_345] : memref<4x20x20xf32, #tpu.memory_space<vmem>>, vector<1x16x16xf32>
    %717 = vector.shape_cast %716 : vector<1x16x16xf32> to vector<16x16xf32>
    %718 = arith.mulf %629, %717 : vector<16x16xf32>
    %719 = arith.addf %715, %718 : vector<16x16xf32>
    %c0_346 = arith.constant 0 : index
    %c4_347 = arith.constant 4 : index
    %c0_348 = arith.constant 0 : index
    %720 = vector.load %arg11[%c0_346, %c4_347, %c0_348] : memref<4x20x20xf32, #tpu.memory_space<vmem>>, vector<1x16x16xf32>
    %721 = vector.shape_cast %720 : vector<1x16x16xf32> to vector<16x16xf32>
    %722 = arith.mulf %161, %721 : vector<16x16xf32>
    %c1_349 = arith.constant 1 : index
    %c4_350 = arith.constant 4 : index
    %c0_351 = arith.constant 0 : index
    %723 = vector.load %arg11[%c1_349, %c4_350, %c0_351] : memref<4x20x20xf32, #tpu.memory_space<vmem>>, vector<1x16x16xf32>
    %724 = vector.shape_cast %723 : vector<1x16x16xf32> to vector<16x16xf32>
    %725 = arith.mulf %317, %724 : vector<16x16xf32>
    %726 = arith.addf %722, %725 : vector<16x16xf32>
    %c2_352 = arith.constant 2 : index
    %c4_353 = arith.constant 4 : index
    %c0_354 = arith.constant 0 : index
    %727 = vector.load %arg11[%c2_352, %c4_353, %c0_354] : memref<4x20x20xf32, #tpu.memory_space<vmem>>, vector<1x16x16xf32>
    %728 = vector.shape_cast %727 : vector<1x16x16xf32> to vector<16x16xf32>
    %729 = arith.mulf %473, %728 : vector<16x16xf32>
    %730 = arith.addf %726, %729 : vector<16x16xf32>
    %c3_355 = arith.constant 3 : index
    %c4_356 = arith.constant 4 : index
    %c0_357 = arith.constant 0 : index
    %731 = vector.load %arg11[%c3_355, %c4_356, %c0_357] : memref<4x20x20xf32, #tpu.memory_space<vmem>>, vector<1x16x16xf32>
    %732 = vector.shape_cast %731 : vector<1x16x16xf32> to vector<16x16xf32>
    %733 = arith.mulf %629, %732 : vector<16x16xf32>
    %734 = arith.addf %730, %733 : vector<16x16xf32>
    %c0_358 = arith.constant 0 : index
    %c4_359 = arith.constant 4 : index
    %c2_360 = arith.constant 2 : index
    %735 = vector.load %arg11[%c0_358, %c4_359, %c2_360] : memref<4x20x20xf32, #tpu.memory_space<vmem>>, vector<1x16x16xf32>
    %736 = vector.shape_cast %735 : vector<1x16x16xf32> to vector<16x16xf32>
    %737 = arith.mulf %161, %736 : vector<16x16xf32>
    %c1_361 = arith.constant 1 : index
    %c4_362 = arith.constant 4 : index
    %c2_363 = arith.constant 2 : index
    %738 = vector.load %arg11[%c1_361, %c4_362, %c2_363] : memref<4x20x20xf32, #tpu.memory_space<vmem>>, vector<1x16x16xf32>
    %739 = vector.shape_cast %738 : vector<1x16x16xf32> to vector<16x16xf32>
    %740 = arith.mulf %317, %739 : vector<16x16xf32>
    %741 = arith.addf %737, %740 : vector<16x16xf32>
    %c2_364 = arith.constant 2 : index
    %c4_365 = arith.constant 4 : index
    %c2_366 = arith.constant 2 : index
    %742 = vector.load %arg11[%c2_364, %c4_365, %c2_366] : memref<4x20x20xf32, #tpu.memory_space<vmem>>, vector<1x16x16xf32>
    %743 = vector.shape_cast %742 : vector<1x16x16xf32> to vector<16x16xf32>
    %744 = arith.mulf %473, %743 : vector<16x16xf32>
    %745 = arith.addf %741, %744 : vector<16x16xf32>
    %c3_367 = arith.constant 3 : index
    %c4_368 = arith.constant 4 : index
    %c2_369 = arith.constant 2 : index
    %746 = vector.load %arg11[%c3_367, %c4_368, %c2_369] : memref<4x20x20xf32, #tpu.memory_space<vmem>>, vector<1x16x16xf32>
    %747 = vector.shape_cast %746 : vector<1x16x16xf32> to vector<16x16xf32>
    %748 = arith.mulf %629, %747 : vector<16x16xf32>
    %749 = arith.addf %745, %748 : vector<16x16xf32>
    %c0_370 = arith.constant 0 : index
    %c4_371 = arith.constant 4 : index
    %c4_372 = arith.constant 4 : index
    %750 = vector.load %arg11[%c0_370, %c4_371, %c4_372] : memref<4x20x20xf32, #tpu.memory_space<vmem>>, vector<1x16x16xf32>
    %751 = vector.shape_cast %750 : vector<1x16x16xf32> to vector<16x16xf32>
    %752 = arith.mulf %161, %751 : vector<16x16xf32>
    %c1_373 = arith.constant 1 : index
    %c4_374 = arith.constant 4 : index
    %c4_375 = arith.constant 4 : index
    %753 = vector.load %arg11[%c1_373, %c4_374, %c4_375] : memref<4x20x20xf32, #tpu.memory_space<vmem>>, vector<1x16x16xf32>
    %754 = vector.shape_cast %753 : vector<1x16x16xf32> to vector<16x16xf32>
    %755 = arith.mulf %317, %754 : vector<16x16xf32>
    %756 = arith.addf %752, %755 : vector<16x16xf32>
    %c2_376 = arith.constant 2 : index
    %c4_377 = arith.constant 4 : index
    %c4_378 = arith.constant 4 : index
    %757 = vector.load %arg11[%c2_376, %c4_377, %c4_378] : memref<4x20x20xf32, #tpu.memory_space<vmem>>, vector<1x16x16xf32>
    %758 = vector.shape_cast %757 : vector<1x16x16xf32> to vector<16x16xf32>
    %759 = arith.mulf %473, %758 : vector<16x16xf32>
    %760 = arith.addf %756, %759 : vector<16x16xf32>
    %c3_379 = arith.constant 3 : index
    %c4_380 = arith.constant 4 : index
    %c4_381 = arith.constant 4 : index
    %761 = vector.load %arg11[%c3_379, %c4_380, %c4_381] : memref<4x20x20xf32, #tpu.memory_space<vmem>>, vector<1x16x16xf32>
    %762 = vector.shape_cast %761 : vector<1x16x16xf32> to vector<16x16xf32>
    %763 = arith.mulf %629, %762 : vector<16x16xf32>
    %764 = arith.addf %760, %763 : vector<16x16xf32>
    %765 = arith.maximumf %644, %659 : vector<16x16xf32>
    %766 = arith.maximumf %765, %674 : vector<16x16xf32>
    %767 = arith.maximumf %766, %689 : vector<16x16xf32>
    %768 = arith.maximumf %767, %704 : vector<16x16xf32>
    %769 = arith.maximumf %768, %719 : vector<16x16xf32>
    %770 = arith.maximumf %769, %734 : vector<16x16xf32>
    %771 = arith.maximumf %770, %749 : vector<16x16xf32>
    %772 = arith.maximumf %771, %764 : vector<16x16xf32>
    %cst_382 = arith.constant 0.000000e+00 : f32
    %773 = vector.broadcast %cst_382 : f32 to vector<16x16xf32>
    %cst_383 = arith.constant 0.000000e+00 : f32
    %774 = vector.broadcast %cst_383 : f32 to vector<16x16xf32>
    %cst_384 = arith.constant 0.000000e+00 : f32
    %775 = vector.broadcast %cst_384 : f32 to vector<16x16xf32>
    %cst_385 = arith.constant 0.000000e+00 : f32
    %776 = vector.broadcast %cst_385 : f32 to vector<16x16xf32>
    %cst_386 = arith.constant 0.000000e+00 : f32
    %777 = vector.broadcast %cst_386 : f32 to vector<16x16xf32>
    %778 = arith.subf %644, %772 : vector<16x16xf32>
    %779 = math.exp %778 : vector<16x16xf32>
    %780 = arith.addf %773, %779 : vector<16x16xf32>
    %c0_387 = arith.constant 0 : index
    %c0_388 = arith.constant 0 : index
    %c0_389 = arith.constant 0 : index
    %781 = vector.load %arg12[%c0_387, %c0_388, %c0_389] : memref<4x20x20xf32, #tpu.memory_space<vmem>>, vector<1x16x16xf32>
    %782 = vector.shape_cast %781 : vector<1x16x16xf32> to vector<16x16xf32>
    %783 = arith.mulf %779, %782 : vector<16x16xf32>
    %784 = arith.addf %774, %783 : vector<16x16xf32>
    %c1_390 = arith.constant 1 : index
    %c0_391 = arith.constant 0 : index
    %c0_392 = arith.constant 0 : index
    %785 = vector.load %arg12[%c1_390, %c0_391, %c0_392] : memref<4x20x20xf32, #tpu.memory_space<vmem>>, vector<1x16x16xf32>
    %786 = vector.shape_cast %785 : vector<1x16x16xf32> to vector<16x16xf32>
    %787 = arith.mulf %779, %786 : vector<16x16xf32>
    %788 = arith.addf %775, %787 : vector<16x16xf32>
    %c2_393 = arith.constant 2 : index
    %c0_394 = arith.constant 0 : index
    %c0_395 = arith.constant 0 : index
    %789 = vector.load %arg12[%c2_393, %c0_394, %c0_395] : memref<4x20x20xf32, #tpu.memory_space<vmem>>, vector<1x16x16xf32>
    %790 = vector.shape_cast %789 : vector<1x16x16xf32> to vector<16x16xf32>
    %791 = arith.mulf %779, %790 : vector<16x16xf32>
    %792 = arith.addf %776, %791 : vector<16x16xf32>
    %c3_396 = arith.constant 3 : index
    %c0_397 = arith.constant 0 : index
    %c0_398 = arith.constant 0 : index
    %793 = vector.load %arg12[%c3_396, %c0_397, %c0_398] : memref<4x20x20xf32, #tpu.memory_space<vmem>>, vector<1x16x16xf32>
    %794 = vector.shape_cast %793 : vector<1x16x16xf32> to vector<16x16xf32>
    %795 = arith.mulf %779, %794 : vector<16x16xf32>
    %796 = arith.addf %777, %795 : vector<16x16xf32>
    %797 = arith.subf %659, %772 : vector<16x16xf32>
    %798 = math.exp %797 : vector<16x16xf32>
    %799 = arith.addf %780, %798 : vector<16x16xf32>
    %c0_399 = arith.constant 0 : index
    %c0_400 = arith.constant 0 : index
    %c2_401 = arith.constant 2 : index
    %800 = vector.load %arg12[%c0_399, %c0_400, %c2_401] : memref<4x20x20xf32, #tpu.memory_space<vmem>>, vector<1x16x16xf32>
    %801 = vector.shape_cast %800 : vector<1x16x16xf32> to vector<16x16xf32>
    %802 = arith.mulf %798, %801 : vector<16x16xf32>
    %803 = arith.addf %784, %802 : vector<16x16xf32>
    %c1_402 = arith.constant 1 : index
    %c0_403 = arith.constant 0 : index
    %c2_404 = arith.constant 2 : index
    %804 = vector.load %arg12[%c1_402, %c0_403, %c2_404] : memref<4x20x20xf32, #tpu.memory_space<vmem>>, vector<1x16x16xf32>
    %805 = vector.shape_cast %804 : vector<1x16x16xf32> to vector<16x16xf32>
    %806 = arith.mulf %798, %805 : vector<16x16xf32>
    %807 = arith.addf %788, %806 : vector<16x16xf32>
    %c2_405 = arith.constant 2 : index
    %c0_406 = arith.constant 0 : index
    %c2_407 = arith.constant 2 : index
    %808 = vector.load %arg12[%c2_405, %c0_406, %c2_407] : memref<4x20x20xf32, #tpu.memory_space<vmem>>, vector<1x16x16xf32>
    %809 = vector.shape_cast %808 : vector<1x16x16xf32> to vector<16x16xf32>
    %810 = arith.mulf %798, %809 : vector<16x16xf32>
    %811 = arith.addf %792, %810 : vector<16x16xf32>
    %c3_408 = arith.constant 3 : index
    %c0_409 = arith.constant 0 : index
    %c2_410 = arith.constant 2 : index
    %812 = vector.load %arg12[%c3_408, %c0_409, %c2_410] : memref<4x20x20xf32, #tpu.memory_space<vmem>>, vector<1x16x16xf32>
    %813 = vector.shape_cast %812 : vector<1x16x16xf32> to vector<16x16xf32>
    %814 = arith.mulf %798, %813 : vector<16x16xf32>
    %815 = arith.addf %796, %814 : vector<16x16xf32>
    %816 = arith.subf %674, %772 : vector<16x16xf32>
    %817 = math.exp %816 : vector<16x16xf32>
    %818 = arith.addf %799, %817 : vector<16x16xf32>
    %c0_411 = arith.constant 0 : index
    %c0_412 = arith.constant 0 : index
    %c4_413 = arith.constant 4 : index
    %819 = vector.load %arg12[%c0_411, %c0_412, %c4_413] : memref<4x20x20xf32, #tpu.memory_space<vmem>>, vector<1x16x16xf32>
    %820 = vector.shape_cast %819 : vector<1x16x16xf32> to vector<16x16xf32>
    %821 = arith.mulf %817, %820 : vector<16x16xf32>
    %822 = arith.addf %803, %821 : vector<16x16xf32>
    %c1_414 = arith.constant 1 : index
    %c0_415 = arith.constant 0 : index
    %c4_416 = arith.constant 4 : index
    %823 = vector.load %arg12[%c1_414, %c0_415, %c4_416] : memref<4x20x20xf32, #tpu.memory_space<vmem>>, vector<1x16x16xf32>
    %824 = vector.shape_cast %823 : vector<1x16x16xf32> to vector<16x16xf32>
    %825 = arith.mulf %817, %824 : vector<16x16xf32>
    %826 = arith.addf %807, %825 : vector<16x16xf32>
    %c2_417 = arith.constant 2 : index
    %c0_418 = arith.constant 0 : index
    %c4_419 = arith.constant 4 : index
    %827 = vector.load %arg12[%c2_417, %c0_418, %c4_419] : memref<4x20x20xf32, #tpu.memory_space<vmem>>, vector<1x16x16xf32>
    %828 = vector.shape_cast %827 : vector<1x16x16xf32> to vector<16x16xf32>
    %829 = arith.mulf %817, %828 : vector<16x16xf32>
    %830 = arith.addf %811, %829 : vector<16x16xf32>
    %c3_420 = arith.constant 3 : index
    %c0_421 = arith.constant 0 : index
    %c4_422 = arith.constant 4 : index
    %831 = vector.load %arg12[%c3_420, %c0_421, %c4_422] : memref<4x20x20xf32, #tpu.memory_space<vmem>>, vector<1x16x16xf32>
    %832 = vector.shape_cast %831 : vector<1x16x16xf32> to vector<16x16xf32>
    %833 = arith.mulf %817, %832 : vector<16x16xf32>
    %834 = arith.addf %815, %833 : vector<16x16xf32>
    %835 = arith.subf %689, %772 : vector<16x16xf32>
    %836 = math.exp %835 : vector<16x16xf32>
    %837 = arith.addf %818, %836 : vector<16x16xf32>
    %c0_423 = arith.constant 0 : index
    %c2_424 = arith.constant 2 : index
    %c0_425 = arith.constant 0 : index
    %838 = vector.load %arg12[%c0_423, %c2_424, %c0_425] : memref<4x20x20xf32, #tpu.memory_space<vmem>>, vector<1x16x16xf32>
    %839 = vector.shape_cast %838 : vector<1x16x16xf32> to vector<16x16xf32>
    %840 = arith.mulf %836, %839 : vector<16x16xf32>
    %841 = arith.addf %822, %840 : vector<16x16xf32>
    %c1_426 = arith.constant 1 : index
    %c2_427 = arith.constant 2 : index
    %c0_428 = arith.constant 0 : index
    %842 = vector.load %arg12[%c1_426, %c2_427, %c0_428] : memref<4x20x20xf32, #tpu.memory_space<vmem>>, vector<1x16x16xf32>
    %843 = vector.shape_cast %842 : vector<1x16x16xf32> to vector<16x16xf32>
    %844 = arith.mulf %836, %843 : vector<16x16xf32>
    %845 = arith.addf %826, %844 : vector<16x16xf32>
    %c2_429 = arith.constant 2 : index
    %c2_430 = arith.constant 2 : index
    %c0_431 = arith.constant 0 : index
    %846 = vector.load %arg12[%c2_429, %c2_430, %c0_431] : memref<4x20x20xf32, #tpu.memory_space<vmem>>, vector<1x16x16xf32>
    %847 = vector.shape_cast %846 : vector<1x16x16xf32> to vector<16x16xf32>
    %848 = arith.mulf %836, %847 : vector<16x16xf32>
    %849 = arith.addf %830, %848 : vector<16x16xf32>
    %c3_432 = arith.constant 3 : index
    %c2_433 = arith.constant 2 : index
    %c0_434 = arith.constant 0 : index
    %850 = vector.load %arg12[%c3_432, %c2_433, %c0_434] : memref<4x20x20xf32, #tpu.memory_space<vmem>>, vector<1x16x16xf32>
    %851 = vector.shape_cast %850 : vector<1x16x16xf32> to vector<16x16xf32>
    %852 = arith.mulf %836, %851 : vector<16x16xf32>
    %853 = arith.addf %834, %852 : vector<16x16xf32>
    %854 = arith.subf %704, %772 : vector<16x16xf32>
    %855 = math.exp %854 : vector<16x16xf32>
    %856 = arith.addf %837, %855 : vector<16x16xf32>
    %c0_435 = arith.constant 0 : index
    %c2_436 = arith.constant 2 : index
    %c2_437 = arith.constant 2 : index
    %857 = vector.load %arg12[%c0_435, %c2_436, %c2_437] : memref<4x20x20xf32, #tpu.memory_space<vmem>>, vector<1x16x16xf32>
    %858 = vector.shape_cast %857 : vector<1x16x16xf32> to vector<16x16xf32>
    %859 = arith.mulf %855, %858 : vector<16x16xf32>
    %860 = arith.addf %841, %859 : vector<16x16xf32>
    %c1_438 = arith.constant 1 : index
    %c2_439 = arith.constant 2 : index
    %c2_440 = arith.constant 2 : index
    %861 = vector.load %arg12[%c1_438, %c2_439, %c2_440] : memref<4x20x20xf32, #tpu.memory_space<vmem>>, vector<1x16x16xf32>
    %862 = vector.shape_cast %861 : vector<1x16x16xf32> to vector<16x16xf32>
    %863 = arith.mulf %855, %862 : vector<16x16xf32>
    %864 = arith.addf %845, %863 : vector<16x16xf32>
    %c2_441 = arith.constant 2 : index
    %c2_442 = arith.constant 2 : index
    %c2_443 = arith.constant 2 : index
    %865 = vector.load %arg12[%c2_441, %c2_442, %c2_443] : memref<4x20x20xf32, #tpu.memory_space<vmem>>, vector<1x16x16xf32>
    %866 = vector.shape_cast %865 : vector<1x16x16xf32> to vector<16x16xf32>
    %867 = arith.mulf %855, %866 : vector<16x16xf32>
    %868 = arith.addf %849, %867 : vector<16x16xf32>
    %c3_444 = arith.constant 3 : index
    %c2_445 = arith.constant 2 : index
    %c2_446 = arith.constant 2 : index
    %869 = vector.load %arg12[%c3_444, %c2_445, %c2_446] : memref<4x20x20xf32, #tpu.memory_space<vmem>>, vector<1x16x16xf32>
    %870 = vector.shape_cast %869 : vector<1x16x16xf32> to vector<16x16xf32>
    %871 = arith.mulf %855, %870 : vector<16x16xf32>
    %872 = arith.addf %853, %871 : vector<16x16xf32>
    %873 = arith.subf %719, %772 : vector<16x16xf32>
    %874 = math.exp %873 : vector<16x16xf32>
    %875 = arith.addf %856, %874 : vector<16x16xf32>
    %c0_447 = arith.constant 0 : index
    %c2_448 = arith.constant 2 : index
    %c4_449 = arith.constant 4 : index
    %876 = vector.load %arg12[%c0_447, %c2_448, %c4_449] : memref<4x20x20xf32, #tpu.memory_space<vmem>>, vector<1x16x16xf32>
    %877 = vector.shape_cast %876 : vector<1x16x16xf32> to vector<16x16xf32>
    %878 = arith.mulf %874, %877 : vector<16x16xf32>
    %879 = arith.addf %860, %878 : vector<16x16xf32>
    %c1_450 = arith.constant 1 : index
    %c2_451 = arith.constant 2 : index
    %c4_452 = arith.constant 4 : index
    %880 = vector.load %arg12[%c1_450, %c2_451, %c4_452] : memref<4x20x20xf32, #tpu.memory_space<vmem>>, vector<1x16x16xf32>
    %881 = vector.shape_cast %880 : vector<1x16x16xf32> to vector<16x16xf32>
    %882 = arith.mulf %874, %881 : vector<16x16xf32>
    %883 = arith.addf %864, %882 : vector<16x16xf32>
    %c2_453 = arith.constant 2 : index
    %c2_454 = arith.constant 2 : index
    %c4_455 = arith.constant 4 : index
    %884 = vector.load %arg12[%c2_453, %c2_454, %c4_455] : memref<4x20x20xf32, #tpu.memory_space<vmem>>, vector<1x16x16xf32>
    %885 = vector.shape_cast %884 : vector<1x16x16xf32> to vector<16x16xf32>
    %886 = arith.mulf %874, %885 : vector<16x16xf32>
    %887 = arith.addf %868, %886 : vector<16x16xf32>
    %c3_456 = arith.constant 3 : index
    %c2_457 = arith.constant 2 : index
    %c4_458 = arith.constant 4 : index
    %888 = vector.load %arg12[%c3_456, %c2_457, %c4_458] : memref<4x20x20xf32, #tpu.memory_space<vmem>>, vector<1x16x16xf32>
    %889 = vector.shape_cast %888 : vector<1x16x16xf32> to vector<16x16xf32>
    %890 = arith.mulf %874, %889 : vector<16x16xf32>
    %891 = arith.addf %872, %890 : vector<16x16xf32>
    %892 = arith.subf %734, %772 : vector<16x16xf32>
    %893 = math.exp %892 : vector<16x16xf32>
    %894 = arith.addf %875, %893 : vector<16x16xf32>
    %c0_459 = arith.constant 0 : index
    %c4_460 = arith.constant 4 : index
    %c0_461 = arith.constant 0 : index
    %895 = vector.load %arg12[%c0_459, %c4_460, %c0_461] : memref<4x20x20xf32, #tpu.memory_space<vmem>>, vector<1x16x16xf32>
    %896 = vector.shape_cast %895 : vector<1x16x16xf32> to vector<16x16xf32>
    %897 = arith.mulf %893, %896 : vector<16x16xf32>
    %898 = arith.addf %879, %897 : vector<16x16xf32>
    %c1_462 = arith.constant 1 : index
    %c4_463 = arith.constant 4 : index
    %c0_464 = arith.constant 0 : index
    %899 = vector.load %arg12[%c1_462, %c4_463, %c0_464] : memref<4x20x20xf32, #tpu.memory_space<vmem>>, vector<1x16x16xf32>
    %900 = vector.shape_cast %899 : vector<1x16x16xf32> to vector<16x16xf32>
    %901 = arith.mulf %893, %900 : vector<16x16xf32>
    %902 = arith.addf %883, %901 : vector<16x16xf32>
    %c2_465 = arith.constant 2 : index
    %c4_466 = arith.constant 4 : index
    %c0_467 = arith.constant 0 : index
    %903 = vector.load %arg12[%c2_465, %c4_466, %c0_467] : memref<4x20x20xf32, #tpu.memory_space<vmem>>, vector<1x16x16xf32>
    %904 = vector.shape_cast %903 : vector<1x16x16xf32> to vector<16x16xf32>
    %905 = arith.mulf %893, %904 : vector<16x16xf32>
    %906 = arith.addf %887, %905 : vector<16x16xf32>
    %c3_468 = arith.constant 3 : index
    %c4_469 = arith.constant 4 : index
    %c0_470 = arith.constant 0 : index
    %907 = vector.load %arg12[%c3_468, %c4_469, %c0_470] : memref<4x20x20xf32, #tpu.memory_space<vmem>>, vector<1x16x16xf32>
    %908 = vector.shape_cast %907 : vector<1x16x16xf32> to vector<16x16xf32>
    %909 = arith.mulf %893, %908 : vector<16x16xf32>
    %910 = arith.addf %891, %909 : vector<16x16xf32>
    %911 = arith.subf %749, %772 : vector<16x16xf32>
    %912 = math.exp %911 : vector<16x16xf32>
    %913 = arith.addf %894, %912 : vector<16x16xf32>
    %c0_471 = arith.constant 0 : index
    %c4_472 = arith.constant 4 : index
    %c2_473 = arith.constant 2 : index
    %914 = vector.load %arg12[%c0_471, %c4_472, %c2_473] : memref<4x20x20xf32, #tpu.memory_space<vmem>>, vector<1x16x16xf32>
    %915 = vector.shape_cast %914 : vector<1x16x16xf32> to vector<16x16xf32>
    %916 = arith.mulf %912, %915 : vector<16x16xf32>
    %917 = arith.addf %898, %916 : vector<16x16xf32>
    %c1_474 = arith.constant 1 : index
    %c4_475 = arith.constant 4 : index
    %c2_476 = arith.constant 2 : index
    %918 = vector.load %arg12[%c1_474, %c4_475, %c2_476] : memref<4x20x20xf32, #tpu.memory_space<vmem>>, vector<1x16x16xf32>
    %919 = vector.shape_cast %918 : vector<1x16x16xf32> to vector<16x16xf32>
    %920 = arith.mulf %912, %919 : vector<16x16xf32>
    %921 = arith.addf %902, %920 : vector<16x16xf32>
    %c2_477 = arith.constant 2 : index
    %c4_478 = arith.constant 4 : index
    %c2_479 = arith.constant 2 : index
    %922 = vector.load %arg12[%c2_477, %c4_478, %c2_479] : memref<4x20x20xf32, #tpu.memory_space<vmem>>, vector<1x16x16xf32>
    %923 = vector.shape_cast %922 : vector<1x16x16xf32> to vector<16x16xf32>
    %924 = arith.mulf %912, %923 : vector<16x16xf32>
    %925 = arith.addf %906, %924 : vector<16x16xf32>
    %c3_480 = arith.constant 3 : index
    %c4_481 = arith.constant 4 : index
    %c2_482 = arith.constant 2 : index
    %926 = vector.load %arg12[%c3_480, %c4_481, %c2_482] : memref<4x20x20xf32, #tpu.memory_space<vmem>>, vector<1x16x16xf32>
    %927 = vector.shape_cast %926 : vector<1x16x16xf32> to vector<16x16xf32>
    %928 = arith.mulf %912, %927 : vector<16x16xf32>
    %929 = arith.addf %910, %928 : vector<16x16xf32>
    %930 = arith.subf %764, %772 : vector<16x16xf32>
    %931 = math.exp %930 : vector<16x16xf32>
    %932 = arith.addf %913, %931 : vector<16x16xf32>
    %c0_483 = arith.constant 0 : index
    %c4_484 = arith.constant 4 : index
    %c4_485 = arith.constant 4 : index
    %933 = vector.load %arg12[%c0_483, %c4_484, %c4_485] : memref<4x20x20xf32, #tpu.memory_space<vmem>>, vector<1x16x16xf32>
    %934 = vector.shape_cast %933 : vector<1x16x16xf32> to vector<16x16xf32>
    %935 = arith.mulf %931, %934 : vector<16x16xf32>
    %936 = arith.addf %917, %935 : vector<16x16xf32>
    %c1_486 = arith.constant 1 : index
    %c4_487 = arith.constant 4 : index
    %c4_488 = arith.constant 4 : index
    %937 = vector.load %arg12[%c1_486, %c4_487, %c4_488] : memref<4x20x20xf32, #tpu.memory_space<vmem>>, vector<1x16x16xf32>
    %938 = vector.shape_cast %937 : vector<1x16x16xf32> to vector<16x16xf32>
    %939 = arith.mulf %931, %938 : vector<16x16xf32>
    %940 = arith.addf %921, %939 : vector<16x16xf32>
    %c2_489 = arith.constant 2 : index
    %c4_490 = arith.constant 4 : index
    %c4_491 = arith.constant 4 : index
    %941 = vector.load %arg12[%c2_489, %c4_490, %c4_491] : memref<4x20x20xf32, #tpu.memory_space<vmem>>, vector<1x16x16xf32>
    %942 = vector.shape_cast %941 : vector<1x16x16xf32> to vector<16x16xf32>
    %943 = arith.mulf %931, %942 : vector<16x16xf32>
    %944 = arith.addf %925, %943 : vector<16x16xf32>
    %c3_492 = arith.constant 3 : index
    %c4_493 = arith.constant 4 : index
    %c4_494 = arith.constant 4 : index
    %945 = vector.load %arg12[%c3_492, %c4_493, %c4_494] : memref<4x20x20xf32, #tpu.memory_space<vmem>>, vector<1x16x16xf32>
    %946 = vector.shape_cast %945 : vector<1x16x16xf32> to vector<16x16xf32>
    %947 = arith.mulf %931, %946 : vector<16x16xf32>
    %948 = arith.addf %929, %947 : vector<16x16xf32>
    %949 = tpu.reciprocal %932 : vector<16x16xf32> -> vector<16x16xf32>
    %950 = arith.mulf %936, %949 : vector<16x16xf32>
    %951 = arith.addf %111, %950 : vector<16x16xf32>
    %c0_495 = arith.constant 0 : index
    %c0_496 = arith.constant 0 : index
    %c0_497 = arith.constant 0 : index
    %c0_498 = arith.constant 0 : index
    %952 = vector.load %arg9[%c0_495, %c0_496, %c0_497, %c0_498] : memref<1x4x16x16xf32, #tpu.memory_space<vmem>>, vector<1x1x16x16xf32>
    %953 = vector.shape_cast %952 : vector<1x1x16x16xf32> to vector<16x16xf32>
    %954 = vector.shape_cast %951 : vector<16x16xf32> to vector<1x1x16x16xf32>
    tpu.vector_store %arg9[%c0_495, %c0_496, %c0_497, %c0_498], %954 {strides = array<i32>} : memref<1x4x16x16xf32, #tpu.memory_space<vmem>>, vector<1x1x16x16xf32>,
    %955 = arith.mulf %940, %949 : vector<16x16xf32>
    %956 = arith.addf %267, %955 : vector<16x16xf32>
    %c0_499 = arith.constant 0 : index
    %c1_500 = arith.constant 1 : index
    %c0_501 = arith.constant 0 : index
    %c0_502 = arith.constant 0 : index
    %957 = vector.load %arg9[%c0_499, %c1_500, %c0_501, %c0_502] : memref<1x4x16x16xf32, #tpu.memory_space<vmem>>, vector<1x1x16x16xf32>
    %958 = vector.shape_cast %957 : vector<1x1x16x16xf32> to vector<16x16xf32>
    %959 = vector.shape_cast %956 : vector<16x16xf32> to vector<1x1x16x16xf32>
    tpu.vector_store %arg9[%c0_499, %c1_500, %c0_501, %c0_502], %959 {strides = array<i32>} : memref<1x4x16x16xf32, #tpu.memory_space<vmem>>, vector<1x1x16x16xf32>,
    %960 = arith.mulf %944, %949 : vector<16x16xf32>
    %961 = arith.addf %423, %960 : vector<16x16xf32>
    %c0_503 = arith.constant 0 : index
    %c2_504 = arith.constant 2 : index
    %c0_505 = arith.constant 0 : index
    %c0_506 = arith.constant 0 : index
    %962 = vector.load %arg9[%c0_503, %c2_504, %c0_505, %c0_506] : memref<1x4x16x16xf32, #tpu.memory_space<vmem>>, vector<1x1x16x16xf32>
    %963 = vector.shape_cast %962 : vector<1x1x16x16xf32> to vector<16x16xf32>
    %964 = vector.shape_cast %961 : vector<16x16xf32> to vector<1x1x16x16xf32>
    tpu.vector_store %arg9[%c0_503, %c2_504, %c0_505, %c0_506], %964 {strides = array<i32>} : memref<1x4x16x16xf32, #tpu.memory_space<vmem>>, vector<1x1x16x16xf32>,
    %965 = arith.mulf %948, %949 : vector<16x16xf32>
    %966 = arith.addf %579, %965 : vector<16x16xf32>
    %c0_507 = arith.constant 0 : index
    %c3_508 = arith.constant 3 : index
    %c0_509 = arith.constant 0 : index
    %c0_510 = arith.constant 0 : index
    %967 = vector.load %arg9[%c0_507, %c3_508, %c0_509, %c0_510] : memref<1x4x16x16xf32, #tpu.memory_space<vmem>>, vector<1x1x16x16xf32>
    %968 = vector.shape_cast %967 : vector<1x1x16x16xf32> to vector<16x16xf32>
    %969 = vector.shape_cast %966 : vector<16x16xf32> to vector<1x1x16x16xf32>
    tpu.vector_store %arg9[%c0_507, %c3_508, %c0_509, %c0_510], %969 {strides = array<i32>} : memref<1x4x16x16xf32, #tpu.memory_space<vmem>>, vector<1x1x16x16xf32>,
    return
  }
  func.func @transform_0(%arg0: i32) -> (i32, i32, i32, i32) {
    %c0_i32 = arith.constant 0 : i32
    %c0_i32_0 = arith.constant 0 : i32
    %c0_i32_1 = arith.constant 0 : i32
    %c0_i32_2 = arith.constant 0 : i32
    return %arg0, %c0_i32, %c0_i32_0, %c0_i32_1 : i32, i32, i32, i32
  }
  func.func @transform_1(%arg0: i32) -> (i32, i32, i32, i32) {
    %c0_i32 = arith.constant 0 : i32
    %c0_i32_0 = arith.constant 0 : i32
    %c0_i32_1 = arith.constant 0 : i32
    %c0_i32_2 = arith.constant 0 : i32
    return %arg0, %c0_i32, %c0_i32_0, %c0_i32_1 : i32, i32, i32, i32
  }
  func.func @transform_2(%arg0: i32) -> (i32, i32) {
    %c0_i32 = arith.constant 0 : i32
    %c0_i32_0 = arith.constant 0 : i32
    %c0_i32_1 = arith.constant 0 : i32
    return %c0_i32, %c0_i32_0 : i32, i32
  }
  func.func @transform_3(%arg0: i32) -> (i32, i32) {
    %c0_i32 = arith.constant 0 : i32
    %c0_i32_0 = arith.constant 0 : i32
    %c0_i32_1 = arith.constant 0 : i32
    return %c0_i32, %c0_i32_0 : i32, i32
  }
  func.func @transform_4(%arg0: i32) -> (i32, i32) {
    %c0_i32 = arith.constant 0 : i32
    %c0_i32_0 = arith.constant 0 : i32
    %c0_i32_1 = arith.constant 0 : i32
    return %c0_i32, %c0_i32_0 : i32, i32
  }
  func.func @transform_5(%arg0: i32) -> (i32, i32) {
    %c0_i32 = arith.constant 0 : i32
    %c0_i32_0 = arith.constant 0 : i32
    %c0_i32_1 = arith.constant 0 : i32
    return %c0_i32, %c0_i32_0 : i32, i32
  }
  func.func @transform_6(%arg0: i32) -> i32 {
    %c0_i32 = arith.constant 0 : i32
    %c0_i32_0 = arith.constant 0 : i32
    return %c0_i32 : i32
  }
  func.func @transform_7(%arg0: i32) -> i32 {
    %c0_i32 = arith.constant 0 : i32
    %c0_i32_0 = arith.constant 0 : i32
    return %c0_i32 : i32
  }
  func.func @transform_8(%arg0: i32) -> (i32, i32, i32, i32) {
    %c0_i32 = arith.constant 0 : i32
    %c0_i32_0 = arith.constant 0 : i32
    %c0_i32_1 = arith.constant 0 : i32
    %c0_i32_2 = arith.constant 0 : i32
    return %arg0, %c0_i32, %c0_i32_0, %c0_i32_1 : i32, i32, i32, i32
  }
}

</mosaic_0001>

<llo_original>
// kernel: a_call__.1
$region0: #{a_call__.1}
  #allocation0 [shape = 'u32[]', space=smem, size = 0x4, offset = 0x4, fixed_abs, tag = 'smem constant byte address 0x4 - core index']
  #allocation1 [shape = 'u32[144,128]{1,0:T(1,128)}', space=vmem, size = 0x12000, scoped, tag = 'internal scratch']
  #allocation2 [shape = 'f32[18,18]{1,0:T(8,128)}', space=vmem, size = 0x3000, scoped, tag = 'scratch operand']
  #allocation3 [shape = 'f32[4,20,20]{2,1,0:T(8,128)}', space=vmem, size = 0xc000, scoped, tag = 'scratch operand']
  #allocation4 [shape = 'f32[4,20,20]{2,1,0:T(8,128)}', space=vmem, size = 0xc000, scoped, tag = 'scratch operand']
  %s0 = inlined_call_operand.vmem [shape: f32[2,4,16,16], index: 0, kind: input, shape index: {}]
  %s1 = inlined_call_operand.vmem [shape: f32[2,4,8,8], index: 1, kind: input, shape index: {}]
  %s2 = inlined_call_operand.vmem [shape: f32[16,8], index: 2, kind: input, shape index: {}]
  %s3 = inlined_call_operand.vmem [shape: f32[8,16], index: 3, kind: input, shape index: {}]
  %s4 = inlined_call_operand.vmem [shape: f32[20,16], index: 4, kind: input, shape index: {}]
  %s5 = inlined_call_operand.vmem [shape: f32[16,20], index: 5, kind: input, shape index: {}]
  %s6 = inlined_call_operand.vmem [shape: f32[108], index: 6, kind: input, shape index: {}]
  %s7 = inlined_call_operand.vmem [shape: f32[12], index: 7, kind: input, shape index: {}]
  %s8 = inlined_call_operand.hbm [shape: f32[2,4,16,16], index: 8, kind: output, shape index: {}]
  %s9 = sld [smem:[#allocation0]]
  $region73: #{a_call__.1} parent=0
    _
  %s11 = ssub.s32 1, %s9
  %s12 = scalar_select 0, %s11, %s9
  $region1: #{a_call__.1} parent=0
    #allocation5 [shape = 'u8[512]{0}', space=smem, size = 0x200, scoped, tag = 'input window, operand 6, single buffered']
    #allocation6 [shape = 's32[2]{0}', space=sflag, size = 0x8, scoped, tag = 'scoped memory for a_call__.1']
    #allocation7 [shape = 's32[2]{0}', space=sflag, size = 0x8, scoped, tag = 'scoped memory for a_call__.1']
    #allocation8 [shape = 'u8[512]{0}', space=smem, size = 0x200, scoped, tag = 'input window, operand 7, single buffered']
    #allocation9 [shape = 's32[1]{0}', space=sflag, size = 0x4, scoped, tag = 'scoped memory for a_call__.1']
    #allocation10 [shape = 'u8[65536]{0}', space=vmem, size = 0x10000, scoped, tag = 'output window, operand 0']
    %13 = vsyncpa [#allocation7], 0
    %14 = vsyncpa [#allocation9], 0
    %15 = vsyncpa [#allocation6], 0
    %s16 = scalar_lea.sflag [#allocation6], 1
    %17 = vsyncpa %s16, 0
    loop: start=0, step=1, limit=4
    $region2: #{a_call__.1} parent=1 // loop_pre_header
      _
    $region3: #{a_call__.1} parent=1 // loop_header
      %s19 = sphi 0, %s23
      %p20 = scmp.ge.s32.totalorder %s19, 4
      %s29 = sphi 0, %s31
      %s32 = sphi 0, %s29
      %s33 = sphi 0, %s32
      %s49 = sphi 0, %s33
      %s55 = sphi 0, %s57
      %s58 = sphi 0, %s55
      %s59 = sphi 0, %s58
      %s75 = sphi 0, %s59
      %s79 = sphi 0, %s79
      %s81 = sphi 0, %s79
      %s82 = sphi 0, %s81
      %s96 = sphi 0, %s82
      %s100 = sphi 0, %s100
      %s102 = sphi 0, %s100
      %s103 = sphi 0, %s102
      %s117 = sphi 0, %s103
      %s121 = sphi 0, %s121
      %s123 = sphi 0, %s121
      %s124 = sphi 0, %s123
      %s138 = sphi 0, %s124
      %s142 = sphi 0, %s142
      %s144 = sphi 0, %s142
      %s145 = sphi 0, %s144
      %s159 = sphi 0, %s145
      %s163 = sphi 0, %s163
      %s165 = sphi 0, %s163
      %s166 = sphi 0, %s165
      %s180 = sphi 0, %s166
      %s184 = sphi 0, %s184
      %s186 = sphi 0, %s184
      %s187 = sphi 0, %s186
      %s201 = sphi 0, %s187
      %s207 = sphi 0, %s209
      %s210 = sphi 0, %s207
      %s211 = sphi 0, %s210
      %s227 = sphi 0, %s211
    $region4: #{a_call__.1} parent=1 // loop_header_branch
      %22 = sbr.rel (%p20) target = $region8
    $region5: #{a_call__.1} parent=1 // loop_body
      %s24 = ssub.s32 %s19, 1
      %s25 = ssub.s32 %s19, 2
      %s26 = sadd.s32 %s19, 1
      %s27 = ssub.s32 %s19, %s26
      %p28 = scmp.eq.s32.totalorder %s27, 0
      %s30 = sadd.s32 %s29, 1
      %s31 = scalar_select %p28, %s29, %s30
      %p34 = pneg %p28
      %p35 = scmp.eq.s32.totalorder %s19, 1
      %p36 = por %p34, %p35
      %p37 = scmp.ne.s32.totalorder %s29, %s32
      %p38 = scmp.eq.s32.totalorder %s19, 0
      %p39 = por %p37, %p38
      %p40 = scmp.ne.s32.totalorder %s29, %s32
      %p41 = scmp.eq.s32.totalorder %s24, 1
      %p42 = por %p40, %p41
      %p43 = scmp.ne.s32.totalorder %s32, %s33
      %p44 = scmp.eq.s32.totalorder %s24, 0
      %p45 = por %p43, %p44
      %p46 = scmp.ne.s32.totalorder %s32, %s33
      %p47 = scmp.eq.s32.totalorder %s25, 1
      %p48 = por %p46, %p47
      %p50 = scmp.ne.s32.totalorder %s33, %s49
      %p51 = scmp.eq.s32.totalorder %s25, 0
      %p52 = por %p50, %p51
      %s53 = ssub.s32 %s19, %s26
      %p54 = scmp.eq.s32.totalorder %s53, 0
      %s56 = sadd.s32 %s55, 1
      %s57 = scalar_select %p54, %s55, %s56
      %p60 = pneg %p54
      %p61 = scmp.eq.s32.totalorder %s19, 1
      %p62 = por %p60, %p61
      %p63 = scmp.ne.s32.totalorder %s55, %s58
      %p64 = scmp.eq.s32.totalorder %s19, 0
      %p65 = por %p63, %p64
      %p66 = scmp.ne.s32.totalorder %s55, %s58
      %p67 = scmp.eq.s32.totalorder %s24, 1
      %p68 = por %p66, %p67
      %p69 = scmp.ne.s32.totalorder %s58, %s59
      %p70 = scmp.eq.s32.totalorder %s24, 0
      %p71 = por %p69, %p70
      %p72 = scmp.ne.s32.totalorder %s58, %s59
      %p73 = scmp.eq.s32.totalorder %s25, 1
      %p74 = por %p72, %p73
      %p76 = scmp.ne.s32.totalorder %s59, %s75
      %p77 = scmp.eq.s32.totalorder %s25, 0
      %p78 = por %p76, %p77
      %s80 = sadd.s32 %s79, 1
      %p83 = scmp.eq.s32.totalorder %s19, 1
      %p84 = scmp.ne.s32.totalorder %s79, %s81
      %p85 = scmp.eq.s32.totalorder %s19, 0
      %p86 = por %p84, %p85
      %p87 = scmp.ne.s32.totalorder %s79, %s81
      %p88 = scmp.eq.s32.totalorder %s24, 1
      %p89 = por %p87, %p88
      %p90 = scmp.ne.s32.totalorder %s81, %s82
      %p91 = scmp.eq.s32.totalorder %s24, 0
      %p92 = por %p90, %p91
      %p93 = scmp.ne.s32.totalorder %s81, %s82
      %p94 = scmp.eq.s32.totalorder %s25, 1
      %p95 = por %p93, %p94
      %p97 = scmp.ne.s32.totalorder %s82, %s96
      %p98 = scmp.eq.s32.totalorder %s25, 0
      %p99 = por %p97, %p98
      %s101 = sadd.s32 %s100, 1
      %p104 = scmp.eq.s32.totalorder %s19, 1
      %p105 = scmp.ne.s32.totalorder %s100, %s102
      %p106 = scmp.eq.s32.totalorder %s19, 0
      %p107 = por %p105, %p106
      %p108 = scmp.ne.s32.totalorder %s100, %s102
      %p109 = scmp.eq.s32.totalorder %s24, 1
      %p110 = por %p108, %p109
      %p111 = scmp.ne.s32.totalorder %s102, %s103
      %p112 = scmp.eq.s32.totalorder %s24, 0
      %p113 = por %p111, %p112
      %p114 = scmp.ne.s32.totalorder %s102, %s103
      %p115 = scmp.eq.s32.totalorder %s25, 1
      %p116 = por %p114, %p115
      %p118 = scmp.ne.s32.totalorder %s103, %s117
      %p119 = scmp.eq.s32.totalorder %s25, 0
      %p120 = por %p118, %p119
      %s122 = sadd.s32 %s121, 1
      %p125 = scmp.eq.s32.totalorder %s19, 1
      %p126 = scmp.ne.s32.totalorder %s121, %s123
      %p127 = scmp.eq.s32.totalorder %s19, 0
      %p128 = por %p126, %p127
      %p129 = scmp.ne.s32.totalorder %s121, %s123
      %p130 = scmp.eq.s32.totalorder %s24, 1
      %p131 = por %p129, %p130
      %p132 = scmp.ne.s32.totalorder %s123, %s124
      %p133 = scmp.eq.s32.totalorder %s24, 0
      %p134 = por %p132, %p133
      %p135 = scmp.ne.s32.totalorder %s123, %s124
      %p136 = scmp.eq.s32.totalorder %s25, 1
      %p137 = por %p135, %p136
      %p139 = scmp.ne.s32.totalorder %s124, %s138
      %p140 = scmp.eq.s32.totalorder %s25, 0
      %p141 = por %p139, %p140
      %s143 = sadd.s32 %s142, 1
      %p146 = scmp.eq.s32.totalorder %s19, 1
      %p147 = scmp.ne.s32.totalorder %s142, %s144
      %p148 = scmp.eq.s32.totalorder %s19, 0
      %p149 = por %p147, %p148
      %p150 = scmp.ne.s32.totalorder %s142, %s144
      %p151 = scmp.eq.s32.totalorder %s24, 1
      %p152 = por %p150, %p151
      %p153 = scmp.ne.s32.totalorder %s144, %s145
      %p154 = scmp.eq.s32.totalorder %s24, 0
      %p155 = por %p153, %p154
      %p156 = scmp.ne.s32.totalorder %s144, %s145
      %p157 = scmp.eq.s32.totalorder %s25, 1
      %p158 = por %p156, %p157
      %p160 = scmp.ne.s32.totalorder %s145, %s159
      %p161 = scmp.eq.s32.totalorder %s25, 0
      %p162 = por %p160, %p161
      %s164 = sadd.s32 %s163, 1
      %p167 = scmp.eq.s32.totalorder %s19, 1
      %p168 = scmp.ne.s32.totalorder %s163, %s165
      %p169 = scmp.eq.s32.totalorder %s19, 0
      %p170 = por %p168, %p169
      %p171 = scmp.ne.s32.totalorder %s163, %s165
      %p172 = scmp.eq.s32.totalorder %s24, 1
      %p173 = por %p171, %p172
      %p174 = scmp.ne.s32.totalorder %s165, %s166
      %p175 = scmp.eq.s32.totalorder %s24, 0
      %p176 = por %p174, %p175
      %p177 = scmp.ne.s32.totalorder %s165, %s166
      %p178 = scmp.eq.s32.totalorder %s25, 1
      %p179 = por %p177, %p178
      %p181 = scmp.ne.s32.totalorder %s166, %s180
      %p182 = scmp.eq.s32.totalorder %s25, 0
      %p183 = por %p181, %p182
      %s185 = sadd.s32 %s184, 1
      %p188 = scmp.eq.s32.totalorder %s19, 1
      %p189 = scmp.ne.s32.totalorder %s184, %s186
      %p190 = scmp.eq.s32.totalorder %s19, 0
      %p191 = por %p189, %p190
      %p192 = scmp.ne.s32.totalorder %s184, %s186
      %p193 = scmp.eq.s32.totalorder %s24, 1
      %p194 = por %p192, %p193
      %p195 = scmp.ne.s32.totalorder %s186, %s187
      %p196 = scmp.eq.s32.totalorder %s24, 0
      %p197 = por %p195, %p196
      %p198 = scmp.ne.s32.totalorder %s186, %s187
      %p199 = scmp.eq.s32.totalorder %s25, 1
      %p200 = por %p198, %p199
      %p202 = scmp.ne.s32.totalorder %s187, %s201
      %p203 = scmp.eq.s32.totalorder %s25, 0
      %p204 = por %p202, %p203
      %s205 = ssub.s32 %s19, %s26
      %p206 = scmp.eq.s32.totalorder %s205, 0
      %s208 = sadd.s32 %s207, 1
      %s209 = scalar_select %p206, %s207, %s208
      %p212 = pneg %p206
      %p213 = scmp.eq.s32.totalorder %s19, 1
      %p214 = por %p212, %p213
      %p215 = scmp.ne.s32.totalorder %s207, %s210
      %p216 = scmp.eq.s32.totalorder %s19, 0
      %p217 = por %p215, %p216
      %p218 = scmp.ne.s32.totalorder %s207, %s210
      %p219 = scmp.eq.s32.totalorder %s24, 1
      %p220 = por %p218, %p219
      %p221 = scmp.ne.s32.totalorder %s210, %s211
      %p222 = scmp.eq.s32.totalorder %s24, 0
      %p223 = por %p221, %p222
      %p224 = scmp.ne.s32.totalorder %s210, %s211
      %p225 = scmp.eq.s32.totalorder %s25, 1
      %p226 = por %p224, %p225
      %p228 = scmp.ne.s32.totalorder %s211, %s227
      %p229 = scmp.eq.s32.totalorder %s25, 0
      %p230 = por %p228, %p229
      %p231 = scmp.le.s32.totalorder 1, %s19
      %p232 = scmp.lt.s32.totalorder %s19, 3
      %p233 = pnand %p231, %p232
      %p234 = pneg %p233
      // Predicated region
      $region9: #{a_call__.1} parent=5 // pred_check
        _
      $region10: #{a_call__.1} parent=5 // pred_check_branch
        %236 = sbr.rel (%p233) target = $region12
      $region11: #{a_call__.1} parent=5 // pred_region
        %s237 = ssub.s32 %s19, 1
        // Predicated region
        $region13: #{a_call__.1} parent=11 // pred_check
          %p238 = pneg %p92
        $region14: #{a_call__.1} parent=11 // pred_check_branch
          %240 = sbr.rel (%p238) target = $region16
        $region15: #{a_call__.1} parent=11 // pred_region
          _
        $region16: #{a_call__.1} parent=11 // pred_fallthru
          _
        // Predicated region
        $region17: #{a_call__.1} parent=11 // pred_check
          %p241 = pneg %p113
        $region18: #{a_call__.1} parent=11 // pred_check_branch
          %243 = sbr.rel (%p241) target = $region20
        $region19: #{a_call__.1} parent=11 // pred_region
          _
        $region20: #{a_call__.1} parent=11 // pred_fallthru
          _
        // Predicated region
        $region21: #{a_call__.1} parent=11 // pred_check
          %p244 = pneg %p134
        $region22: #{a_call__.1} parent=11 // pred_check_branch
          %246 = sbr.rel (%p244) target = $region24
        $region23: #{a_call__.1} parent=11 // pred_region
          _
        $region24: #{a_call__.1} parent=11 // pred_fallthru
          _
        // Predicated region
        $region25: #{a_call__.1} parent=11 // pred_check
          %p247 = pneg %p155
        $region26: #{a_call__.1} parent=11 // pred_check_branch
          %249 = sbr.rel (%p247) target = $region28
        $region27: #{a_call__.1} parent=11 // pred_region
          _
        $region28: #{a_call__.1} parent=11 // pred_fallthru
          _
        // Predicated region
        $region29: #{a_call__.1} parent=11 // pred_check
          %p250 = pneg %p176
        $region30: #{a_call__.1} parent=11 // pred_check_branch
          %252 = sbr.rel (%p250) target = $region32
        $region31: #{a_call__.1} parent=11 // pred_region
          %s254 = ssub.s32 16, 16
          %255 = vsyncadd [#allocation7], %s254
          %s257 = sshll.u32 %s6, 4
          %s258 = int_to_ptr.vmem [resolvable:$true] %s257
          %260 = dma.vmem_to_smem %s258, 16, [#allocation5], [#allocation7]
        $region32: #{a_call__.1} parent=11 // pred_fallthru
          _
        // Predicated region
        $region33: #{a_call__.1} parent=11 // pred_check
          %p261 = pneg %p197
        $region34: #{a_call__.1} parent=11 // pred_check_branch
          %263 = sbr.rel (%p261) target = $region36
        $region35: #{a_call__.1} parent=11 // pred_region
          %s265 = ssub.s32 16, 16
          %266 = vsyncadd [#allocation9], %s265
          %s268 = sshll.u32 %s7, 4
          %s269 = int_to_ptr.vmem [resolvable:$true] %s268
          %271 = dma.vmem_to_smem %s269, 16, [#allocation8], [#allocation9]
        $region36: #{a_call__.1} parent=11 // pred_fallthru
          _
      $region12: #{a_call__.1} parent=5 // pred_fallthru
        _
      %p272 = scmp.lt.s32.totalorder %s19, 2
      // Predicated region
      $region37: #{a_call__.1} parent=5 // pred_check
        %p273 = pneg %p272
      $region38: #{a_call__.1} parent=5 // pred_check_branch
        %275 = sbr.rel (%p273) target = $region40
      $region39: #{a_call__.1} parent=5 // pred_region
        // Predicated region
        $region41: #{a_call__.1} parent=39 // pred_check
          %p276 = pneg %p39
        $region42: #{a_call__.1} parent=39 // pred_check_branch
          %278 = sbr.rel (%p276) target = $region44
        $region43: #{a_call__.1} parent=39 // pred_region
          %p279 = scmp.lt.s32.totalorder %s19, 1
          %s280 = scalar_select %p279, %s19, 1
          %s281 = smul.addr %s280, 8
          %s282 = smul.addr %s281, 8
          %s283 = scalar_lea.vmem %s0, %s282
        $region44: #{a_call__.1} parent=39 // pred_fallthru
          _
        // Predicated region
        $region45: #{a_call__.1} parent=39 // pred_check
          %p284 = pneg %p65
        $region46: #{a_call__.1} parent=39 // pred_check_branch
          %286 = sbr.rel (%p284) target = $region48
        $region47: #{a_call__.1} parent=39 // pred_region
          %p287 = scmp.lt.s32.totalorder %s19, 1
          %s288 = scalar_select %p287, %s19, 1
          %s289 = smul.addr %s288, 4
          %s290 = smul.addr %s289, 8
          %s291 = scalar_lea.vmem %s1, %s290
        $region48: #{a_call__.1} parent=39 // pred_fallthru
          _
      $region40: #{a_call__.1} parent=5 // pred_fallthru
        _
      %p292 = scmp.le.s32.totalorder 1, %s19
      %p293 = scmp.lt.s32.totalorder %s19, 3
      %p294 = pnand %p292, %p293
      %p295 = pneg %p294
      // Predicated region
      $region49: #{a_call__.1} parent=5 // pred_check
        _
      $region50: #{a_call__.1} parent=5 // pred_check_branch
        %297 = sbr.rel (%p294) target = $region52
      $region51: #{a_call__.1} parent=5 // pred_region
        %s298 = ssub.s32 %s19, 1
        // Predicated region
        $region53: #{a_call__.1} parent=51 // pred_check
          %p299 = pneg %p176
        $region54: #{a_call__.1} parent=51 // pred_check_branch
          %301 = sbr.rel (%p299) target = $region56
        $region55: #{a_call__.1} parent=51 // pred_region
          %302 = dma.done [#allocation7], 16
        $region56: #{a_call__.1} parent=51 // pred_fallthru
          _
        // Predicated region
        $region57: #{a_call__.1} parent=51 // pred_check
          %p303 = pneg %p197
        $region58: #{a_call__.1} parent=51 // pred_check_branch
          %305 = sbr.rel (%p303) target = $region60
        $region59: #{a_call__.1} parent=51 // pred_region
          %306 = dma.done [#allocation9], 16
        $region60: #{a_call__.1} parent=51 // pred_fallthru
          _
        %307 = sfence
        %p308 = scmp.lt.s32.totalorder %s24, 1
        %s309 = scalar_select %p308, %s24, 1
        %s310 = smul.addr %s309, 8
        %s311 = smul.addr %s310, 8
        %s312 = scalar_lea.vmem %s0, %s311
        %p313 = pneg %p45
        %p314 = pneg %p42
        %p315 = scmp.lt.s32.totalorder %s24, 1
        %s316 = scalar_select %p315, %s24, 1
        %s317 = smul.addr %s316, 4
        %s318 = smul.addr %s317, 8
        %s319 = scalar_lea.vmem %s1, %s318
        %p320 = pneg %p71
        %p321 = pneg %p68
        %p322 = pneg %p92
        %p323 = pneg %p89
        %p324 = pneg %p113
        %p325 = pneg %p110
        %p326 = pneg %p134
        %p327 = pneg %p131
        %p328 = pneg %p155
        %p329 = pneg %p152
        %p330 = pneg %p176
        %p331 = pneg %p173
        %p332 = pneg %p197
        %p333 = pneg %p194
        %p334 = pneg %p223
        %p335 = pneg %p220
        %s336 = sand.u32 %s210, 1
        %s337 = scalar_lea.sflag [#allocation6], %s336
        %s338 = sand.u32 %s210, 1
        %s339 = smul.addr %s338, 64
        %s340 = scalar_lea.vmem [#allocation10], %s339
        %p341 = scmp.lt.s32.totalorder %s24, 1
        %s342 = scalar_select %p341, %s24, 1
        %s343 = smul.addr %s342, 8
        %s344 = smul.addr %s343, 8
        %s345 = scalar_lea.vmem %s0, %s344
        %p346 = scmp.lt.s32.totalorder %s24, 1
        %s347 = scalar_select %p346, %s24, 1
        %s348 = smul.addr %s347, 4
        %s349 = smul.addr %s348, 8
        %s350 = scalar_lea.vmem %s1, %s349
        %v351 = vld [vmem:[%s2] sm:$0xff]
        %v352 = vld [vmem:[%s2 + $0x8] sm:$0xff]
        %v353 = vld [vmem:[%s3] sm:$0xff]
        %v354 = vld [vmem:[%s4] sm:$0xff]
        %v355 = vld [vmem:[%s4 + $0x8] sm:$0xff]
        %v356 = vld [vmem:[%s4 + $0x10] sm:$0xf]
        %v357 = vld [vmem:[%s5] sm:$0xff]
        %v358 = vld [vmem:[%s5 + $0x8] sm:$0xff]
        %vm359 = vcmask 146432
        %360 = vst.msk [vmem:[#allocation2] sm:$0xff] %vm359, 0.0
        %361 = vst.msk [vmem:[#allocation2 + $0x8] sm:$0xff] %vm359, 0.0
        %vm362 = vcmask 140288
        %363 = vst.msk [vmem:[#allocation2 + $0x10] sm:$0x3] %vm362, 0.0
        %v364 = vld [vmem:[%s345] sm:$0xff]
        %v365 = vld [vmem:[%s345 + $0x8] sm:$0xff]
        %368 = vrot.lane.b32.xlu0 %v364, 1
        %v369 = vpop.permute.xlu0 %368
        %370 = vrot.lane.b32.xlu0 %v365, 1
        %v371 = vpop.permute.xlu0 %370
        %vm374 = vcmask 138248
        %375 = vst.msk [vmem:[#allocation2 + $0x1] sm:$0xff] %vm374, %v369
        %376 = vst.msk [vmem:[#allocation2 + $0x9] sm:$0xff] %vm374, %v371
        %v377 = vld [vmem:[#allocation2] sm:$0xff]
        %v378 = vld [vmem:[#allocation2 + $0x8] sm:$0xff]
        %s379 = sld [smem:[#allocation5 + $0x24]]
        %v380 = vstv %s379
        %v381 = vmul.f32 %v380, %v377
        %v382 = vmul.f32 %v380, %v378
        %v383 = vadd.f32 %v381, 0.0
        %v384 = vadd.f32 %v382, 0.0
        %s385 = sld [smem:[#allocation5 + $0x48]]
        %v386 = vstv %s385
        %v387 = vmul.f32 %v386, %v377
        %v388 = vmul.f32 %v386, %v378
        %v389 = vadd.f32 %v387, 0.0
        %v390 = vadd.f32 %v388, 0.0
        %s391 = sld [smem:[#allocation5 + $0x25]]
        %v392 = vstv %s391
        %v393 = vmul.f32 %v392, %v377
        %v394 = vmul.f32 %v392, %v378
        %397 = vrot.lane.b32.xlu0 %v393, 127
        %v398 = vpop.permute.xlu0 %397
        %399 = vrot.lane.b32.xlu0 %v394, 127
        %v400 = vpop.permute.xlu0 %399
        %v403 = vadd.f32 %v383, %v398
        %v404 = vadd.f32 %v384, %v400
        %s405 = sld [smem:[#allocation5 + $0x49]]
        %v406 = vstv %s405
        %v407 = vmul.f32 %v406, %v377
        %v408 = vmul.f32 %v406, %v378
        %411 = vrot.lane.b32.xlu0 %v407, 127
        %v412 = vpop.permute.xlu0 %411
        %413 = vrot.lane.b32.xlu0 %v408, 127
        %v414 = vpop.permute.xlu0 %413
        %v417 = vadd.f32 %v389, %v412
        %v418 = vadd.f32 %v390, %v414
        %s419 = sld [smem:[#allocation5 + $0x26]]
        %v420 = vstv %s419
        %v421 = vmul.f32 %v420, %v377
        %v422 = vmul.f32 %v420, %v378
        %425 = vrot.lane.b32.xlu0 %v421, 126
        %v426 = vpop.permute.xlu0 %425
        %427 = vrot.lane.b32.xlu0 %v422, 126
        %v428 = vpop.permute.xlu0 %427
        %v431 = vadd.f32 %v403, %v426
        %v432 = vadd.f32 %v404, %v428
        %s433 = sld [smem:[#allocation5 + $0x4a]]
        %v434 = vstv %s433
        %v435 = vmul.f32 %v434, %v377
        %v436 = vmul.f32 %v434, %v378
        %439 = vrot.lane.b32.xlu0 %v435, 126
        %v440 = vpop.permute.xlu0 %439
        %441 = vrot.lane.b32.xlu0 %v436, 126
        %v442 = vpop.permute.xlu0 %441
        %v445 = vadd.f32 %v417, %v440
        %v446 = vadd.f32 %v418, %v442
        %v447 = vld [vmem:[#allocation2 + $0x1] sm:$0xff]
        %v448 = vld [vmem:[#allocation2 + $0x9] sm:$0xff]
        %s449 = sld [smem:[#allocation5 + $0x27]]
        %v450 = vstv %s449
        %v451 = vmul.f32 %v450, %v447
        %v452 = vmul.f32 %v450, %v448
        %v453 = vadd.f32 %v431, %v451
        %v454 = vadd.f32 %v432, %v452
        %s455 = sld [smem:[#allocation5 + $0x4b]]
        %v456 = vstv %s455
        %v457 = vmul.f32 %v456, %v447
        %v458 = vmul.f32 %v456, %v448
        %v459 = vadd.f32 %v445, %v457
        %v460 = vadd.f32 %v446, %v458
        %s461 = sld [smem:[#allocation5 + $0x28]]
        %v462 = vstv %s461
        %v463 = vmul.f32 %v462, %v447
        %v464 = vmul.f32 %v462, %v448
        %467 = vrot.lane.b32.xlu0 %v463, 127
        %v468 = vpop.permute.xlu0 %467
        %469 = vrot.lane.b32.xlu0 %v464, 127
        %v470 = vpop.permute.xlu0 %469
        %v473 = vadd.f32 %v453, %v468
        %v474 = vadd.f32 %v454, %v470
        %s475 = sld [smem:[#allocation5 + $0x4c]]
        %v476 = vstv %s475
        %v477 = vmul.f32 %v476, %v447
        %v478 = vmul.f32 %v476, %v448
        %481 = vrot.lane.b32.xlu0 %v477, 127
        %v482 = vpop.permute.xlu0 %481
        %483 = vrot.lane.b32.xlu0 %v478, 127
        %v484 = vpop.permute.xlu0 %483
        %v487 = vadd.f32 %v459, %v482
        %v488 = vadd.f32 %v460, %v484
        %s489 = sld [smem:[#allocation5 + $0x29]]
        %v490 = vstv %s489
        %v491 = vmul.f32 %v490, %v447
        %v492 = vmul.f32 %v490, %v448
        %495 = vrot.lane.b32.xlu0 %v491, 126
        %v496 = vpop.permute.xlu0 %495
        %497 = vrot.lane.b32.xlu0 %v492, 126
        %v498 = vpop.permute.xlu0 %497
        %v501 = vadd.f32 %v473, %v496
        %v502 = vadd.f32 %v474, %v498
        %s503 = sld [smem:[#allocation5 + $0x4d]]
        %v504 = vstv %s503
        %v505 = vmul.f32 %v504, %v447
        %v506 = vmul.f32 %v504, %v448
        %509 = vrot.lane.b32.xlu0 %v505, 126
        %v510 = vpop.permute.xlu0 %509
        %511 = vrot.lane.b32.xlu0 %v506, 126
        %v512 = vpop.permute.xlu0 %511
        %v515 = vadd.f32 %v487, %v510
        %v516 = vadd.f32 %v488, %v512
        %v517 = vld [vmem:[#allocation2 + $0x2] sm:$0xff]
        %v518 = vld [vmem:[#allocation2 + $0xa] sm:$0xff]
        %s519 = sld [smem:[#allocation5 + $0x2a]]
        %v520 = vstv %s519
        %v521 = vmul.f32 %v520, %v517
        %v522 = vmul.f32 %v520, %v518
        %v523 = vadd.f32 %v501, %v521
        %v524 = vadd.f32 %v502, %v522
        %s525 = sld [smem:[#allocation5 + $0x4e]]
        %v526 = vstv %s525
        %v527 = vmul.f32 %v526, %v517
        %v528 = vmul.f32 %v526, %v518
        %v529 = vadd.f32 %v515, %v527
        %v530 = vadd.f32 %v516, %v528
        %s531 = sld [smem:[#allocation5 + $0x2b]]
        %v532 = vstv %s531
        %v533 = vmul.f32 %v532, %v517
        %v534 = vmul.f32 %v532, %v518
        %537 = vrot.lane.b32.xlu0 %v533, 127
        %v538 = vpop.permute.xlu0 %537
        %539 = vrot.lane.b32.xlu0 %v534, 127
        %v540 = vpop.permute.xlu0 %539
        %v543 = vadd.f32 %v523, %v538
        %v544 = vadd.f32 %v524, %v540
        %s545 = sld [smem:[#allocation5 + $0x4f]]
        %v546 = vstv %s545
        %v547 = vmul.f32 %v546, %v517
        %v548 = vmul.f32 %v546, %v518
        %551 = vrot.lane.b32.xlu0 %v547, 127
        %v552 = vpop.permute.xlu0 %551
        %553 = vrot.lane.b32.xlu0 %v548, 127
        %v554 = vpop.permute.xlu0 %553
        %v557 = vadd.f32 %v529, %v552
        %v558 = vadd.f32 %v530, %v554
        %s559 = sld [smem:[#allocation5 + $0x2c]]
        %v560 = vstv %s559
        %v561 = vmul.f32 %v560, %v517
        %v562 = vmul.f32 %v560, %v518
        %565 = vrot.lane.b32.xlu0 %v561, 126
        %v566 = vpop.permute.xlu0 %565
        %567 = vrot.lane.b32.xlu0 %v562, 126
        %v568 = vpop.permute.xlu0 %567
        %v571 = vadd.f32 %v543, %v566
        %v572 = vadd.f32 %v544, %v568
        %s573 = sld [smem:[#allocation5 + $0x50]]
        %v574 = vstv %s573
        %v575 = vmul.f32 %v574, %v517
        %v576 = vmul.f32 %v574, %v518
        %579 = vrot.lane.b32.xlu0 %v575, 126
        %v580 = vpop.permute.xlu0 %579
        %581 = vrot.lane.b32.xlu0 %v576, 126
        %v582 = vpop.permute.xlu0 %581
        %v585 = vadd.f32 %v557, %v580
        %v586 = vadd.f32 %v558, %v582
        %s587 = sld [smem:[#allocation8 + $0x4]]
        %v588 = vstv %s587
        %v589 = vadd.f32 %v571, %v588
        %v590 = vadd.f32 %v572, %v588
        %s591 = sld [smem:[#allocation8 + $0x8]]
        %v592 = vstv %s591
        %v593 = vadd.f32 %v585, %v592
        %v594 = vadd.f32 %v586, %v592
        %vm595 = vcmask 130048
        %v597 = vsel %vm595, %v354, 0
        %v600 = vsel %vm595, %v355, 0
        %v603 = vsel %vm595, %v356, 0
        %605 = vmatprep.subr.mxu0 0.0
        %606 = vmatpush1.msra.mxu0 %v589
        %607 = vmatprep.subr.mxu0 0.0
        %608 = vmatpush1.msra.mxu0 %v590
        %609 = vmatprep.subr.mxu0 0.0
        %610 = vmatpush1.msra.mxu0 0.0
        %611 = vmatprep.subr.mxu0 0.0
        %612 = vmatpush1.msra.mxu0 0.0
        %613 = vmatprep.subr.mxu0 0.0
        %614 = vmatpush1.msra.mxu0 0.0
        %615 = vmatprep.subr.mxu0 0.0
        %616 = vmatpush1.msra.mxu0 0.0
        %617 = vmatprep.subr.mxu0 0.0
        %618 = vmatpush1.msra.mxu0 0.0
        %619 = vmatprep.subr.mxu0 0.0
        %620 = vmatpush1.msra.mxu0 0.0
        %621 = vmatprep.subr.mxu0 0.0
        %622 = vmatpush1.msra.mxu0 0.0
        %623 = vmatprep.subr.mxu0 0.0
        %624 = vmatpush1.msra.mxu0 0.0
        %625 = vmatprep.subr.mxu0 0.0
        %626 = vmatpush1.msra.mxu0 0.0
        %627 = vmatprep.subr.mxu0 0.0
        %628 = vmatpush1.msra.mxu0 0.0
        %629 = vmatprep.subr.mxu0 0.0
        %630 = vmatpush1.msra.mxu0 0.0
        %631 = vmatprep.subr.mxu0 0.0
        %632 = vmatpush1.msra.mxu0 0.0
        %633 = vmatprep.subr.mxu0 0.0
        %634 = vmatpush1.msra.mxu0 0.0
        %635 = vmatprep.subr.mxu0 0.0
        %636 = vmatpush1.msra.mxu0 0.0
        %637 = vmatprep.subr.mxu0 0.0
        %638 = vmatpush1.msra.mxu0 0.0
        %639 = vmatprep.subr.mxu0 0.0
        %640 = vmatpush1.msra.mxu0 0.0
        %641 = vmatprep.subr.mxu0 0.0
        %642 = vmatpush1.msra.mxu0 0.0
        %643 = vmatprep.subr.mxu0 0.0
        %644 = vmatpush1.msra.mxu0 0.0
        %645 = vmatprep.subr.mxu0 0.0
        %646 = vmatpush1.msra.mxu0 0.0
        %647 = vmatprep.subr.mxu0 0.0
        %648 = vmatpush1.msra.mxu0 0.0
        %649 = vmatprep.subr.mxu0 0.0
        %650 = vmatpush1.msra.mxu0 0.0
        %651 = vmatprep.subr.mxu0 0.0
        %652 = vmatpush1.msra.mxu0 0.0
        %653 = vmatprep.subr.mxu0 0.0
        %654 = vmatpush1.msra.mxu0 0.0
        %655 = vmatprep.subr.mxu0 0.0
        %656 = vmatpush1.msra.mxu0 0.0
        %657 = vmatprep.subr.mxu0 0.0
        %658 = vmatpush1.msra.mxu0 0.0
        %659 = vmatprep.subr.mxu0 0.0
        %660 = vmatpush1.msra.mxu0 0.0
        %661 = vmatprep.subr.mxu0 0.0
        %662 = vmatpush1.msra.mxu0 0.0
        %663 = vmatprep.subr.mxu0 0.0
        %664 = vmatpush1.msra.mxu0 0.0
        %665 = vmatprep.subr.mxu0 0.0
        %666 = vmatpush1.msra.mxu0 0.0
        %667 = vmatprep.subr.mxu0 0.0
        %668 = vmatpush1.msra.mxu0 0.0
        %669 = vmatprep.mubr.f32.mxu0 0.0
        %670 = vmatmul.mubr.f32.gmra.mrb[0].mxu0 %v597
        %v671 = vpop.f32.mrb[0].mxu0
        %v672 = vadd.f32 0.0, %v671
        %v673 = vpop.f32.mrb[0].mxu0
        %674 = vmatprep.mubr.f32.mxu0 0.0
        %675 = vmatmul.mubr.f32.gmra.mrb[0].mxu0 %v600
        %v676 = vpop.f32.mrb[0].mxu0
        %v677 = vadd.f32 0.0, %v676
        %v678 = vpop.f32.mrb[0].mxu0
        %679 = vmatprep.mubr.f32.mxu0 0.0
        %680 = vmatmul.mubr.f32.gmra.mrb[0].mxu0 %v603
        %v681 = vpop.f32.mrb[0].mxu0
        %v682 = vadd.f32 0.0, %v681
        %v683 = vpop.f32.mrb[0].mxu0
        %684 = vdwg.mxu0
        %v686 = vsel %vm595, %v672, 0
        %v689 = vsel %vm595, %v677, 0
        %v692 = vsel %vm595, %v682, 0
        %694 = vmatprep.subr.mxu0 0.0
        %695 = vmatpush1.msra.mxu0 %v357
        %696 = vmatprep.subr.mxu0 0.0
        %697 = vmatpush1.msra.mxu0 %v358
        %698 = vmatprep.subr.mxu0 0.0
        %699 = vmatpush1.msra.mxu0 0.0
        %700 = vmatprep.subr.mxu0 0.0
        %701 = vmatpush1.msra.mxu0 0.0
        %702 = vmatprep.subr.mxu0 0.0
        %703 = vmatpush1.msra.mxu0 0.0
        %704 = vmatprep.subr.mxu0 0.0
        %705 = vmatpush1.msra.mxu0 0.0
        %706 = vmatprep.subr.mxu0 0.0
        %707 = vmatpush1.msra.mxu0 0.0
        %708 = vmatprep.subr.mxu0 0.0
        %709 = vmatpush1.msra.mxu0 0.0
        %710 = vmatprep.subr.mxu0 0.0
        %711 = vmatpush1.msra.mxu0 0.0
        %712 = vmatprep.subr.mxu0 0.0
        %713 = vmatpush1.msra.mxu0 0.0
        %714 = vmatprep.subr.mxu0 0.0
        %715 = vmatpush1.msra.mxu0 0.0
        %716 = vmatprep.subr.mxu0 0.0
        %717 = vmatpush1.msra.mxu0 0.0
        %718 = vmatprep.subr.mxu0 0.0
        %719 = vmatpush1.msra.mxu0 0.0
        %720 = vmatprep.subr.mxu0 0.0
        %721 = vmatpush1.msra.mxu0 0.0
        %722 = vmatprep.subr.mxu0 0.0
        %723 = vmatpush1.msra.mxu0 0.0
        %724 = vmatprep.subr.mxu0 0.0
        %725 = vmatpush1.msra.mxu0 0.0
        %726 = vmatprep.subr.mxu0 0.0
        %727 = vmatpush1.msra.mxu0 0.0
        %728 = vmatprep.subr.mxu0 0.0
        %729 = vmatpush1.msra.mxu0 0.0
        %730 = vmatprep.subr.mxu0 0.0
        %731 = vmatpush1.msra.mxu0 0.0
        %732 = vmatprep.subr.mxu0 0.0
        %733 = vmatpush1.msra.mxu0 0.0
        %734 = vmatprep.subr.mxu0 0.0
        %735 = vmatpush1.msra.mxu0 0.0
        %736 = vmatprep.subr.mxu0 0.0
        %737 = vmatpush1.msra.mxu0 0.0
        %738 = vmatprep.subr.mxu0 0.0
        %739 = vmatpush1.msra.mxu0 0.0
        %740 = vmatprep.subr.mxu0 0.0
        %741 = vmatpush1.msra.mxu0 0.0
        %742 = vmatprep.subr.mxu0 0.0
        %743 = vmatpush1.msra.mxu0 0.0
        %744 = vmatprep.subr.mxu0 0.0
        %745 = vmatpush1.msra.mxu0 0.0
        %746 = vmatprep.subr.mxu0 0.0
        %747 = vmatpush1.msra.mxu0 0.0
        %748 = vmatprep.subr.mxu0 0.0
        %749 = vmatpush1.msra.mxu0 0.0
        %750 = vmatprep.subr.mxu0 0.0
        %751 = vmatpush1.msra.mxu0 0.0
        %752 = vmatprep.subr.mxu0 0.0
        %753 = vmatpush1.msra.mxu0 0.0
        %754 = vmatprep.subr.mxu0 0.0
        %755 = vmatpush1.msra.mxu0 0.0
        %756 = vmatprep.subr.mxu0 0.0
        %757 = vmatpush1.msra.mxu0 0.0
        %758 = vmatprep.mubr.f32.mxu0 0.0
        %759 = vmatmul.mubr.f32.gmra.mrb[0].mxu0 %v686
        %v760 = vpop.f32.mrb[0].mxu0
        %v761 = vadd.f32 0.0, %v760
        %v762 = vpop.f32.mrb[0].mxu0
        %763 = vmatprep.mubr.f32.mxu0 0.0
        %764 = vmatmul.mubr.f32.gmra.mrb[0].mxu0 %v689
        %v765 = vpop.f32.mrb[0].mxu0
        %v766 = vadd.f32 0.0, %v765
        %v767 = vpop.f32.mrb[0].mxu0
        %768 = vmatprep.mubr.f32.mxu0 0.0
        %769 = vmatmul.mubr.f32.gmra.mrb[0].mxu0 %v692
        %v770 = vpop.f32.mrb[0].mxu0
        %v771 = vadd.f32 0.0, %v770
        %v772 = vpop.f32.mrb[0].mxu0
        %773 = vdwg.mxu0
        %vm774 = vcmask 162816
        %775 = vst.msk [vmem:[#allocation3] sm:$0xff] %vm774, %v761
        %776 = vst.msk [vmem:[#allocation3 + $0x8] sm:$0xff] %vm774, %v766
        %vm777 = vcmask 158720
        %778 = vst.msk [vmem:[#allocation3 + $0x10] sm:$0xf] %vm777, %v771
        %779 = vmatprep.subr.mxu0 0.0
        %780 = vmatpush1.msra.mxu0 %v593
        %781 = vmatprep.subr.mxu0 0.0
        %782 = vmatpush1.msra.mxu0 %v594
        %783 = vmatprep.subr.mxu0 0.0
        %784 = vmatpush1.msra.mxu0 0.0
        %785 = vmatprep.subr.mxu0 0.0
        %786 = vmatpush1.msra.mxu0 0.0
        %787 = vmatprep.subr.mxu0 0.0
        %788 = vmatpush1.msra.mxu0 0.0
        %789 = vmatprep.subr.mxu0 0.0
        %790 = vmatpush1.msra.mxu0 0.0
        %791 = vmatprep.subr.mxu0 0.0
        %792 = vmatpush1.msra.mxu0 0.0
        %793 = vmatprep.subr.mxu0 0.0
        %794 = vmatpush1.msra.mxu0 0.0
        %795 = vmatprep.subr.mxu0 0.0
        %796 = vmatpush1.msra.mxu0 0.0
        %797 = vmatprep.subr.mxu0 0.0
        %798 = vmatpush1.msra.mxu0 0.0
        %799 = vmatprep.subr.mxu0 0.0
        %800 = vmatpush1.msra.mxu0 0.0
        %801 = vmatprep.subr.mxu0 0.0
        %802 = vmatpush1.msra.mxu0 0.0
        %803 = vmatprep.subr.mxu0 0.0
        %804 = vmatpush1.msra.mxu0 0.0
        %805 = vmatprep.subr.mxu0 0.0
        %806 = vmatpush1.msra.mxu0 0.0
        %807 = vmatprep.subr.mxu0 0.0
        %808 = vmatpush1.msra.mxu0 0.0
        %809 = vmatprep.subr.mxu0 0.0
        %810 = vmatpush1.msra.mxu0 0.0
        %811 = vmatprep.subr.mxu0 0.0
        %812 = vmatpush1.msra.mxu0 0.0
        %813 = vmatprep.subr.mxu0 0.0
        %814 = vmatpush1.msra.mxu0 0.0
        %815 = vmatprep.subr.mxu0 0.0
        %816 = vmatpush1.msra.mxu0 0.0
        %817 = vmatprep.subr.mxu0 0.0
        %818 = vmatpush1.msra.mxu0 0.0
        %819 = vmatprep.subr.mxu0 0.0
        %820 = vmatpush1.msra.mxu0 0.0
        %821 = vmatprep.subr.mxu0 0.0
        %822 = vmatpush1.msra.mxu0 0.0
        %823 = vmatprep.subr.mxu0 0.0
        %824 = vmatpush1.msra.mxu0 0.0
        %825 = vmatprep.subr.mxu0 0.0
        %826 = vmatpush1.msra.mxu0 0.0
        %827 = vmatprep.subr.mxu0 0.0
        %828 = vmatpush1.msra.mxu0 0.0
        %829 = vmatprep.subr.mxu0 0.0
        %830 = vmatpush1.msra.mxu0 0.0
        %831 = vmatprep.subr.mxu0 0.0
        %832 = vmatpush1.msra.mxu0 0.0
        %833 = vmatprep.subr.mxu0 0.0
        %834 = vmatpush1.msra.mxu0 0.0
        %835 = vmatprep.subr.mxu0 0.0
        %836 = vmatpush1.msra.mxu0 0.0
        %837 = vmatprep.subr.mxu0 0.0
        %838 = vmatpush1.msra.mxu0 0.0
        %839 = vmatprep.subr.mxu0 0.0
        %840 = vmatpush1.msra.mxu0 0.0
        %841 = vmatprep.subr.mxu0 0.0
        %842 = vmatpush1.msra.mxu0 0.0
        %843 = vmatprep.mubr.f32.mxu0 0.0
        %844 = vmatmul.mubr.f32.gmra.mrb[0].mxu0 %v597
        %v845 = vpop.f32.mrb[0].mxu0
        %v846 = vadd.f32 0.0, %v845
        %v847 = vpop.f32.mrb[0].mxu0
        %848 = vmatprep.mubr.f32.mxu0 0.0
        %849 = vmatmul.mubr.f32.gmra.mrb[0].mxu0 %v600
        %v850 = vpop.f32.mrb[0].mxu0
        %v851 = vadd.f32 0.0, %v850
        %v852 = vpop.f32.mrb[0].mxu0
        %853 = vmatprep.mubr.f32.mxu0 0.0
        %854 = vmatmul.mubr.f32.gmra.mrb[0].mxu0 %v603
        %v855 = vpop.f32.mrb[0].mxu0
        %v856 = vadd.f32 0.0, %v855
        %v857 = vpop.f32.mrb[0].mxu0
        %858 = vdwg.mxu0
        %v860 = vsel %vm595, %v846, 0
        %v863 = vsel %vm595, %v851, 0
        %v866 = vsel %vm595, %v856, 0
        %868 = vmatprep.subr.mxu0 0.0
        %869 = vmatpush1.msra.mxu0 %v357
        %870 = vmatprep.subr.mxu0 0.0
        %871 = vmatpush1.msra.mxu0 %v358
        %872 = vmatprep.subr.mxu0 0.0
        %873 = vmatpush1.msra.mxu0 0.0
        %874 = vmatprep.subr.mxu0 0.0
        %875 = vmatpush1.msra.mxu0 0.0
        %876 = vmatprep.subr.mxu0 0.0
        %877 = vmatpush1.msra.mxu0 0.0
        %878 = vmatprep.subr.mxu0 0.0
        %879 = vmatpush1.msra.mxu0 0.0
        %880 = vmatprep.subr.mxu0 0.0
        %881 = vmatpush1.msra.mxu0 0.0
        %882 = vmatprep.subr.mxu0 0.0
        %883 = vmatpush1.msra.mxu0 0.0
        %884 = vmatprep.subr.mxu0 0.0
        %885 = vmatpush1.msra.mxu0 0.0
        %886 = vmatprep.subr.mxu0 0.0
        %887 = vmatpush1.msra.mxu0 0.0
        %888 = vmatprep.subr.mxu0 0.0
        %889 = vmatpush1.msra.mxu0 0.0
        %890 = vmatprep.subr.mxu0 0.0
        %891 = vmatpush1.msra.mxu0 0.0
        %892 = vmatprep.subr.mxu0 0.0
        %893 = vmatpush1.msra.mxu0 0.0
        %894 = vmatprep.subr.mxu0 0.0
        %895 = vmatpush1.msra.mxu0 0.0
        %896 = vmatprep.subr.mxu0 0.0
        %897 = vmatpush1.msra.mxu0 0.0
        %898 = vmatprep.subr.mxu0 0.0
        %899 = vmatpush1.msra.mxu0 0.0
        %900 = vmatprep.subr.mxu0 0.0
        %901 = vmatpush1.msra.mxu0 0.0
        %902 = vmatprep.subr.mxu0 0.0
        %903 = vmatpush1.msra.mxu0 0.0
        %904 = vmatprep.subr.mxu0 0.0
        %905 = vmatpush1.msra.mxu0 0.0
        %906 = vmatprep.subr.mxu0 0.0
        %907 = vmatpush1.msra.mxu0 0.0
        %908 = vmatprep.subr.mxu0 0.0
        %909 = vmatpush1.msra.mxu0 0.0
        %910 = vmatprep.subr.mxu0 0.0
        %911 = vmatpush1.msra.mxu0 0.0
        %912 = vmatprep.subr.mxu0 0.0
        %913 = vmatpush1.msra.mxu0 0.0
        %914 = vmatprep.subr.mxu0 0.0
        %915 = vmatpush1.msra.mxu0 0.0
        %916 = vmatprep.subr.mxu0 0.0
        %917 = vmatpush1.msra.mxu0 0.0
        %918 = vmatprep.subr.mxu0 0.0
        %919 = vmatpush1.msra.mxu0 0.0
        %920 = vmatprep.subr.mxu0 0.0
        %921 = vmatpush1.msra.mxu0 0.0
        %922 = vmatprep.subr.mxu0 0.0
        %923 = vmatpush1.msra.mxu0 0.0
        %924 = vmatprep.subr.mxu0 0.0
        %925 = vmatpush1.msra.mxu0 0.0
        %926 = vmatprep.subr.mxu0 0.0
        %927 = vmatpush1.msra.mxu0 0.0
        %928 = vmatprep.subr.mxu0 0.0
        %929 = vmatpush1.msra.mxu0 0.0
        %930 = vmatprep.subr.mxu0 0.0
        %931 = vmatpush1.msra.mxu0 0.0
        %932 = vmatprep.mubr.f32.mxu0 0.0
        %933 = vmatmul.mubr.f32.gmra.mrb[0].mxu0 %v860
        %v934 = vpop.f32.mrb[0].mxu0
        %v935 = vadd.f32 0.0, %v934
        %v936 = vpop.f32.mrb[0].mxu0
        %937 = vmatprep.mubr.f32.mxu0 0.0
        %938 = vmatmul.mubr.f32.gmra.mrb[0].mxu0 %v863
        %v939 = vpop.f32.mrb[0].mxu0
        %v940 = vadd.f32 0.0, %v939
        %v941 = vpop.f32.mrb[0].mxu0
        %942 = vmatprep.mubr.f32.mxu0 0.0
        %943 = vmatmul.mubr.f32.gmra.mrb[0].mxu0 %v866
        %v944 = vpop.f32.mrb[0].mxu0
        %v945 = vadd.f32 0.0, %v944
        %v946 = vpop.f32.mrb[0].mxu0
        %947 = vdwg.mxu0
        %948 = vst.msk [vmem:[#allocation4] sm:$0xff] %vm774, %v935
        %949 = vst.msk [vmem:[#allocation4 + $0x8] sm:$0xff] %vm774, %v940
        %950 = vst.msk [vmem:[#allocation4 + $0x10] sm:$0xf] %vm777, %v945
        %v951 = vld [vmem:[%s350] sm:$0xff]
        %vm952 = vcmask 64512
        %v954 = vsel %vm952, %v351, 0
        %v957 = vsel %vm952, %v352, 0
        %959 = vmatprep.subr.mxu0 0.0
        %960 = vmatpush1.msra.mxu0 %v951
        %961 = vmatprep.subr.mxu0 0.0
        %962 = vmatpush1.msra.mxu0 0.0
        %963 = vmatprep.subr.mxu0 0.0
        %964 = vmatpush1.msra.mxu0 0.0
        %965 = vmatprep.subr.mxu0 0.0
        %966 = vmatpush1.msra.mxu0 0.0
        %967 = vmatprep.subr.mxu0 0.0
        %968 = vmatpush1.msra.mxu0 0.0
        %969 = vmatprep.subr.mxu0 0.0
        %970 = vmatpush1.msra.mxu0 0.0
        %971 = vmatprep.subr.mxu0 0.0
        %972 = vmatpush1.msra.mxu0 0.0
        %973 = vmatprep.subr.mxu0 0.0
        %974 = vmatpush1.msra.mxu0 0.0
        %975 = vmatprep.subr.mxu0 0.0
        %976 = vmatpush1.msra.mxu0 0.0
        %977 = vmatprep.subr.mxu0 0.0
        %978 = vmatpush1.msra.mxu0 0.0
        %979 = vmatprep.subr.mxu0 0.0
        %980 = vmatpush1.msra.mxu0 0.0
        %981 = vmatprep.subr.mxu0 0.0
        %982 = vmatpush1.msra.mxu0 0.0
        %983 = vmatprep.subr.mxu0 0.0
        %984 = vmatpush1.msra.mxu0 0.0
        %985 = vmatprep.subr.mxu0 0.0
        %986 = vmatpush1.msra.mxu0 0.0
        %987 = vmatprep.subr.mxu0 0.0
        %988 = vmatpush1.msra.mxu0 0.0
        %989 = vmatprep.subr.mxu0 0.0
        %990 = vmatpush1.msra.mxu0 0.0
        %991 = vmatprep.subr.mxu0 0.0
        %992 = vmatpush1.msra.mxu0 0.0
        %993 = vmatprep.subr.mxu0 0.0
        %994 = vmatpush1.msra.mxu0 0.0
        %995 = vmatprep.subr.mxu0 0.0
        %996 = vmatpush1.msra.mxu0 0.0
        %997 = vmatprep.subr.mxu0 0.0
        %998 = vmatpush1.msra.mxu0 0.0
        %999 = vmatprep.subr.mxu0 0.0
        %1000 = vmatpush1.msra.mxu0 0.0
        %1001 = vmatprep.subr.mxu0 0.0
        %1002 = vmatpush1.msra.mxu0 0.0
        %1003 = vmatprep.subr.mxu0 0.0
        %1004 = vmatpush1.msra.mxu0 0.0
        %1005 = vmatprep.subr.mxu0 0.0
        %1006 = vmatpush1.msra.mxu0 0.0
        %1007 = vmatprep.subr.mxu0 0.0
        %1008 = vmatpush1.msra.mxu0 0.0
        %1009 = vmatprep.subr.mxu0 0.0
        %1010 = vmatpush1.msra.mxu0 0.0
        %1011 = vmatprep.subr.mxu0 0.0
        %1012 = vmatpush1.msra.mxu0 0.0
        %1013 = vmatprep.subr.mxu0 0.0
        %1014 = vmatpush1.msra.mxu0 0.0
        %1015 = vmatprep.subr.mxu0 0.0
        %1016 = vmatpush1.msra.mxu0 0.0
        %1017 = vmatprep.subr.mxu0 0.0
        %1018 = vmatpush1.msra.mxu0 0.0
        %1019 = vmatprep.subr.mxu0 0.0
        %1020 = vmatpush1.msra.mxu0 0.0
        %1021 = vmatprep.subr.mxu0 0.0
        %1022 = vmatpush1.msra.mxu0 0.0
        %1023 = vmatprep.mubr.f32.mxu0 0.0
        %1024 = vmatmul.mubr.f32.gmra.mrb[0].mxu0 %v954
        %v1025 = vpop.f32.mrb[0].mxu0
        %v1026 = vadd.f32 0.0, %v1025
        %v1027 = vpop.f32.mrb[0].mxu0
        %1028 = vmatprep.mubr.f32.mxu0 0.0
        %1029 = vmatmul.mubr.f32.gmra.mrb[0].mxu0 %v957
        %v1030 = vpop.f32.mrb[0].mxu0
        %v1031 = vadd.f32 0.0, %v1030
        %v1032 = vpop.f32.mrb[0].mxu0
        %1033 = vdwg.mxu0
        %v1035 = vsel %vm952, %v1026, 0
        %v1038 = vsel %vm952, %v1031, 0
        %1040 = vmatprep.subr.mxu0 0.0
        %1041 = vmatpush1.msra.mxu0 %v353
        %1042 = vmatprep.subr.mxu0 0.0
        %1043 = vmatpush1.msra.mxu0 0.0
        %1044 = vmatprep.subr.mxu0 0.0
        %1045 = vmatpush1.msra.mxu0 0.0
        %1046 = vmatprep.subr.mxu0 0.0
        %1047 = vmatpush1.msra.mxu0 0.0
        %1048 = vmatprep.subr.mxu0 0.0
        %1049 = vmatpush1.msra.mxu0 0.0
        %1050 = vmatprep.subr.mxu0 0.0
        %1051 = vmatpush1.msra.mxu0 0.0
        %1052 = vmatprep.subr.mxu0 0.0
        %1053 = vmatpush1.msra.mxu0 0.0
        %1054 = vmatprep.subr.mxu0 0.0
        %1055 = vmatpush1.msra.mxu0 0.0
        %1056 = vmatprep.subr.mxu0 0.0
        %1057 = vmatpush1.msra.mxu0 0.0
        %1058 = vmatprep.subr.mxu0 0.0
        %1059 = vmatpush1.msra.mxu0 0.0
        %1060 = vmatprep.subr.mxu0 0.0
        %1061 = vmatpush1.msra.mxu0 0.0
        %1062 = vmatprep.subr.mxu0 0.0
        %1063 = vmatpush1.msra.mxu0 0.0
        %1064 = vmatprep.subr.mxu0 0.0
        %1065 = vmatpush1.msra.mxu0 0.0
        %1066 = vmatprep.subr.mxu0 0.0
        %1067 = vmatpush1.msra.mxu0 0.0
        %1068 = vmatprep.subr.mxu0 0.0
        %1069 = vmatpush1.msra.mxu0 0.0
        %1070 = vmatprep.subr.mxu0 0.0
        %1071 = vmatpush1.msra.mxu0 0.0
        %1072 = vmatprep.subr.mxu0 0.0
        %1073 = vmatpush1.msra.mxu0 0.0
        %1074 = vmatprep.subr.mxu0 0.0
        %1075 = vmatpush1.msra.mxu0 0.0
        %1076 = vmatprep.subr.mxu0 0.0
        %1077 = vmatpush1.msra.mxu0 0.0
        %1078 = vmatprep.subr.mxu0 0.0
        %1079 = vmatpush1.msra.mxu0 0.0
        %1080 = vmatprep.subr.mxu0 0.0
        %1081 = vmatpush1.msra.mxu0 0.0
        %1082 = vmatprep.subr.mxu0 0.0
        %1083 = vmatpush1.msra.mxu0 0.0
        %1084 = vmatprep.subr.mxu0 0.0
        %1085 = vmatpush1.msra.mxu0 0.0
        %1086 = vmatprep.subr.mxu0 0.0
        %1087 = vmatpush1.msra.mxu0 0.0
        %1088 = vmatprep.subr.mxu0 0.0
        %1089 = vmatpush1.msra.mxu0 0.0
        %1090 = vmatprep.subr.mxu0 0.0
        %1091 = vmatpush1.msra.mxu0 0.0
        %1092 = vmatprep.subr.mxu0 0.0
        %1093 = vmatpush1.msra.mxu0 0.0
        %1094 = vmatprep.subr.mxu0 0.0
        %1095 = vmatpush1.msra.mxu0 0.0
        %1096 = vmatprep.subr.mxu0 0.0
        %1097 = vmatpush1.msra.mxu0 0.0
        %1098 = vmatprep.subr.mxu0 0.0
        %1099 = vmatpush1.msra.mxu0 0.0
        %1100 = vmatprep.subr.mxu0 0.0
        %1101 = vmatpush1.msra.mxu0 0.0
        %1102 = vmatprep.subr.mxu0 0.0
        %1103 = vmatpush1.msra.mxu0 0.0
        %1104 = vmatprep.mubr.f32.mxu0 0.0
        %1105 = vmatmul.mubr.f32.gmra.mrb[0].mxu0 %v1035
        %v1106 = vpop.f32.mrb[0].mxu0
        %v1107 = vadd.f32 0.0, %v1106
        %v1108 = vpop.f32.mrb[0].mxu0
        %1109 = vmatprep.mubr.f32.mxu0 0.0
        %1110 = vmatmul.mubr.f32.gmra.mrb[0].mxu0 %v1038
        %v1111 = vpop.f32.mrb[0].mxu0
        %v1112 = vadd.f32 0.0, %v1111
        %v1113 = vpop.f32.mrb[0].mxu0
        %1114 = vdwg.mxu0
        %1117 = vrot.lane.b32.xlu0 %v1107, 1
        %v1118 = vpop.permute.xlu0 %1117
        %1119 = vrot.lane.b32.xlu0 %v1112, 1
        %v1120 = vpop.permute.xlu0 %1119
        %1123 = vst.msk [vmem:[#allocation2 + $0x1] sm:$0xff] %vm374, %v1118
        %1124 = vst.msk [vmem:[#allocation2 + $0x9] sm:$0xff] %vm374, %v1120
        %s1125 = sld [smem:[#allocation5]]
        %v1126 = vld [vmem:[#allocation2] sm:$0xff]
        %v1127 = vld [vmem:[#allocation2 + $0x8] sm:$0xff]
        %v1128 = vstv %s1125
        %v1129 = vmul.f32 %v1128, %v1126
        %v1130 = vmul.f32 %v1128, %v1127
        %v1131 = vadd.f32 %v1129, 0.0
        %v1132 = vadd.f32 %v1130, 0.0
        %s1133 = sld [smem:[#allocation5 + $0x1]]
        %v1134 = vstv %s1133
        %v1135 = vmul.f32 %v1134, %v1126
        %v1136 = vmul.f32 %v1134, %v1127
        %1139 = vrot.lane.b32.xlu0 %v1135, 127
        %v1140 = vpop.permute.xlu0 %1139
        %1141 = vrot.lane.b32.xlu0 %v1136, 127
        %v1142 = vpop.permute.xlu0 %1141
        %v1145 = vadd.f32 %v1131, %v1140
        %v1146 = vadd.f32 %v1132, %v1142
        %s1147 = sld [smem:[#allocation5 + $0x2]]
        %v1148 = vstv %s1147
        %v1149 = vmul.f32 %v1148, %v1126
        %v1150 = vmul.f32 %v1148, %v1127
        %1153 = vrot.lane.b32.xlu0 %v1149, 126
        %v1154 = vpop.permute.xlu0 %1153
        %1155 = vrot.lane.b32.xlu0 %v1150, 126
        %v1156 = vpop.permute.xlu0 %1155
        %v1159 = vadd.f32 %v1145, %v1154
        %v1160 = vadd.f32 %v1146, %v1156
        %s1161 = sld [smem:[#allocation5 + $0x3]]
        %v1162 = vld [vmem:[#allocation2 + $0x1] sm:$0xff]
        %v1163 = vld [vmem:[#allocation2 + $0x9] sm:$0xff]
        %v1164 = vstv %s1161
        %v1165 = vmul.f32 %v1164, %v1162
        %v1166 = vmul.f32 %v1164, %v1163
        %v1167 = vadd.f32 %v1159, %v1165
        %v1168 = vadd.f32 %v1160, %v1166
        %s1169 = sld [smem:[#allocation5 + $0x4]]
        %v1170 = vstv %s1169
        %v1171 = vmul.f32 %v1170, %v1162
        %v1172 = vmul.f32 %v1170, %v1163
        %1175 = vrot.lane.b32.xlu0 %v1171, 127
        %v1176 = vpop.permute.xlu0 %1175
        %1177 = vrot.lane.b32.xlu0 %v1172, 127
        %v1178 = vpop.permute.xlu0 %1177
        %v1181 = vadd.f32 %v1167, %v1176
        %v1182 = vadd.f32 %v1168, %v1178
        %s1183 = sld [smem:[#allocation5 + $0x5]]
        %v1184 = vstv %s1183
        %v1185 = vmul.f32 %v1184, %v1162
        %v1186 = vmul.f32 %v1184, %v1163
        %1189 = vrot.lane.b32.xlu0 %v1185, 126
        %v1190 = vpop.permute.xlu0 %1189
        %1191 = vrot.lane.b32.xlu0 %v1186, 126
        %v1192 = vpop.permute.xlu0 %1191
        %v1195 = vadd.f32 %v1181, %v1190
        %v1196 = vadd.f32 %v1182, %v1192
        %s1197 = sld [smem:[#allocation5 + $0x6]]
        %v1198 = vld [vmem:[#allocation2 + $0x2] sm:$0xff]
        %v1199 = vld [vmem:[#allocation2 + $0xa] sm:$0xff]
        %v1200 = vstv %s1197
        %v1201 = vmul.f32 %v1200, %v1198
        %v1202 = vmul.f32 %v1200, %v1199
        %v1203 = vadd.f32 %v1195, %v1201
        %v1204 = vadd.f32 %v1196, %v1202
        %s1205 = sld [smem:[#allocation5 + $0x7]]
        %v1206 = vstv %s1205
        %v1207 = vmul.f32 %v1206, %v1198
        %v1208 = vmul.f32 %v1206, %v1199
        %1211 = vrot.lane.b32.xlu0 %v1207, 127
        %v1212 = vpop.permute.xlu0 %1211
        %1213 = vrot.lane.b32.xlu0 %v1208, 127
        %v1214 = vpop.permute.xlu0 %1213
        %v1217 = vadd.f32 %v1203, %v1212
        %v1218 = vadd.f32 %v1204, %v1214
        %s1219 = sld [smem:[#allocation5 + $0x8]]
        %v1220 = vstv %s1219
        %v1221 = vmul.f32 %v1220, %v1198
        %v1222 = vmul.f32 %v1220, %v1199
        %1225 = vrot.lane.b32.xlu0 %v1221, 126
        %v1226 = vpop.permute.xlu0 %1225
        %1227 = vrot.lane.b32.xlu0 %v1222, 126
        %v1228 = vpop.permute.xlu0 %1227
        %v1231 = vadd.f32 %v1217, %v1226
        %v1232 = vadd.f32 %v1218, %v1228
        %s1233 = sld [smem:[#allocation8]]
        %v1234 = vstv %s1233
        %v1235 = vadd.f32 %v1231, %v1234
        %v1236 = vadd.f32 %v1232, %v1234
        %s1237 = scalar_lea.vmem %s345, 16
        %v1238 = vld [vmem:[%s1237] sm:$0xff]
        %v1239 = vld [vmem:[%s1237 + $0x8] sm:$0xff]
        %1242 = vrot.lane.b32.xlu0 %v1238, 1
        %v1243 = vpop.permute.xlu0 %1242
        %1244 = vrot.lane.b32.xlu0 %v1239, 1
        %v1245 = vpop.permute.xlu0 %1244
        %1248 = vst.msk [vmem:[#allocation2 + $0x1] sm:$0xff] %vm374, %v1243
        %1249 = vst.msk [vmem:[#allocation2 + $0x9] sm:$0xff] %vm374, %v1245
        %v1250 = vld [vmem:[#allocation2] sm:$0xff]
        %v1251 = vld [vmem:[#allocation2 + $0x8] sm:$0xff]
        %s1252 = sld [smem:[#allocation5 + $0x2d]]
        %v1253 = vstv %s1252
        %v1254 = vmul.f32 %v1253, %v1250
        %v1255 = vmul.f32 %v1253, %v1251
        %v1256 = vadd.f32 %v1254, 0.0
        %v1257 = vadd.f32 %v1255, 0.0
        %s1258 = sld [smem:[#allocation5 + $0x51]]
        %v1259 = vstv %s1258
        %v1260 = vmul.f32 %v1259, %v1250
        %v1261 = vmul.f32 %v1259, %v1251
        %v1262 = vadd.f32 %v1260, 0.0
        %v1263 = vadd.f32 %v1261, 0.0
        %s1264 = sld [smem:[#allocation5 + $0x2e]]
        %v1265 = vstv %s1264
        %v1266 = vmul.f32 %v1265, %v1250
        %v1267 = vmul.f32 %v1265, %v1251
        %1270 = vrot.lane.b32.xlu0 %v1266, 127
        %v1271 = vpop.permute.xlu0 %1270
        %1272 = vrot.lane.b32.xlu0 %v1267, 127
        %v1273 = vpop.permute.xlu0 %1272
        %v1276 = vadd.f32 %v1256, %v1271
        %v1277 = vadd.f32 %v1257, %v1273
        %s1278 = sld [smem:[#allocation5 + $0x52]]
        %v1279 = vstv %s1278
        %v1280 = vmul.f32 %v1279, %v1250
        %v1281 = vmul.f32 %v1279, %v1251
        %1284 = vrot.lane.b32.xlu0 %v1280, 127
        %v1285 = vpop.permute.xlu0 %1284
        %1286 = vrot.lane.b32.xlu0 %v1281, 127
        %v1287 = vpop.permute.xlu0 %1286
        %v1290 = vadd.f32 %v1262, %v1285
        %v1291 = vadd.f32 %v1263, %v1287
        %s1292 = sld [smem:[#allocation5 + $0x2f]]
        %v1293 = vstv %s1292
        %v1294 = vmul.f32 %v1293, %v1250
        %v1295 = vmul.f32 %v1293, %v1251
        %1298 = vrot.lane.b32.xlu0 %v1294, 126
        %v1299 = vpop.permute.xlu0 %1298
        %1300 = vrot.lane.b32.xlu0 %v1295, 126
        %v1301 = vpop.permute.xlu0 %1300
        %v1304 = vadd.f32 %v1276, %v1299
        %v1305 = vadd.f32 %v1277, %v1301
        %s1306 = sld [smem:[#allocation5 + $0x53]]
        %v1307 = vstv %s1306
        %v1308 = vmul.f32 %v1307, %v1250
        %v1309 = vmul.f32 %v1307, %v1251
        %1312 = vrot.lane.b32.xlu0 %v1308, 126
        %v1313 = vpop.permute.xlu0 %1312
        %1314 = vrot.lane.b32.xlu0 %v1309, 126
        %v1315 = vpop.permute.xlu0 %1314
        %v1318 = vadd.f32 %v1290, %v1313
        %v1319 = vadd.f32 %v1291, %v1315
        %v1320 = vld [vmem:[#allocation2 + $0x1] sm:$0xff]
        %v1321 = vld [vmem:[#allocation2 + $0x9] sm:$0xff]
        %s1322 = sld [smem:[#allocation5 + $0x30]]
        %v1323 = vstv %s1322
        %v1324 = vmul.f32 %v1323, %v1320
        %v1325 = vmul.f32 %v1323, %v1321
        %v1326 = vadd.f32 %v1304, %v1324
        %v1327 = vadd.f32 %v1305, %v1325
        %s1328 = sld [smem:[#allocation5 + $0x54]]
        %v1329 = vstv %s1328
        %v1330 = vmul.f32 %v1329, %v1320
        %v1331 = vmul.f32 %v1329, %v1321
        %v1332 = vadd.f32 %v1318, %v1330
        %v1333 = vadd.f32 %v1319, %v1331
        %s1334 = sld [smem:[#allocation5 + $0x31]]
        %v1335 = vstv %s1334
        %v1336 = vmul.f32 %v1335, %v1320
        %v1337 = vmul.f32 %v1335, %v1321
        %1340 = vrot.lane.b32.xlu0 %v1336, 127
        %v1341 = vpop.permute.xlu0 %1340
        %1342 = vrot.lane.b32.xlu0 %v1337, 127
        %v1343 = vpop.permute.xlu0 %1342
        %v1346 = vadd.f32 %v1326, %v1341
        %v1347 = vadd.f32 %v1327, %v1343
        %s1348 = sld [smem:[#allocation5 + $0x55]]
        %v1349 = vstv %s1348
        %v1350 = vmul.f32 %v1349, %v1320
        %v1351 = vmul.f32 %v1349, %v1321
        %1354 = vrot.lane.b32.xlu0 %v1350, 127
        %v1355 = vpop.permute.xlu0 %1354
        %1356 = vrot.lane.b32.xlu0 %v1351, 127
        %v1357 = vpop.permute.xlu0 %1356
        %v1360 = vadd.f32 %v1332, %v1355
        %v1361 = vadd.f32 %v1333, %v1357
        %s1362 = sld [smem:[#allocation5 + $0x32]]
        %v1363 = vstv %s1362
        %v1364 = vmul.f32 %v1363, %v1320
        %v1365 = vmul.f32 %v1363, %v1321
        %1368 = vrot.lane.b32.xlu0 %v1364, 126
        %v1369 = vpop.permute.xlu0 %1368
        %1370 = vrot.lane.b32.xlu0 %v1365, 126
        %v1371 = vpop.permute.xlu0 %1370
        %v1374 = vadd.f32 %v1346, %v1369
        %v1375 = vadd.f32 %v1347, %v1371
        %s1376 = sld [smem:[#allocation5 + $0x56]]
        %v1377 = vstv %s1376
        %v1378 = vmul.f32 %v1377, %v1320
        %v1379 = vmul.f32 %v1377, %v1321
        %1382 = vrot.lane.b32.xlu0 %v1378, 126
        %v1383 = vpop.permute.xlu0 %1382
        %1384 = vrot.lane.b32.xlu0 %v1379, 126
        %v1385 = vpop.permute.xlu0 %1384
        %v1388 = vadd.f32 %v1360, %v1383
        %v1389 = vadd.f32 %v1361, %v1385
        %v1390 = vld [vmem:[#allocation2 + $0x2] sm:$0xff]
        %v1391 = vld [vmem:[#allocation2 + $0xa] sm:$0xff]
        %s1392 = sld [smem:[#allocation5 + $0x33]]
        %v1393 = vstv %s1392
        %v1394 = vmul.f32 %v1393, %v1390
        %v1395 = vmul.f32 %v1393, %v1391
        %v1396 = vadd.f32 %v1374, %v1394
        %v1397 = vadd.f32 %v1375, %v1395
        %s1398 = sld [smem:[#allocation5 + $0x57]]
        %v1399 = vstv %s1398
        %v1400 = vmul.f32 %v1399, %v1390
        %v1401 = vmul.f32 %v1399, %v1391
        %v1402 = vadd.f32 %v1388, %v1400
        %v1403 = vadd.f32 %v1389, %v1401
        %s1404 = sld [smem:[#allocation5 + $0x34]]
        %v1405 = vstv %s1404
        %v1406 = vmul.f32 %v1405, %v1390
        %v1407 = vmul.f32 %v1405, %v1391
        %1410 = vrot.lane.b32.xlu0 %v1406, 127
        %v1411 = vpop.permute.xlu0 %1410
        %1412 = vrot.lane.b32.xlu0 %v1407, 127
        %v1413 = vpop.permute.xlu0 %1412
        %v1416 = vadd.f32 %v1396, %v1411
        %v1417 = vadd.f32 %v1397, %v1413
        %s1418 = sld [smem:[#allocation5 + $0x58]]
        %v1419 = vstv %s1418
        %v1420 = vmul.f32 %v1419, %v1390
        %v1421 = vmul.f32 %v1419, %v1391
        %1424 = vrot.lane.b32.xlu0 %v1420, 127
        %v1425 = vpop.permute.xlu0 %1424
        %1426 = vrot.lane.b32.xlu0 %v1421, 127
        %v1427 = vpop.permute.xlu0 %1426
        %v1430 = vadd.f32 %v1402, %v1425
        %v1431 = vadd.f32 %v1403, %v1427
        %s1432 = sld [smem:[#allocation5 + $0x35]]
        %v1433 = vstv %s1432
        %v1434 = vmul.f32 %v1433, %v1390
        %v1435 = vmul.f32 %v1433, %v1391
        %1438 = vrot.lane.b32.xlu0 %v1434, 126
        %v1439 = vpop.permute.xlu0 %1438
        %1440 = vrot.lane.b32.xlu0 %v1435, 126
        %v1441 = vpop.permute.xlu0 %1440
        %v1444 = vadd.f32 %v1416, %v1439
        %v1445 = vadd.f32 %v1417, %v1441
        %s1446 = sld [smem:[#allocation5 + $0x59]]
        %v1447 = vstv %s1446
        %v1448 = vmul.f32 %v1447, %v1390
        %v1449 = vmul.f32 %v1447, %v1391
        %1452 = vrot.lane.b32.xlu0 %v1448, 126
        %v1453 = vpop.permute.xlu0 %1452
        %1454 = vrot.lane.b32.xlu0 %v1449, 126
        %v1455 = vpop.permute.xlu0 %1454
        %v1458 = vadd.f32 %v1430, %v1453
        %v1459 = vadd.f32 %v1431, %v1455
        %s1460 = sld [smem:[#allocation8 + $0x5]]
        %v1461 = vstv %s1460
        %v1462 = vadd.f32 %v1444, %v1461
        %v1463 = vadd.f32 %v1445, %v1461
        %s1464 = sld [smem:[#allocation8 + $0x9]]
        %v1465 = vstv %s1464
        %v1466 = vadd.f32 %v1458, %v1465
        %v1467 = vadd.f32 %v1459, %v1465
        %1468 = vmatprep.subr.mxu0 0.0
        %1469 = vmatpush1.msra.mxu0 %v1462
        %1470 = vmatprep.subr.mxu0 0.0
        %1471 = vmatpush1.msra.mxu0 %v1463
        %1472 = vmatprep.subr.mxu0 0.0
        %1473 = vmatpush1.msra.mxu0 0.0
        %1474 = vmatprep.subr.mxu0 0.0
        %1475 = vmatpush1.msra.mxu0 0.0
        %1476 = vmatprep.subr.mxu0 0.0
        %1477 = vmatpush1.msra.mxu0 0.0
        %1478 = vmatprep.subr.mxu0 0.0
        %1479 = vmatpush1.msra.mxu0 0.0
        %1480 = vmatprep.subr.mxu0 0.0
        %1481 = vmatpush1.msra.mxu0 0.0
        %1482 = vmatprep.subr.mxu0 0.0
        %1483 = vmatpush1.msra.mxu0 0.0
        %1484 = vmatprep.subr.mxu0 0.0
        %1485 = vmatpush1.msra.mxu0 0.0
        %1486 = vmatprep.subr.mxu0 0.0
        %1487 = vmatpush1.msra.mxu0 0.0
        %1488 = vmatprep.subr.mxu0 0.0
        %1489 = vmatpush1.msra.mxu0 0.0
        %1490 = vmatprep.subr.mxu0 0.0
        %1491 = vmatpush1.msra.mxu0 0.0
        %1492 = vmatprep.subr.mxu0 0.0
        %1493 = vmatpush1.msra.mxu0 0.0
        %1494 = vmatprep.subr.mxu0 0.0
        %1495 = vmatpush1.msra.mxu0 0.0
        %1496 = vmatprep.subr.mxu0 0.0
        %1497 = vmatpush1.msra.mxu0 0.0
        %1498 = vmatprep.subr.mxu0 0.0
        %1499 = vmatpush1.msra.mxu0 0.0
        %1500 = vmatprep.subr.mxu0 0.0
        %1501 = vmatpush1.msra.mxu0 0.0
        %1502 = vmatprep.subr.mxu0 0.0
        %1503 = vmatpush1.msra.mxu0 0.0
        %1504 = vmatprep.subr.mxu0 0.0
        %1505 = vmatpush1.msra.mxu0 0.0
        %1506 = vmatprep.subr.mxu0 0.0
        %1507 = vmatpush1.msra.mxu0 0.0
        %1508 = vmatprep.subr.mxu0 0.0
        %1509 = vmatpush1.msra.mxu0 0.0
        %1510 = vmatprep.subr.mxu0 0.0
        %1511 = vmatpush1.msra.mxu0 0.0
        %1512 = vmatprep.subr.mxu0 0.0
        %1513 = vmatpush1.msra.mxu0 0.0
        %1514 = vmatprep.subr.mxu0 0.0
        %1515 = vmatpush1.msra.mxu0 0.0
        %1516 = vmatprep.subr.mxu0 0.0
        %1517 = vmatpush1.msra.mxu0 0.0
        %1518 = vmatprep.subr.mxu0 0.0
        %1519 = vmatpush1.msra.mxu0 0.0
        %1520 = vmatprep.subr.mxu0 0.0
        %1521 = vmatpush1.msra.mxu0 0.0
        %1522 = vmatprep.subr.mxu0 0.0
        %1523 = vmatpush1.msra.mxu0 0.0
        %1524 = vmatprep.subr.mxu0 0.0
        %1525 = vmatpush1.msra.mxu0 0.0
        %1526 = vmatprep.subr.mxu0 0.0
        %1527 = vmatpush1.msra.mxu0 0.0
        %1528 = vmatprep.subr.mxu0 0.0
        %1529 = vmatpush1.msra.mxu0 0.0
        %1530 = vmatprep.subr.mxu0 0.0
        %1531 = vmatpush1.msra.mxu0 0.0
        %1532 = vmatprep.mubr.f32.mxu0 0.0
        %1533 = vmatmul.mubr.f32.gmra.mrb[0].mxu0 %v597
        %v1534 = vpop.f32.mrb[0].mxu0
        %v1535 = vadd.f32 0.0, %v1534
        %v1536 = vpop.f32.mrb[0].mxu0
        %1537 = vmatprep.mubr.f32.mxu0 0.0
        %1538 = vmatmul.mubr.f32.gmra.mrb[0].mxu0 %v600
        %v1539 = vpop.f32.mrb[0].mxu0
        %v1540 = vadd.f32 0.0, %v1539
        %v1541 = vpop.f32.mrb[0].mxu0
        %1542 = vmatprep.mubr.f32.mxu0 0.0
        %1543 = vmatmul.mubr.f32.gmra.mrb[0].mxu0 %v603
        %v1544 = vpop.f32.mrb[0].mxu0
        %v1545 = vadd.f32 0.0, %v1544
        %v1546 = vpop.f32.mrb[0].mxu0
        %1547 = vdwg.mxu0
        %v1549 = vsel %vm595, %v1535, 0
        %v1552 = vsel %vm595, %v1540, 0
        %v1555 = vsel %vm595, %v1545, 0
        %1557 = vmatprep.subr.mxu0 0.0
        %1558 = vmatpush1.msra.mxu0 %v357
        %1559 = vmatprep.subr.mxu0 0.0
        %1560 = vmatpush1.msra.mxu0 %v358
        %1561 = vmatprep.subr.mxu0 0.0
        %1562 = vmatpush1.msra.mxu0 0.0
        %1563 = vmatprep.subr.mxu0 0.0
        %1564 = vmatpush1.msra.mxu0 0.0
        %1565 = vmatprep.subr.mxu0 0.0
        %1566 = vmatpush1.msra.mxu0 0.0
        %1567 = vmatprep.subr.mxu0 0.0
        %1568 = vmatpush1.msra.mxu0 0.0
        %1569 = vmatprep.subr.mxu0 0.0
        %1570 = vmatpush1.msra.mxu0 0.0
        %1571 = vmatprep.subr.mxu0 0.0
        %1572 = vmatpush1.msra.mxu0 0.0
        %1573 = vmatprep.subr.mxu0 0.0
        %1574 = vmatpush1.msra.mxu0 0.0
        %1575 = vmatprep.subr.mxu0 0.0
        %1576 = vmatpush1.msra.mxu0 0.0
        %1577 = vmatprep.subr.mxu0 0.0
        %1578 = vmatpush1.msra.mxu0 0.0
        %1579 = vmatprep.subr.mxu0 0.0
        %1580 = vmatpush1.msra.mxu0 0.0
        %1581 = vmatprep.subr.mxu0 0.0
        %1582 = vmatpush1.msra.mxu0 0.0
        %1583 = vmatprep.subr.mxu0 0.0
        %1584 = vmatpush1.msra.mxu0 0.0
        %1585 = vmatprep.subr.mxu0 0.0
        %1586 = vmatpush1.msra.mxu0 0.0
        %1587 = vmatprep.subr.mxu0 0.0
        %1588 = vmatpush1.msra.mxu0 0.0
        %1589 = vmatprep.subr.mxu0 0.0
        %1590 = vmatpush1.msra.mxu0 0.0
        %1591 = vmatprep.subr.mxu0 0.0
        %1592 = vmatpush1.msra.mxu0 0.0
        %1593 = vmatprep.subr.mxu0 0.0
        %1594 = vmatpush1.msra.mxu0 0.0
        %1595 = vmatprep.subr.mxu0 0.0
        %1596 = vmatpush1.msra.mxu0 0.0
        %1597 = vmatprep.subr.mxu0 0.0
        %1598 = vmatpush1.msra.mxu0 0.0
        %1599 = vmatprep.subr.mxu0 0.0
        %1600 = vmatpush1.msra.mxu0 0.0
        %1601 = vmatprep.subr.mxu0 0.0
        %1602 = vmatpush1.msra.mxu0 0.0
        %1603 = vmatprep.subr.mxu0 0.0
        %1604 = vmatpush1.msra.mxu0 0.0
        %1605 = vmatprep.subr.mxu0 0.0
        %1606 = vmatpush1.msra.mxu0 0.0
        %1607 = vmatprep.subr.mxu0 0.0
        %1608 = vmatpush1.msra.mxu0 0.0
        %1609 = vmatprep.subr.mxu0 0.0
        %1610 = vmatpush1.msra.mxu0 0.0
        %1611 = vmatprep.subr.mxu0 0.0
        %1612 = vmatpush1.msra.mxu0 0.0
        %1613 = vmatprep.subr.mxu0 0.0
        %1614 = vmatpush1.msra.mxu0 0.0
        %1615 = vmatprep.subr.mxu0 0.0
        %1616 = vmatpush1.msra.mxu0 0.0
        %1617 = vmatprep.subr.mxu0 0.0
        %1618 = vmatpush1.msra.mxu0 0.0
        %1619 = vmatprep.subr.mxu0 0.0
        %1620 = vmatpush1.msra.mxu0 0.0
        %1621 = vmatprep.mubr.f32.mxu0 0.0
        %1622 = vmatmul.mubr.f32.gmra.mrb[0].mxu0 %v1549
        %v1623 = vpop.f32.mrb[0].mxu0
        %v1624 = vadd.f32 0.0, %v1623
        %v1625 = vpop.f32.mrb[0].mxu0
        %1626 = vmatprep.mubr.f32.mxu0 0.0
        %1627 = vmatmul.mubr.f32.gmra.mrb[0].mxu0 %v1552
        %v1628 = vpop.f32.mrb[0].mxu0
        %v1629 = vadd.f32 0.0, %v1628
        %v1630 = vpop.f32.mrb[0].mxu0
        %1631 = vmatprep.mubr.f32.mxu0 0.0
        %1632 = vmatmul.mubr.f32.gmra.mrb[0].mxu0 %v1555
        %v1633 = vpop.f32.mrb[0].mxu0
        %v1634 = vadd.f32 0.0, %v1633
        %v1635 = vpop.f32.mrb[0].mxu0
        %1636 = vdwg.mxu0
        %s1637 = scalar_lea.vmem [#allocation3], 24
        %1638 = vst.msk [vmem:[%s1637] sm:$0xff] %vm774, %v1624
        %1639 = vst.msk [vmem:[%s1637 + $0x8] sm:$0xff] %vm774, %v1629
        %1640 = vst.msk [vmem:[%s1637 + $0x10] sm:$0xf] %vm777, %v1634
        %1641 = vmatprep.subr.mxu0 0.0
        %1642 = vmatpush1.msra.mxu0 %v1466
        %1643 = vmatprep.subr.mxu0 0.0
        %1644 = vmatpush1.msra.mxu0 %v1467
        %1645 = vmatprep.subr.mxu0 0.0
        %1646 = vmatpush1.msra.mxu0 0.0
        %1647 = vmatprep.subr.mxu0 0.0
        %1648 = vmatpush1.msra.mxu0 0.0
        %1649 = vmatprep.subr.mxu0 0.0
        %1650 = vmatpush1.msra.mxu0 0.0
        %1651 = vmatprep.subr.mxu0 0.0
        %1652 = vmatpush1.msra.mxu0 0.0
        %1653 = vmatprep.subr.mxu0 0.0
        %1654 = vmatpush1.msra.mxu0 0.0
        %1655 = vmatprep.subr.mxu0 0.0
        %1656 = vmatpush1.msra.mxu0 0.0
        %1657 = vmatprep.subr.mxu0 0.0
        %1658 = vmatpush1.msra.mxu0 0.0
        %1659 = vmatprep.subr.mxu0 0.0
        %1660 = vmatpush1.msra.mxu0 0.0
        %1661 = vmatprep.subr.mxu0 0.0
        %1662 = vmatpush1.msra.mxu0 0.0
        %1663 = vmatprep.subr.mxu0 0.0
        %1664 = vmatpush1.msra.mxu0 0.0
        %1665 = vmatprep.subr.mxu0 0.0
        %1666 = vmatpush1.msra.mxu0 0.0
        %1667 = vmatprep.subr.mxu0 0.0
        %1668 = vmatpush1.msra.mxu0 0.0
        %1669 = vmatprep.subr.mxu0 0.0
        %1670 = vmatpush1.msra.mxu0 0.0
        %1671 = vmatprep.subr.mxu0 0.0
        %1672 = vmatpush1.msra.mxu0 0.0
        %1673 = vmatprep.subr.mxu0 0.0
        %1674 = vmatpush1.msra.mxu0 0.0
        %1675 = vmatprep.subr.mxu0 0.0
        %1676 = vmatpush1.msra.mxu0 0.0
        %1677 = vmatprep.subr.mxu0 0.0
        %1678 = vmatpush1.msra.mxu0 0.0
        %1679 = vmatprep.subr.mxu0 0.0
        %1680 = vmatpush1.msra.mxu0 0.0
        %1681 = vmatprep.subr.mxu0 0.0
        %1682 = vmatpush1.msra.mxu0 0.0
        %1683 = vmatprep.subr.mxu0 0.0
        %1684 = vmatpush1.msra.mxu0 0.0
        %1685 = vmatprep.subr.mxu0 0.0
        %1686 = vmatpush1.msra.mxu0 0.0
        %1687 = vmatprep.subr.mxu0 0.0
        %1688 = vmatpush1.msra.mxu0 0.0
        %1689 = vmatprep.subr.mxu0 0.0
        %1690 = vmatpush1.msra.mxu0 0.0
        %1691 = vmatprep.subr.mxu0 0.0
        %1692 = vmatpush1.msra.mxu0 0.0
        %1693 = vmatprep.subr.mxu0 0.0
        %1694 = vmatpush1.msra.mxu0 0.0
        %1695 = vmatprep.subr.mxu0 0.0
        %1696 = vmatpush1.msra.mxu0 0.0
        %1697 = vmatprep.subr.mxu0 0.0
        %1698 = vmatpush1.msra.mxu0 0.0
        %1699 = vmatprep.subr.mxu0 0.0
        %1700 = vmatpush1.msra.mxu0 0.0
        %1701 = vmatprep.subr.mxu0 0.0
        %1702 = vmatpush1.msra.mxu0 0.0
        %1703 = vmatprep.subr.mxu0 0.0
        %1704 = vmatpush1.msra.mxu0 0.0
        %1705 = vmatprep.mubr.f32.mxu0 0.0
        %1706 = vmatmul.mubr.f32.gmra.mrb[0].mxu0 %v597
        %v1707 = vpop.f32.mrb[0].mxu0
        %v1708 = vadd.f32 0.0, %v1707
        %v1709 = vpop.f32.mrb[0].mxu0
        %1710 = vmatprep.mubr.f32.mxu0 0.0
        %1711 = vmatmul.mubr.f32.gmra.mrb[0].mxu0 %v600
        %v1712 = vpop.f32.mrb[0].mxu0
        %v1713 = vadd.f32 0.0, %v1712
        %v1714 = vpop.f32.mrb[0].mxu0
        %1715 = vmatprep.mubr.f32.mxu0 0.0
        %1716 = vmatmul.mubr.f32.gmra.mrb[0].mxu0 %v603
        %v1717 = vpop.f32.mrb[0].mxu0
        %v1718 = vadd.f32 0.0, %v1717
        %v1719 = vpop.f32.mrb[0].mxu0
        %1720 = vdwg.mxu0
        %v1722 = vsel %vm595, %v1708, 0
        %v1725 = vsel %vm595, %v1713, 0
        %v1728 = vsel %vm595, %v1718, 0
        %1730 = vmatprep.subr.mxu0 0.0
        %1731 = vmatpush1.msra.mxu0 %v357
        %1732 = vmatprep.subr.mxu0 0.0
        %1733 = vmatpush1.msra.mxu0 %v358
        %1734 = vmatprep.subr.mxu0 0.0
        %1735 = vmatpush1.msra.mxu0 0.0
        %1736 = vmatprep.subr.mxu0 0.0
        %1737 = vmatpush1.msra.mxu0 0.0
        %1738 = vmatprep.subr.mxu0 0.0
        %1739 = vmatpush1.msra.mxu0 0.0
        %1740 = vmatprep.subr.mxu0 0.0
        %1741 = vmatpush1.msra.mxu0 0.0
        %1742 = vmatprep.subr.mxu0 0.0
        %1743 = vmatpush1.msra.mxu0 0.0
        %1744 = vmatprep.subr.mxu0 0.0
        %1745 = vmatpush1.msra.mxu0 0.0
        %1746 = vmatprep.subr.mxu0 0.0
        %1747 = vmatpush1.msra.mxu0 0.0
        %1748 = vmatprep.subr.mxu0 0.0
        %1749 = vmatpush1.msra.mxu0 0.0
        %1750 = vmatprep.subr.mxu0 0.0
        %1751 = vmatpush1.msra.mxu0 0.0
        %1752 = vmatprep.subr.mxu0 0.0
        %1753 = vmatpush1.msra.mxu0 0.0
        %1754 = vmatprep.subr.mxu0 0.0
        %1755 = vmatpush1.msra.mxu0 0.0
        %1756 = vmatprep.subr.mxu0 0.0
        %1757 = vmatpush1.msra.mxu0 0.0
        %1758 = vmatprep.subr.mxu0 0.0
        %1759 = vmatpush1.msra.mxu0 0.0
        %1760 = vmatprep.subr.mxu0 0.0
        %1761 = vmatpush1.msra.mxu0 0.0
        %1762 = vmatprep.subr.mxu0 0.0
        %1763 = vmatpush1.msra.mxu0 0.0
        %1764 = vmatprep.subr.mxu0 0.0
        %1765 = vmatpush1.msra.mxu0 0.0
        %1766 = vmatprep.subr.mxu0 0.0
        %1767 = vmatpush1.msra.mxu0 0.0
        %1768 = vmatprep.subr.mxu0 0.0
        %1769 = vmatpush1.msra.mxu0 0.0
        %1770 = vmatprep.subr.mxu0 0.0
        %1771 = vmatpush1.msra.mxu0 0.0
        %1772 = vmatprep.subr.mxu0 0.0
        %1773 = vmatpush1.msra.mxu0 0.0
        %1774 = vmatprep.subr.mxu0 0.0
        %1775 = vmatpush1.msra.mxu0 0.0
        %1776 = vmatprep.subr.mxu0 0.0
        %1777 = vmatpush1.msra.mxu0 0.0
        %1778 = vmatprep.subr.mxu0 0.0
        %1779 = vmatpush1.msra.mxu0 0.0
        %1780 = vmatprep.subr.mxu0 0.0
        %1781 = vmatpush1.msra.mxu0 0.0
        %1782 = vmatprep.subr.mxu0 0.0
        %1783 = vmatpush1.msra.mxu0 0.0
        %1784 = vmatprep.subr.mxu0 0.0
        %1785 = vmatpush1.msra.mxu0 0.0
        %1786 = vmatprep.subr.mxu0 0.0
        %1787 = vmatpush1.msra.mxu0 0.0
        %1788 = vmatprep.subr.mxu0 0.0
        %1789 = vmatpush1.msra.mxu0 0.0
        %1790 = vmatprep.subr.mxu0 0.0
        %1791 = vmatpush1.msra.mxu0 0.0
        %1792 = vmatprep.subr.mxu0 0.0
        %1793 = vmatpush1.msra.mxu0 0.0
        %1794 = vmatprep.mubr.f32.mxu0 0.0
        %1795 = vmatmul.mubr.f32.gmra.mrb[0].mxu0 %v1722
        %v1796 = vpop.f32.mrb[0].mxu0
        %v1797 = vadd.f32 0.0, %v1796
        %v1798 = vpop.f32.mrb[0].mxu0
        %1799 = vmatprep.mubr.f32.mxu0 0.0
        %1800 = vmatmul.mubr.f32.gmra.mrb[0].mxu0 %v1725
        %v1801 = vpop.f32.mrb[0].mxu0
        %v1802 = vadd.f32 0.0, %v1801
        %v1803 = vpop.f32.mrb[0].mxu0
        %1804 = vmatprep.mubr.f32.mxu0 0.0
        %1805 = vmatmul.mubr.f32.gmra.mrb[0].mxu0 %v1728
        %v1806 = vpop.f32.mrb[0].mxu0
        %v1807 = vadd.f32 0.0, %v1806
        %v1808 = vpop.f32.mrb[0].mxu0
        %1809 = vdwg.mxu0
        %s1810 = scalar_lea.vmem [#allocation4], 24
        %1811 = vst.msk [vmem:[%s1810] sm:$0xff] %vm774, %v1797
        %1812 = vst.msk [vmem:[%s1810 + $0x8] sm:$0xff] %vm774, %v1802
        %1813 = vst.msk [vmem:[%s1810 + $0x10] sm:$0xf] %vm777, %v1807
        %s1814 = scalar_lea.vmem %s350, 8
        %v1815 = vld [vmem:[%s1814] sm:$0xff]
        %1816 = vmatprep.subr.mxu0 0.0
        %1817 = vmatpush1.msra.mxu0 %v1815
        %1818 = vmatprep.subr.mxu0 0.0
        %1819 = vmatpush1.msra.mxu0 0.0
        %1820 = vmatprep.subr.mxu0 0.0
        %1821 = vmatpush1.msra.mxu0 0.0
        %1822 = vmatprep.subr.mxu0 0.0
        %1823 = vmatpush1.msra.mxu0 0.0
        %1824 = vmatprep.subr.mxu0 0.0
        %1825 = vmatpush1.msra.mxu0 0.0
        %1826 = vmatprep.subr.mxu0 0.0
        %1827 = vmatpush1.msra.mxu0 0.0
        %1828 = vmatprep.subr.mxu0 0.0
        %1829 = vmatpush1.msra.mxu0 0.0
        %1830 = vmatprep.subr.mxu0 0.0
        %1831 = vmatpush1.msra.mxu0 0.0
        %1832 = vmatprep.subr.mxu0 0.0
        %1833 = vmatpush1.msra.mxu0 0.0
        %1834 = vmatprep.subr.mxu0 0.0
        %1835 = vmatpush1.msra.mxu0 0.0
        %1836 = vmatprep.subr.mxu0 0.0
        %1837 = vmatpush1.msra.mxu0 0.0
        %1838 = vmatprep.subr.mxu0 0.0
        %1839 = vmatpush1.msra.mxu0 0.0
        %1840 = vmatprep.subr.mxu0 0.0
        %1841 = vmatpush1.msra.mxu0 0.0
        %1842 = vmatprep.subr.mxu0 0.0
        %1843 = vmatpush1.msra.mxu0 0.0
        %1844 = vmatprep.subr.mxu0 0.0
        %1845 = vmatpush1.msra.mxu0 0.0
        %1846 = vmatprep.subr.mxu0 0.0
        %1847 = vmatpush1.msra.mxu0 0.0
        %1848 = vmatprep.subr.mxu0 0.0
        %1849 = vmatpush1.msra.mxu0 0.0
        %1850 = vmatprep.subr.mxu0 0.0
        %1851 = vmatpush1.msra.mxu0 0.0
        %1852 = vmatprep.subr.mxu0 0.0
        %1853 = vmatpush1.msra.mxu0 0.0
        %1854 = vmatprep.subr.mxu0 0.0
        %1855 = vmatpush1.msra.mxu0 0.0
        %1856 = vmatprep.subr.mxu0 0.0
        %1857 = vmatpush1.msra.mxu0 0.0
        %1858 = vmatprep.subr.mxu0 0.0
        %1859 = vmatpush1.msra.mxu0 0.0
        %1860 = vmatprep.subr.mxu0 0.0
        %1861 = vmatpush1.msra.mxu0 0.0
        %1862 = vmatprep.subr.mxu0 0.0
        %1863 = vmatpush1.msra.mxu0 0.0
        %1864 = vmatprep.subr.mxu0 0.0
        %1865 = vmatpush1.msra.mxu0 0.0
        %1866 = vmatprep.subr.mxu0 0.0
        %1867 = vmatpush1.msra.mxu0 0.0
        %1868 = vmatprep.subr.mxu0 0.0
        %1869 = vmatpush1.msra.mxu0 0.0
        %1870 = vmatprep.subr.mxu0 0.0
        %1871 = vmatpush1.msra.mxu0 0.0
        %1872 = vmatprep.subr.mxu0 0.0
        %1873 = vmatpush1.msra.mxu0 0.0
        %1874 = vmatprep.subr.mxu0 0.0
        %1875 = vmatpush1.msra.mxu0 0.0
        %1876 = vmatprep.subr.mxu0 0.0
        %1877 = vmatpush1.msra.mxu0 0.0
        %1878 = vmatprep.subr.mxu0 0.0
        %1879 = vmatpush1.msra.mxu0 0.0
        %1880 = vmatprep.mubr.f32.mxu0 0.0
        %1881 = vmatmul.mubr.f32.gmra.mrb[0].mxu0 %v954
        %v1882 = vpop.f32.mrb[0].mxu0
        %v1883 = vadd.f32 0.0, %v1882
        %v1884 = vpop.f32.mrb[0].mxu0
        %1885 = vmatprep.mubr.f32.mxu0 0.0
        %1886 = vmatmul.mubr.f32.gmra.mrb[0].mxu0 %v957
        %v1887 = vpop.f32.mrb[0].mxu0
        %v1888 = vadd.f32 0.0, %v1887
        %v1889 = vpop.f32.mrb[0].mxu0
        %1890 = vdwg.mxu0
        %v1892 = vsel %vm952, %v1883, 0
        %v1895 = vsel %vm952, %v1888, 0
        %1897 = vmatprep.subr.mxu0 0.0
        %1898 = vmatpush1.msra.mxu0 %v353
        %1899 = vmatprep.subr.mxu0 0.0
        %1900 = vmatpush1.msra.mxu0 0.0
        %1901 = vmatprep.subr.mxu0 0.0
        %1902 = vmatpush1.msra.mxu0 0.0
        %1903 = vmatprep.subr.mxu0 0.0
        %1904 = vmatpush1.msra.mxu0 0.0
        %1905 = vmatprep.subr.mxu0 0.0
        %1906 = vmatpush1.msra.mxu0 0.0
        %1907 = vmatprep.subr.mxu0 0.0
        %1908 = vmatpush1.msra.mxu0 0.0
        %1909 = vmatprep.subr.mxu0 0.0
        %1910 = vmatpush1.msra.mxu0 0.0
        %1911 = vmatprep.subr.mxu0 0.0
        %1912 = vmatpush1.msra.mxu0 0.0
        %1913 = vmatprep.subr.mxu0 0.0
        %1914 = vmatpush1.msra.mxu0 0.0
        %1915 = vmatprep.subr.mxu0 0.0
        %1916 = vmatpush1.msra.mxu0 0.0
        %1917 = vmatprep.subr.mxu0 0.0
        %1918 = vmatpush1.msra.mxu0 0.0
        %1919 = vmatprep.subr.mxu0 0.0
        %1920 = vmatpush1.msra.mxu0 0.0
        %1921 = vmatprep.subr.mxu0 0.0
        %1922 = vmatpush1.msra.mxu0 0.0
        %1923 = vmatprep.subr.mxu0 0.0
        %1924 = vmatpush1.msra.mxu0 0.0
        %1925 = vmatprep.subr.mxu0 0.0
        %1926 = vmatpush1.msra.mxu0 0.0
        %1927 = vmatprep.subr.mxu0 0.0
        %1928 = vmatpush1.msra.mxu0 0.0
        %1929 = vmatprep.subr.mxu0 0.0
        %1930 = vmatpush1.msra.mxu0 0.0
        %1931 = vmatprep.subr.mxu0 0.0
        %1932 = vmatpush1.msra.mxu0 0.0
        %1933 = vmatprep.subr.mxu0 0.0
        %1934 = vmatpush1.msra.mxu0 0.0
        %1935 = vmatprep.subr.mxu0 0.0
        %1936 = vmatpush1.msra.mxu0 0.0
        %1937 = vmatprep.subr.mxu0 0.0
        %1938 = vmatpush1.msra.mxu0 0.0
        %1939 = vmatprep.subr.mxu0 0.0
        %1940 = vmatpush1.msra.mxu0 0.0
        %1941 = vmatprep.subr.mxu0 0.0
        %1942 = vmatpush1.msra.mxu0 0.0
        %1943 = vmatprep.subr.mxu0 0.0
        %1944 = vmatpush1.msra.mxu0 0.0
        %1945 = vmatprep.subr.mxu0 0.0
        %1946 = vmatpush1.msra.mxu0 0.0
        %1947 = vmatprep.subr.mxu0 0.0
        %1948 = vmatpush1.msra.mxu0 0.0
        %1949 = vmatprep.subr.mxu0 0.0
        %1950 = vmatpush1.msra.mxu0 0.0
        %1951 = vmatprep.subr.mxu0 0.0
        %1952 = vmatpush1.msra.mxu0 0.0
        %1953 = vmatprep.subr.mxu0 0.0
        %1954 = vmatpush1.msra.mxu0 0.0
        %1955 = vmatprep.subr.mxu0 0.0
        %1956 = vmatpush1.msra.mxu0 0.0
        %1957 = vmatprep.subr.mxu0 0.0
        %1958 = vmatpush1.msra.mxu0 0.0
        %1959 = vmatprep.subr.mxu0 0.0
        %1960 = vmatpush1.msra.mxu0 0.0
        %1961 = vmatprep.mubr.f32.mxu0 0.0
        %1962 = vmatmul.mubr.f32.gmra.mrb[0].mxu0 %v1892
        %v1963 = vpop.f32.mrb[0].mxu0
        %v1964 = vadd.f32 0.0, %v1963
        %v1965 = vpop.f32.mrb[0].mxu0
        %1966 = vmatprep.mubr.f32.mxu0 0.0
        %1967 = vmatmul.mubr.f32.gmra.mrb[0].mxu0 %v1895
        %v1968 = vpop.f32.mrb[0].mxu0
        %v1969 = vadd.f32 0.0, %v1968
        %v1970 = vpop.f32.mrb[0].mxu0
        %1971 = vdwg.mxu0
        %1974 = vrot.lane.b32.xlu0 %v1964, 1
        %v1975 = vpop.permute.xlu0 %1974
        %1976 = vrot.lane.b32.xlu0 %v1969, 1
        %v1977 = vpop.permute.xlu0 %1976
        %1980 = vst.msk [vmem:[#allocation2 + $0x1] sm:$0xff] %vm374, %v1975
        %1981 = vst.msk [vmem:[#allocation2 + $0x9] sm:$0xff] %vm374, %v1977
        %s1982 = sld [smem:[#allocation5 + $0x9]]
        %v1983 = vld [vmem:[#allocation2] sm:$0xff]
        %v1984 = vld [vmem:[#allocation2 + $0x8] sm:$0xff]
        %v1985 = vstv %s1982
        %v1986 = vmul.f32 %v1985, %v1983
        %v1987 = vmul.f32 %v1985, %v1984
        %v1988 = vadd.f32 %v1986, 0.0
        %v1989 = vadd.f32 %v1987, 0.0
        %s1990 = sld [smem:[#allocation5 + $0xa]]
        %v1991 = vstv %s1990
        %v1992 = vmul.f32 %v1991, %v1983
        %v1993 = vmul.f32 %v1991, %v1984
        %1996 = vrot.lane.b32.xlu0 %v1992, 127
        %v1997 = vpop.permute.xlu0 %1996
        %1998 = vrot.lane.b32.xlu0 %v1993, 127
        %v1999 = vpop.permute.xlu0 %1998
        %v2002 = vadd.f32 %v1988, %v1997
        %v2003 = vadd.f32 %v1989, %v1999
        %s2004 = sld [smem:[#allocation5 + $0xb]]
        %v2005 = vstv %s2004
        %v2006 = vmul.f32 %v2005, %v1983
        %v2007 = vmul.f32 %v2005, %v1984
        %2010 = vrot.lane.b32.xlu0 %v2006, 126
        %v2011 = vpop.permute.xlu0 %2010
        %2012 = vrot.lane.b32.xlu0 %v2007, 126
        %v2013 = vpop.permute.xlu0 %2012
        %v2016 = vadd.f32 %v2002, %v2011
        %v2017 = vadd.f32 %v2003, %v2013
        %s2018 = sld [smem:[#allocation5 + $0xc]]
        %v2019 = vld [vmem:[#allocation2 + $0x1] sm:$0xff]
        %v2020 = vld [vmem:[#allocation2 + $0x9] sm:$0xff]
        %v2021 = vstv %s2018
        %v2022 = vmul.f32 %v2021, %v2019
        %v2023 = vmul.f32 %v2021, %v2020
        %v2024 = vadd.f32 %v2016, %v2022
        %v2025 = vadd.f32 %v2017, %v2023
        %s2026 = sld [smem:[#allocation5 + $0xd]]
        %v2027 = vstv %s2026
        %v2028 = vmul.f32 %v2027, %v2019
        %v2029 = vmul.f32 %v2027, %v2020
        %2032 = vrot.lane.b32.xlu0 %v2028, 127
        %v2033 = vpop.permute.xlu0 %2032
        %2034 = vrot.lane.b32.xlu0 %v2029, 127
        %v2035 = vpop.permute.xlu0 %2034
        %v2038 = vadd.f32 %v2024, %v2033
        %v2039 = vadd.f32 %v2025, %v2035
        %s2040 = sld [smem:[#allocation5 + $0xe]]
        %v2041 = vstv %s2040
        %v2042 = vmul.f32 %v2041, %v2019
        %v2043 = vmul.f32 %v2041, %v2020
        %2046 = vrot.lane.b32.xlu0 %v2042, 126
        %v2047 = vpop.permute.xlu0 %2046
        %2048 = vrot.lane.b32.xlu0 %v2043, 126
        %v2049 = vpop.permute.xlu0 %2048
        %v2052 = vadd.f32 %v2038, %v2047
        %v2053 = vadd.f32 %v2039, %v2049
        %s2054 = sld [smem:[#allocation5 + $0xf]]
        %v2055 = vld [vmem:[#allocation2 + $0x2] sm:$0xff]
        %v2056 = vld [vmem:[#allocation2 + $0xa] sm:$0xff]
        %v2057 = vstv %s2054
        %v2058 = vmul.f32 %v2057, %v2055
        %v2059 = vmul.f32 %v2057, %v2056
        %v2060 = vadd.f32 %v2052, %v2058
        %v2061 = vadd.f32 %v2053, %v2059
        %s2062 = sld [smem:[#allocation5 + $0x10]]
        %v2063 = vstv %s2062
        %v2064 = vmul.f32 %v2063, %v2055
        %v2065 = vmul.f32 %v2063, %v2056
        %2068 = vrot.lane.b32.xlu0 %v2064, 127
        %v2069 = vpop.permute.xlu0 %2068
        %2070 = vrot.lane.b32.xlu0 %v2065, 127
        %v2071 = vpop.permute.xlu0 %2070
        %v2074 = vadd.f32 %v2060, %v2069
        %v2075 = vadd.f32 %v2061, %v2071
        %s2076 = sld [smem:[#allocation5 + $0x11]]
        %v2077 = vstv %s2076
        %v2078 = vmul.f32 %v2077, %v2055
        %v2079 = vmul.f32 %v2077, %v2056
        %2082 = vrot.lane.b32.xlu0 %v2078, 126
        %v2083 = vpop.permute.xlu0 %2082
        %2084 = vrot.lane.b32.xlu0 %v2079, 126
        %v2085 = vpop.permute.xlu0 %2084
        %v2088 = vadd.f32 %v2074, %v2083
        %v2089 = vadd.f32 %v2075, %v2085
        %s2090 = sld [smem:[#allocation8 + $0x1]]
        %v2091 = vstv %s2090
        %v2092 = vadd.f32 %v2088, %v2091
        %v2093 = vadd.f32 %v2089, %v2091
        %s2094 = scalar_lea.vmem %s345, 32
        %v2095 = vld [vmem:[%s2094] sm:$0xff]
        %v2096 = vld [vmem:[%s2094 + $0x8] sm:$0xff]
        %2099 = vrot.lane.b32.xlu0 %v2095, 1
        %v2100 = vpop.permute.xlu0 %2099
        %2101 = vrot.lane.b32.xlu0 %v2096, 1
        %v2102 = vpop.permute.xlu0 %2101
        %2105 = vst.msk [vmem:[#allocation2 + $0x1] sm:$0xff] %vm374, %v2100
        %2106 = vst.msk [vmem:[#allocation2 + $0x9] sm:$0xff] %vm374, %v2102
        %v2107 = vld [vmem:[#allocation2] sm:$0xff]
        %v2108 = vld [vmem:[#allocation2 + $0x8] sm:$0xff]
        %s2109 = sld [smem:[#allocation5 + $0x36]]
        %v2110 = vstv %s2109
        %v2111 = vmul.f32 %v2110, %v2107
        %v2112 = vmul.f32 %v2110, %v2108
        %v2113 = vadd.f32 %v2111, 0.0
        %v2114 = vadd.f32 %v2112, 0.0
        %s2115 = sld [smem:[#allocation5 + $0x5a]]
        %v2116 = vstv %s2115
        %v2117 = vmul.f32 %v2116, %v2107
        %v2118 = vmul.f32 %v2116, %v2108
        %v2119 = vadd.f32 %v2117, 0.0
        %v2120 = vadd.f32 %v2118, 0.0
        %s2121 = sld [smem:[#allocation5 + $0x37]]
        %v2122 = vstv %s2121
        %v2123 = vmul.f32 %v2122, %v2107
        %v2124 = vmul.f32 %v2122, %v2108
        %2127 = vrot.lane.b32.xlu0 %v2123, 127
        %v2128 = vpop.permute.xlu0 %2127
        %2129 = vrot.lane.b32.xlu0 %v2124, 127
        %v2130 = vpop.permute.xlu0 %2129
        %v2133 = vadd.f32 %v2113, %v2128
        %v2134 = vadd.f32 %v2114, %v2130
        %s2135 = sld [smem:[#allocation5 + $0x5b]]
        %v2136 = vstv %s2135
        %v2137 = vmul.f32 %v2136, %v2107
        %v2138 = vmul.f32 %v2136, %v2108
        %2141 = vrot.lane.b32.xlu0 %v2137, 127
        %v2142 = vpop.permute.xlu0 %2141
        %2143 = vrot.lane.b32.xlu0 %v2138, 127
        %v2144 = vpop.permute.xlu0 %2143
        %v2147 = vadd.f32 %v2119, %v2142
        %v2148 = vadd.f32 %v2120, %v2144
        %s2149 = sld [smem:[#allocation5 + $0x38]]
        %v2150 = vstv %s2149
        %v2151 = vmul.f32 %v2150, %v2107
        %v2152 = vmul.f32 %v2150, %v2108
        %2155 = vrot.lane.b32.xlu0 %v2151, 126
        %v2156 = vpop.permute.xlu0 %2155
        %2157 = vrot.lane.b32.xlu0 %v2152, 126
        %v2158 = vpop.permute.xlu0 %2157
        %v2161 = vadd.f32 %v2133, %v2156
        %v2162 = vadd.f32 %v2134, %v2158
        %s2163 = sld [smem:[#allocation5 + $0x5c]]
        %v2164 = vstv %s2163
        %v2165 = vmul.f32 %v2164, %v2107
        %v2166 = vmul.f32 %v2164, %v2108
        %2169 = vrot.lane.b32.xlu0 %v2165, 126
        %v2170 = vpop.permute.xlu0 %2169
        %2171 = vrot.lane.b32.xlu0 %v2166, 126
        %v2172 = vpop.permute.xlu0 %2171
        %v2175 = vadd.f32 %v2147, %v2170
        %v2176 = vadd.f32 %v2148, %v2172
        %v2177 = vld [vmem:[#allocation2 + $0x1] sm:$0xff]
        %v2178 = vld [vmem:[#allocation2 + $0x9] sm:$0xff]
        %s2179 = sld [smem:[#allocation5 + $0x39]]
        %v2180 = vstv %s2179
        %v2181 = vmul.f32 %v2180, %v2177
        %v2182 = vmul.f32 %v2180, %v2178
        %v2183 = vadd.f32 %v2161, %v2181
        %v2184 = vadd.f32 %v2162, %v2182
        %s2185 = sld [smem:[#allocation5 + $0x5d]]
        %v2186 = vstv %s2185
        %v2187 = vmul.f32 %v2186, %v2177
        %v2188 = vmul.f32 %v2186, %v2178
        %v2189 = vadd.f32 %v2175, %v2187
        %v2190 = vadd.f32 %v2176, %v2188
        %s2191 = sld [smem:[#allocation5 + $0x3a]]
        %v2192 = vstv %s2191
        %v2193 = vmul.f32 %v2192, %v2177
        %v2194 = vmul.f32 %v2192, %v2178
        %2197 = vrot.lane.b32.xlu0 %v2193, 127
        %v2198 = vpop.permute.xlu0 %2197
        %2199 = vrot.lane.b32.xlu0 %v2194, 127
        %v2200 = vpop.permute.xlu0 %2199
        %v2203 = vadd.f32 %v2183, %v2198
        %v2204 = vadd.f32 %v2184, %v2200
        %s2205 = sld [smem:[#allocation5 + $0x5e]]
        %v2206 = vstv %s2205
        %v2207 = vmul.f32 %v2206, %v2177
        %v2208 = vmul.f32 %v2206, %v2178
        %2211 = vrot.lane.b32.xlu0 %v2207, 127
        %v2212 = vpop.permute.xlu0 %2211
        %2213 = vrot.lane.b32.xlu0 %v2208, 127
        %v2214 = vpop.permute.xlu0 %2213
        %v2217 = vadd.f32 %v2189, %v2212
        %v2218 = vadd.f32 %v2190, %v2214
        %s2219 = sld [smem:[#allocation5 + $0x3b]]
        %v2220 = vstv %s2219
        %v2221 = vmul.f32 %v2220, %v2177
        %v2222 = vmul.f32 %v2220, %v2178
        %2225 = vrot.lane.b32.xlu0 %v2221, 126
        %v2226 = vpop.permute.xlu0 %2225
        %2227 = vrot.lane.b32.xlu0 %v2222, 126
        %v2228 = vpop.permute.xlu0 %2227
        %v2231 = vadd.f32 %v2203, %v2226
        %v2232 = vadd.f32 %v2204, %v2228
        %s2233 = sld [smem:[#allocation5 + $0x5f]]
        %v2234 = vstv %s2233
        %v2235 = vmul.f32 %v2234, %v2177
        %v2236 = vmul.f32 %v2234, %v2178
        %2239 = vrot.lane.b32.xlu0 %v2235, 126
        %v2240 = vpop.permute.xlu0 %2239
        %2241 = vrot.lane.b32.xlu0 %v2236, 126
        %v2242 = vpop.permute.xlu0 %2241
        %v2245 = vadd.f32 %v2217, %v2240
        %v2246 = vadd.f32 %v2218, %v2242
        %v2247 = vld [vmem:[#allocation2 + $0x2] sm:$0xff]
        %v2248 = vld [vmem:[#allocation2 + $0xa] sm:$0xff]
        %s2249 = sld [smem:[#allocation5 + $0x3c]]
        %v2250 = vstv %s2249
        %v2251 = vmul.f32 %v2250, %v2247
        %v2252 = vmul.f32 %v2250, %v2248
        %v2253 = vadd.f32 %v2231, %v2251
        %v2254 = vadd.f32 %v2232, %v2252
        %s2255 = sld [smem:[#allocation5 + $0x60]]
        %v2256 = vstv %s2255
        %v2257 = vmul.f32 %v2256, %v2247
        %v2258 = vmul.f32 %v2256, %v2248
        %v2259 = vadd.f32 %v2245, %v2257
        %v2260 = vadd.f32 %v2246, %v2258
        %s2261 = sld [smem:[#allocation5 + $0x3d]]
        %v2262 = vstv %s2261
        %v2263 = vmul.f32 %v2262, %v2247
        %v2264 = vmul.f32 %v2262, %v2248
        %2267 = vrot.lane.b32.xlu0 %v2263, 127
        %v2268 = vpop.permute.xlu0 %2267
        %2269 = vrot.lane.b32.xlu0 %v2264, 127
        %v2270 = vpop.permute.xlu0 %2269
        %v2273 = vadd.f32 %v2253, %v2268
        %v2274 = vadd.f32 %v2254, %v2270
        %s2275 = sld [smem:[#allocation5 + $0x61]]
        %v2276 = vstv %s2275
        %v2277 = vmul.f32 %v2276, %v2247
        %v2278 = vmul.f32 %v2276, %v2248
        %2281 = vrot.lane.b32.xlu0 %v2277, 127
        %v2282 = vpop.permute.xlu0 %2281
        %2283 = vrot.lane.b32.xlu0 %v2278, 127
        %v2284 = vpop.permute.xlu0 %2283
        %v2287 = vadd.f32 %v2259, %v2282
        %v2288 = vadd.f32 %v2260, %v2284
        %s2289 = sld [smem:[#allocation5 + $0x3e]]
        %v2290 = vstv %s2289
        %v2291 = vmul.f32 %v2290, %v2247
        %v2292 = vmul.f32 %v2290, %v2248
        %2295 = vrot.lane.b32.xlu0 %v2291, 126
        %v2296 = vpop.permute.xlu0 %2295
        %2297 = vrot.lane.b32.xlu0 %v2292, 126
        %v2298 = vpop.permute.xlu0 %2297
        %v2301 = vadd.f32 %v2273, %v2296
        %v2302 = vadd.f32 %v2274, %v2298
        %s2303 = sld [smem:[#allocation5 + $0x62]]
        %v2304 = vstv %s2303
        %v2305 = vmul.f32 %v2304, %v2247
        %v2306 = vmul.f32 %v2304, %v2248
        %2309 = vrot.lane.b32.xlu0 %v2305, 126
        %v2310 = vpop.permute.xlu0 %2309
        %2311 = vrot.lane.b32.xlu0 %v2306, 126
        %v2312 = vpop.permute.xlu0 %2311
        %v2315 = vadd.f32 %v2287, %v2310
        %v2316 = vadd.f32 %v2288, %v2312
        %s2317 = sld [smem:[#allocation8 + $0x6]]
        %v2318 = vstv %s2317
        %v2319 = vadd.f32 %v2301, %v2318
        %v2320 = vadd.f32 %v2302, %v2318
        %s2321 = sld [smem:[#allocation8 + $0xa]]
        %v2322 = vstv %s2321
        %v2323 = vadd.f32 %v2315, %v2322
        %v2324 = vadd.f32 %v2316, %v2322
        %2325 = vmatprep.subr.mxu0 0.0
        %2326 = vmatpush1.msra.mxu0 %v2319
        %2327 = vmatprep.subr.mxu0 0.0
        %2328 = vmatpush1.msra.mxu0 %v2320
        %2329 = vmatprep.subr.mxu0 0.0
        %2330 = vmatpush1.msra.mxu0 0.0
        %2331 = vmatprep.subr.mxu0 0.0
        %2332 = vmatpush1.msra.mxu0 0.0
        %2333 = vmatprep.subr.mxu0 0.0
        %2334 = vmatpush1.msra.mxu0 0.0
        %2335 = vmatprep.subr.mxu0 0.0
        %2336 = vmatpush1.msra.mxu0 0.0
        %2337 = vmatprep.subr.mxu0 0.0
        %2338 = vmatpush1.msra.mxu0 0.0
        %2339 = vmatprep.subr.mxu0 0.0
        %2340 = vmatpush1.msra.mxu0 0.0
        %2341 = vmatprep.subr.mxu0 0.0
        %2342 = vmatpush1.msra.mxu0 0.0
        %2343 = vmatprep.subr.mxu0 0.0
        %2344 = vmatpush1.msra.mxu0 0.0
        %2345 = vmatprep.subr.mxu0 0.0
        %2346 = vmatpush1.msra.mxu0 0.0
        %2347 = vmatprep.subr.mxu0 0.0
        %2348 = vmatpush1.msra.mxu0 0.0
        %2349 = vmatprep.subr.mxu0 0.0
        %2350 = vmatpush1.msra.mxu0 0.0
        %2351 = vmatprep.subr.mxu0 0.0
        %2352 = vmatpush1.msra.mxu0 0.0
        %2353 = vmatprep.subr.mxu0 0.0
        %2354 = vmatpush1.msra.mxu0 0.0
        %2355 = vmatprep.subr.mxu0 0.0
        %2356 = vmatpush1.msra.mxu0 0.0
        %2357 = vmatprep.subr.mxu0 0.0
        %2358 = vmatpush1.msra.mxu0 0.0
        %2359 = vmatprep.subr.mxu0 0.0
        %2360 = vmatpush1.msra.mxu0 0.0
        %2361 = vmatprep.subr.mxu0 0.0
        %2362 = vmatpush1.msra.mxu0 0.0
        %2363 = vmatprep.subr.mxu0 0.0
        %2364 = vmatpush1.msra.mxu0 0.0
        %2365 = vmatprep.subr.mxu0 0.0
        %2366 = vmatpush1.msra.mxu0 0.0
        %2367 = vmatprep.subr.mxu0 0.0
        %2368 = vmatpush1.msra.mxu0 0.0
        %2369 = vmatprep.subr.mxu0 0.0
        %2370 = vmatpush1.msra.mxu0 0.0
        %2371 = vmatprep.subr.mxu0 0.0
        %2372 = vmatpush1.msra.mxu0 0.0
        %2373 = vmatprep.subr.mxu0 0.0
        %2374 = vmatpush1.msra.mxu0 0.0
        %2375 = vmatprep.subr.mxu0 0.0
        %2376 = vmatpush1.msra.mxu0 0.0
        %2377 = vmatprep.subr.mxu0 0.0
        %2378 = vmatpush1.msra.mxu0 0.0
        %2379 = vmatprep.subr.mxu0 0.0
        %2380 = vmatpush1.msra.mxu0 0.0
        %2381 = vmatprep.subr.mxu0 0.0
        %2382 = vmatpush1.msra.mxu0 0.0
        %2383 = vmatprep.subr.mxu0 0.0
        %2384 = vmatpush1.msra.mxu0 0.0
        %2385 = vmatprep.subr.mxu0 0.0
        %2386 = vmatpush1.msra.mxu0 0.0
        %2387 = vmatprep.subr.mxu0 0.0
        %2388 = vmatpush1.msra.mxu0 0.0
        %2389 = vmatprep.mubr.f32.mxu0 0.0
        %2390 = vmatmul.mubr.f32.gmra.mrb[0].mxu0 %v597
        %v2391 = vpop.f32.mrb[0].mxu0
        %v2392 = vadd.f32 0.0, %v2391
        %v2393 = vpop.f32.mrb[0].mxu0
        %2394 = vmatprep.mubr.f32.mxu0 0.0
        %2395 = vmatmul.mubr.f32.gmra.mrb[0].mxu0 %v600
        %v2396 = vpop.f32.mrb[0].mxu0
        %v2397 = vadd.f32 0.0, %v2396
        %v2398 = vpop.f32.mrb[0].mxu0
        %2399 = vmatprep.mubr.f32.mxu0 0.0
        %2400 = vmatmul.mubr.f32.gmra.mrb[0].mxu0 %v603
        %v2401 = vpop.f32.mrb[0].mxu0
        %v2402 = vadd.f32 0.0, %v2401
        %v2403 = vpop.f32.mrb[0].mxu0
        %2404 = vdwg.mxu0
        %v2406 = vsel %vm595, %v2392, 0
        %v2409 = vsel %vm595, %v2397, 0
        %v2412 = vsel %vm595, %v2402, 0
        %2414 = vmatprep.subr.mxu0 0.0
        %2415 = vmatpush1.msra.mxu0 %v357
        %2416 = vmatprep.subr.mxu0 0.0
        %2417 = vmatpush1.msra.mxu0 %v358
        %2418 = vmatprep.subr.mxu0 0.0
        %2419 = vmatpush1.msra.mxu0 0.0
        %2420 = vmatprep.subr.mxu0 0.0
        %2421 = vmatpush1.msra.mxu0 0.0
        %2422 = vmatprep.subr.mxu0 0.0
        %2423 = vmatpush1.msra.mxu0 0.0
        %2424 = vmatprep.subr.mxu0 0.0
        %2425 = vmatpush1.msra.mxu0 0.0
        %2426 = vmatprep.subr.mxu0 0.0
        %2427 = vmatpush1.msra.mxu0 0.0
        %2428 = vmatprep.subr.mxu0 0.0
        %2429 = vmatpush1.msra.mxu0 0.0
        %2430 = vmatprep.subr.mxu0 0.0
        %2431 = vmatpush1.msra.mxu0 0.0
        %2432 = vmatprep.subr.mxu0 0.0
        %2433 = vmatpush1.msra.mxu0 0.0
        %2434 = vmatprep.subr.mxu0 0.0
        %2435 = vmatpush1.msra.mxu0 0.0
        %2436 = vmatprep.subr.mxu0 0.0
        %2437 = vmatpush1.msra.mxu0 0.0
        %2438 = vmatprep.subr.mxu0 0.0
        %2439 = vmatpush1.msra.mxu0 0.0
        %2440 = vmatprep.subr.mxu0 0.0
        %2441 = vmatpush1.msra.mxu0 0.0
        %2442 = vmatprep.subr.mxu0 0.0
        %2443 = vmatpush1.msra.mxu0 0.0
        %2444 = vmatprep.subr.mxu0 0.0
        %2445 = vmatpush1.msra.mxu0 0.0
        %2446 = vmatprep.subr.mxu0 0.0
        %2447 = vmatpush1.msra.mxu0 0.0
        %2448 = vmatprep.subr.mxu0 0.0
        %2449 = vmatpush1.msra.mxu0 0.0
        %2450 = vmatprep.subr.mxu0 0.0
        %2451 = vmatpush1.msra.mxu0 0.0
        %2452 = vmatprep.subr.mxu0 0.0
        %2453 = vmatpush1.msra.mxu0 0.0
        %2454 = vmatprep.subr.mxu0 0.0
        %2455 = vmatpush1.msra.mxu0 0.0
        %2456 = vmatprep.subr.mxu0 0.0
        %2457 = vmatpush1.msra.mxu0 0.0
        %2458 = vmatprep.subr.mxu0 0.0
        %2459 = vmatpush1.msra.mxu0 0.0
        %2460 = vmatprep.subr.mxu0 0.0
        %2461 = vmatpush1.msra.mxu0 0.0
        %2462 = vmatprep.subr.mxu0 0.0
        %2463 = vmatpush1.msra.mxu0 0.0
        %2464 = vmatprep.subr.mxu0 0.0
        %2465 = vmatpush1.msra.mxu0 0.0
        %2466 = vmatprep.subr.mxu0 0.0
        %2467 = vmatpush1.msra.mxu0 0.0
        %2468 = vmatprep.subr.mxu0 0.0
        %2469 = vmatpush1.msra.mxu0 0.0
        %2470 = vmatprep.subr.mxu0 0.0
        %2471 = vmatpush1.msra.mxu0 0.0
        %2472 = vmatprep.subr.mxu0 0.0
        %2473 = vmatpush1.msra.mxu0 0.0
        %2474 = vmatprep.subr.mxu0 0.0
        %2475 = vmatpush1.msra.mxu0 0.0
        %2476 = vmatprep.subr.mxu0 0.0
        %2477 = vmatpush1.msra.mxu0 0.0
        %2478 = vmatprep.mubr.f32.mxu0 0.0
        %2479 = vmatmul.mubr.f32.gmra.mrb[0].mxu0 %v2406
        %v2480 = vpop.f32.mrb[0].mxu0
        %v2481 = vadd.f32 0.0, %v2480
        %v2482 = vpop.f32.mrb[0].mxu0
        %2483 = vmatprep.mubr.f32.mxu0 0.0
        %2484 = vmatmul.mubr.f32.gmra.mrb[0].mxu0 %v2409
        %v2485 = vpop.f32.mrb[0].mxu0
        %v2486 = vadd.f32 0.0, %v2485
        %v2487 = vpop.f32.mrb[0].mxu0
        %2488 = vmatprep.mubr.f32.mxu0 0.0
        %2489 = vmatmul.mubr.f32.gmra.mrb[0].mxu0 %v2412
        %v2490 = vpop.f32.mrb[0].mxu0
        %v2491 = vadd.f32 0.0, %v2490
        %v2492 = vpop.f32.mrb[0].mxu0
        %2493 = vdwg.mxu0
        %s2494 = scalar_lea.vmem [#allocation3], 48
        %2495 = vst.msk [vmem:[%s2494] sm:$0xff] %vm774, %v2481
        %2496 = vst.msk [vmem:[%s2494 + $0x8] sm:$0xff] %vm774, %v2486
        %2497 = vst.msk [vmem:[%s2494 + $0x10] sm:$0xf] %vm777, %v2491
        %2498 = vmatprep.subr.mxu0 0.0
        %2499 = vmatpush1.msra.mxu0 %v2323
        %2500 = vmatprep.subr.mxu0 0.0
        %2501 = vmatpush1.msra.mxu0 %v2324
        %2502 = vmatprep.subr.mxu0 0.0
        %2503 = vmatpush1.msra.mxu0 0.0
        %2504 = vmatprep.subr.mxu0 0.0
        %2505 = vmatpush1.msra.mxu0 0.0
        %2506 = vmatprep.subr.mxu0 0.0
        %2507 = vmatpush1.msra.mxu0 0.0
        %2508 = vmatprep.subr.mxu0 0.0
        %2509 = vmatpush1.msra.mxu0 0.0
        %2510 = vmatprep.subr.mxu0 0.0
        %2511 = vmatpush1.msra.mxu0 0.0
        %2512 = vmatprep.subr.mxu0 0.0
        %2513 = vmatpush1.msra.mxu0 0.0
        %2514 = vmatprep.subr.mxu0 0.0
        %2515 = vmatpush1.msra.mxu0 0.0
        %2516 = vmatprep.subr.mxu0 0.0
        %2517 = vmatpush1.msra.mxu0 0.0
        %2518 = vmatprep.subr.mxu0 0.0
        %2519 = vmatpush1.msra.mxu0 0.0
        %2520 = vmatprep.subr.mxu0 0.0
        %2521 = vmatpush1.msra.mxu0 0.0
        %2522 = vmatprep.subr.mxu0 0.0
        %2523 = vmatpush1.msra.mxu0 0.0
        %2524 = vmatprep.subr.mxu0 0.0
        %2525 = vmatpush1.msra.mxu0 0.0
        %2526 = vmatprep.subr.mxu0 0.0
        %2527 = vmatpush1.msra.mxu0 0.0
        %2528 = vmatprep.subr.mxu0 0.0
        %2529 = vmatpush1.msra.mxu0 0.0
        %2530 = vmatprep.subr.mxu0 0.0
        %2531 = vmatpush1.msra.mxu0 0.0
        %2532 = vmatprep.subr.mxu0 0.0
        %2533 = vmatpush1.msra.mxu0 0.0
        %2534 = vmatprep.subr.mxu0 0.0
        %2535 = vmatpush1.msra.mxu0 0.0
        %2536 = vmatprep.subr.mxu0 0.0
        %2537 = vmatpush1.msra.mxu0 0.0
        %2538 = vmatprep.subr.mxu0 0.0
        %2539 = vmatpush1.msra.mxu0 0.0
        %2540 = vmatprep.subr.mxu0 0.0
        %2541 = vmatpush1.msra.mxu0 0.0
        %2542 = vmatprep.subr.mxu0 0.0
        %2543 = vmatpush1.msra.mxu0 0.0
        %2544 = vmatprep.subr.mxu0 0.0
        %2545 = vmatpush1.msra.mxu0 0.0
        %2546 = vmatprep.subr.mxu0 0.0
        %2547 = vmatpush1.msra.mxu0 0.0
        %2548 = vmatprep.subr.mxu0 0.0
        %2549 = vmatpush1.msra.mxu0 0.0
        %2550 = vmatprep.subr.mxu0 0.0
        %2551 = vmatpush1.msra.mxu0 0.0
        %2552 = vmatprep.subr.mxu0 0.0
        %2553 = vmatpush1.msra.mxu0 0.0
        %2554 = vmatprep.subr.mxu0 0.0
        %2555 = vmatpush1.msra.mxu0 0.0
        %2556 = vmatprep.subr.mxu0 0.0
        %2557 = vmatpush1.msra.mxu0 0.0
        %2558 = vmatprep.subr.mxu0 0.0
        %2559 = vmatpush1.msra.mxu0 0.0
        %2560 = vmatprep.subr.mxu0 0.0
        %2561 = vmatpush1.msra.mxu0 0.0
        %2562 = vmatprep.mubr.f32.mxu0 0.0
        %2563 = vmatmul.mubr.f32.gmra.mrb[0].mxu0 %v597
        %v2564 = vpop.f32.mrb[0].mxu0
        %v2565 = vadd.f32 0.0, %v2564
        %v2566 = vpop.f32.mrb[0].mxu0
        %2567 = vmatprep.mubr.f32.mxu0 0.0
        %2568 = vmatmul.mubr.f32.gmra.mrb[0].mxu0 %v600
        %v2569 = vpop.f32.mrb[0].mxu0
        %v2570 = vadd.f32 0.0, %v2569
        %v2571 = vpop.f32.mrb[0].mxu0
        %2572 = vmatprep.mubr.f32.mxu0 0.0
        %2573 = vmatmul.mubr.f32.gmra.mrb[0].mxu0 %v603
        %v2574 = vpop.f32.mrb[0].mxu0
        %v2575 = vadd.f32 0.0, %v2574
        %v2576 = vpop.f32.mrb[0].mxu0
        %2577 = vdwg.mxu0
        %v2579 = vsel %vm595, %v2565, 0
        %v2582 = vsel %vm595, %v2570, 0
        %v2585 = vsel %vm595, %v2575, 0
        %2587 = vmatprep.subr.mxu0 0.0
        %2588 = vmatpush1.msra.mxu0 %v357
        %2589 = vmatprep.subr.mxu0 0.0
        %2590 = vmatpush1.msra.mxu0 %v358
        %2591 = vmatprep.subr.mxu0 0.0
        %2592 = vmatpush1.msra.mxu0 0.0
        %2593 = vmatprep.subr.mxu0 0.0
        %2594 = vmatpush1.msra.mxu0 0.0
        %2595 = vmatprep.subr.mxu0 0.0
        %2596 = vmatpush1.msra.mxu0 0.0
        %2597 = vmatprep.subr.mxu0 0.0
        %2598 = vmatpush1.msra.mxu0 0.0
        %2599 = vmatprep.subr.mxu0 0.0
        %2600 = vmatpush1.msra.mxu0 0.0
        %2601 = vmatprep.subr.mxu0 0.0
        %2602 = vmatpush1.msra.mxu0 0.0
        %2603 = vmatprep.subr.mxu0 0.0
        %2604 = vmatpush1.msra.mxu0 0.0
        %2605 = vmatprep.subr.mxu0 0.0
        %2606 = vmatpush1.msra.mxu0 0.0
        %2607 = vmatprep.subr.mxu0 0.0
        %2608 = vmatpush1.msra.mxu0 0.0
        %2609 = vmatprep.subr.mxu0 0.0
        %2610 = vmatpush1.msra.mxu0 0.0
        %2611 = vmatprep.subr.mxu0 0.0
        %2612 = vmatpush1.msra.mxu0 0.0
        %2613 = vmatprep.subr.mxu0 0.0
        %2614 = vmatpush1.msra.mxu0 0.0
        %2615 = vmatprep.subr.mxu0 0.0
        %2616 = vmatpush1.msra.mxu0 0.0
        %2617 = vmatprep.subr.mxu0 0.0
        %2618 = vmatpush1.msra.mxu0 0.0
        %2619 = vmatprep.subr.mxu0 0.0
        %2620 = vmatpush1.msra.mxu0 0.0
        %2621 = vmatprep.subr.mxu0 0.0
        %2622 = vmatpush1.msra.mxu0 0.0
        %2623 = vmatprep.subr.mxu0 0.0
        %2624 = vmatpush1.msra.mxu0 0.0
        %2625 = vmatprep.subr.mxu0 0.0
        %2626 = vmatpush1.msra.mxu0 0.0
        %2627 = vmatprep.subr.mxu0 0.0
        %2628 = vmatpush1.msra.mxu0 0.0
        %2629 = vmatprep.subr.mxu0 0.0
        %2630 = vmatpush1.msra.mxu0 0.0
        %2631 = vmatprep.subr.mxu0 0.0
        %2632 = vmatpush1.msra.mxu0 0.0
        %2633 = vmatprep.subr.mxu0 0.0
        %2634 = vmatpush1.msra.mxu0 0.0
        %2635 = vmatprep.subr.mxu0 0.0
        %2636 = vmatpush1.msra.mxu0 0.0
        %2637 = vmatprep.subr.mxu0 0.0
        %2638 = vmatpush1.msra.mxu0 0.0
        %2639 = vmatprep.subr.mxu0 0.0
        %2640 = vmatpush1.msra.mxu0 0.0
        %2641 = vmatprep.subr.mxu0 0.0
        %2642 = vmatpush1.msra.mxu0 0.0
        %2643 = vmatprep.subr.mxu0 0.0
        %2644 = vmatpush1.msra.mxu0 0.0
        %2645 = vmatprep.subr.mxu0 0.0
        %2646 = vmatpush1.msra.mxu0 0.0
        %2647 = vmatprep.subr.mxu0 0.0
        %2648 = vmatpush1.msra.mxu0 0.0
        %2649 = vmatprep.subr.mxu0 0.0
        %2650 = vmatpush1.msra.mxu0 0.0
        %2651 = vmatprep.mubr.f32.mxu0 0.0
        %2652 = vmatmul.mubr.f32.gmra.mrb[0].mxu0 %v2579
        %v2653 = vpop.f32.mrb[0].mxu0
        %v2654 = vadd.f32 0.0, %v2653
        %v2655 = vpop.f32.mrb[0].mxu0
        %2656 = vmatprep.mubr.f32.mxu0 0.0
        %2657 = vmatmul.mubr.f32.gmra.mrb[0].mxu0 %v2582
        %v2658 = vpop.f32.mrb[0].mxu0
        %v2659 = vadd.f32 0.0, %v2658
        %v2660 = vpop.f32.mrb[0].mxu0
        %2661 = vmatprep.mubr.f32.mxu0 0.0
        %2662 = vmatmul.mubr.f32.gmra.mrb[0].mxu0 %v2585
        %v2663 = vpop.f32.mrb[0].mxu0
        %v2664 = vadd.f32 0.0, %v2663
        %v2665 = vpop.f32.mrb[0].mxu0
        %2666 = vdwg.mxu0
        %s2667 = scalar_lea.vmem [#allocation4], 48
        %2668 = vst.msk [vmem:[%s2667] sm:$0xff] %vm774, %v2654
        %2669 = vst.msk [vmem:[%s2667 + $0x8] sm:$0xff] %vm774, %v2659
        %2670 = vst.msk [vmem:[%s2667 + $0x10] sm:$0xf] %vm777, %v2664
        %s2671 = scalar_lea.vmem %s350, 16
        %v2672 = vld [vmem:[%s2671] sm:$0xff]
        %2673 = vmatprep.subr.mxu0 0.0
        %2674 = vmatpush1.msra.mxu0 %v2672
        %2675 = vmatprep.subr.mxu0 0.0
        %2676 = vmatpush1.msra.mxu0 0.0
        %2677 = vmatprep.subr.mxu0 0.0
        %2678 = vmatpush1.msra.mxu0 0.0
        %2679 = vmatprep.subr.mxu0 0.0
        %2680 = vmatpush1.msra.mxu0 0.0
        %2681 = vmatprep.subr.mxu0 0.0
        %2682 = vmatpush1.msra.mxu0 0.0
        %2683 = vmatprep.subr.mxu0 0.0
        %2684 = vmatpush1.msra.mxu0 0.0
        %2685 = vmatprep.subr.mxu0 0.0
        %2686 = vmatpush1.msra.mxu0 0.0
        %2687 = vmatprep.subr.mxu0 0.0
        %2688 = vmatpush1.msra.mxu0 0.0
        %2689 = vmatprep.subr.mxu0 0.0
        %2690 = vmatpush1.msra.mxu0 0.0
        %2691 = vmatprep.subr.mxu0 0.0
        %2692 = vmatpush1.msra.mxu0 0.0
        %2693 = vmatprep.subr.mxu0 0.0
        %2694 = vmatpush1.msra.mxu0 0.0
        %2695 = vmatprep.subr.mxu0 0.0
        %2696 = vmatpush1.msra.mxu0 0.0
        %2697 = vmatprep.subr.mxu0 0.0
        %2698 = vmatpush1.msra.mxu0 0.0
        %2699 = vmatprep.subr.mxu0 0.0
        %2700 = vmatpush1.msra.mxu0 0.0
        %2701 = vmatprep.subr.mxu0 0.0
        %2702 = vmatpush1.msra.mxu0 0.0
        %2703 = vmatprep.subr.mxu0 0.0
        %2704 = vmatpush1.msra.mxu0 0.0
        %2705 = vmatprep.subr.mxu0 0.0
        %2706 = vmatpush1.msra.mxu0 0.0
        %2707 = vmatprep.subr.mxu0 0.0
        %2708 = vmatpush1.msra.mxu0 0.0
        %2709 = vmatprep.subr.mxu0 0.0
        %2710 = vmatpush1.msra.mxu0 0.0
        %2711 = vmatprep.subr.mxu0 0.0
        %2712 = vmatpush1.msra.mxu0 0.0
        %2713 = vmatprep.subr.mxu0 0.0
        %2714 = vmatpush1.msra.mxu0 0.0
        %2715 = vmatprep.subr.mxu0 0.0
        %2716 = vmatpush1.msra.mxu0 0.0
        %2717 = vmatprep.subr.mxu0 0.0
        %2718 = vmatpush1.msra.mxu0 0.0
        %2719 = vmatprep.subr.mxu0 0.0
        %2720 = vmatpush1.msra.mxu0 0.0
        %2721 = vmatprep.subr.mxu0 0.0
        %2722 = vmatpush1.msra.mxu0 0.0
        %2723 = vmatprep.subr.mxu0 0.0
        %2724 = vmatpush1.msra.mxu0 0.0
        %2725 = vmatprep.subr.mxu0 0.0
        %2726 = vmatpush1.msra.mxu0 0.0
        %2727 = vmatprep.subr.mxu0 0.0
        %2728 = vmatpush1.msra.mxu0 0.0
        %2729 = vmatprep.subr.mxu0 0.0
        %2730 = vmatpush1.msra.mxu0 0.0
        %2731 = vmatprep.subr.mxu0 0.0
        %2732 = vmatpush1.msra.mxu0 0.0
        %2733 = vmatprep.subr.mxu0 0.0
        %2734 = vmatpush1.msra.mxu0 0.0
        %2735 = vmatprep.subr.mxu0 0.0
        %2736 = vmatpush1.msra.mxu0 0.0
        %2737 = vmatprep.mubr.f32.mxu0 0.0
        %2738 = vmatmul.mubr.f32.gmra.mrb[0].mxu0 %v954
        %v2739 = vpop.f32.mrb[0].mxu0
        %v2740 = vadd.f32 0.0, %v2739
        %v2741 = vpop.f32.mrb[0].mxu0
        %2742 = vmatprep.mubr.f32.mxu0 0.0
        %2743 = vmatmul.mubr.f32.gmra.mrb[0].mxu0 %v957
        %v2744 = vpop.f32.mrb[0].mxu0
        %v2745 = vadd.f32 0.0, %v2744
        %v2746 = vpop.f32.mrb[0].mxu0
        %2747 = vdwg.mxu0
        %v2749 = vsel %vm952, %v2740, 0
        %v2752 = vsel %vm952, %v2745, 0
        %2754 = vmatprep.subr.mxu0 0.0
        %2755 = vmatpush1.msra.mxu0 %v353
        %2756 = vmatprep.subr.mxu0 0.0
        %2757 = vmatpush1.msra.mxu0 0.0
        %2758 = vmatprep.subr.mxu0 0.0
        %2759 = vmatpush1.msra.mxu0 0.0
        %2760 = vmatprep.subr.mxu0 0.0
        %2761 = vmatpush1.msra.mxu0 0.0
        %2762 = vmatprep.subr.mxu0 0.0
        %2763 = vmatpush1.msra.mxu0 0.0
        %2764 = vmatprep.subr.mxu0 0.0
        %2765 = vmatpush1.msra.mxu0 0.0
        %2766 = vmatprep.subr.mxu0 0.0
        %2767 = vmatpush1.msra.mxu0 0.0
        %2768 = vmatprep.subr.mxu0 0.0
        %2769 = vmatpush1.msra.mxu0 0.0
        %2770 = vmatprep.subr.mxu0 0.0
        %2771 = vmatpush1.msra.mxu0 0.0
        %2772 = vmatprep.subr.mxu0 0.0
        %2773 = vmatpush1.msra.mxu0 0.0
        %2774 = vmatprep.subr.mxu0 0.0
        %2775 = vmatpush1.msra.mxu0 0.0
        %2776 = vmatprep.subr.mxu0 0.0
        %2777 = vmatpush1.msra.mxu0 0.0
        %2778 = vmatprep.subr.mxu0 0.0
        %2779 = vmatpush1.msra.mxu0 0.0
        %2780 = vmatprep.subr.mxu0 0.0
        %2781 = vmatpush1.msra.mxu0 0.0
        %2782 = vmatprep.subr.mxu0 0.0
        %2783 = vmatpush1.msra.mxu0 0.0
        %2784 = vmatprep.subr.mxu0 0.0
        %2785 = vmatpush1.msra.mxu0 0.0
        %2786 = vmatprep.subr.mxu0 0.0
        %2787 = vmatpush1.msra.mxu0 0.0
        %2788 = vmatprep.subr.mxu0 0.0
        %2789 = vmatpush1.msra.mxu0 0.0
        %2790 = vmatprep.subr.mxu0 0.0
        %2791 = vmatpush1.msra.mxu0 0.0
        %2792 = vmatprep.subr.mxu0 0.0
        %2793 = vmatpush1.msra.mxu0 0.0
        %2794 = vmatprep.subr.mxu0 0.0
        %2795 = vmatpush1.msra.mxu0 0.0
        %2796 = vmatprep.subr.mxu0 0.0
        %2797 = vmatpush1.msra.mxu0 0.0
        %2798 = vmatprep.subr.mxu0 0.0
        %2799 = vmatpush1.msra.mxu0 0.0
        %2800 = vmatprep.subr.mxu0 0.0
        %2801 = vmatpush1.msra.mxu0 0.0
        %2802 = vmatprep.subr.mxu0 0.0
        %2803 = vmatpush1.msra.mxu0 0.0
        %2804 = vmatprep.subr.mxu0 0.0
        %2805 = vmatpush1.msra.mxu0 0.0
        %2806 = vmatprep.subr.mxu0 0.0
        %2807 = vmatpush1.msra.mxu0 0.0
        %2808 = vmatprep.subr.mxu0 0.0
        %2809 = vmatpush1.msra.mxu0 0.0
        %2810 = vmatprep.subr.mxu0 0.0
        %2811 = vmatpush1.msra.mxu0 0.0
        %2812 = vmatprep.subr.mxu0 0.0
        %2813 = vmatpush1.msra.mxu0 0.0
        %2814 = vmatprep.subr.mxu0 0.0
        %2815 = vmatpush1.msra.mxu0 0.0
        %2816 = vmatprep.subr.mxu0 0.0
        %2817 = vmatpush1.msra.mxu0 0.0
        %2818 = vmatprep.mubr.f32.mxu0 0.0
        %2819 = vmatmul.mubr.f32.gmra.mrb[0].mxu0 %v2749
        %v2820 = vpop.f32.mrb[0].mxu0
        %v2821 = vadd.f32 0.0, %v2820
        %v2822 = vpop.f32.mrb[0].mxu0
        %2823 = vmatprep.mubr.f32.mxu0 0.0
        %2824 = vmatmul.mubr.f32.gmra.mrb[0].mxu0 %v2752
        %v2825 = vpop.f32.mrb[0].mxu0
        %v2826 = vadd.f32 0.0, %v2825
        %v2827 = vpop.f32.mrb[0].mxu0
        %2828 = vdwg.mxu0
        %2831 = vrot.lane.b32.xlu0 %v2821, 1
        %v2832 = vpop.permute.xlu0 %2831
        %2833 = vrot.lane.b32.xlu0 %v2826, 1
        %v2834 = vpop.permute.xlu0 %2833
        %2837 = vst.msk [vmem:[#allocation2 + $0x1] sm:$0xff] %vm374, %v2832
        %2838 = vst.msk [vmem:[#allocation2 + $0x9] sm:$0xff] %vm374, %v2834
        %s2839 = sld [smem:[#allocation5 + $0x12]]
        %v2840 = vld [vmem:[#allocation2] sm:$0xff]
        %v2841 = vld [vmem:[#allocation2 + $0x8] sm:$0xff]
        %v2842 = vstv %s2839
        %v2843 = vmul.f32 %v2842, %v2840
        %v2844 = vmul.f32 %v2842, %v2841
        %v2845 = vadd.f32 %v2843, 0.0
        %v2846 = vadd.f32 %v2844, 0.0
        %s2847 = sld [smem:[#allocation5 + $0x13]]
        %v2848 = vstv %s2847
        %v2849 = vmul.f32 %v2848, %v2840
        %v2850 = vmul.f32 %v2848, %v2841
        %2853 = vrot.lane.b32.xlu0 %v2849, 127
        %v2854 = vpop.permute.xlu0 %2853
        %2855 = vrot.lane.b32.xlu0 %v2850, 127
        %v2856 = vpop.permute.xlu0 %2855
        %v2859 = vadd.f32 %v2845, %v2854
        %v2860 = vadd.f32 %v2846, %v2856
        %s2861 = sld [smem:[#allocation5 + $0x14]]
        %v2862 = vstv %s2861
        %v2863 = vmul.f32 %v2862, %v2840
        %v2864 = vmul.f32 %v2862, %v2841
        %2867 = vrot.lane.b32.xlu0 %v2863, 126
        %v2868 = vpop.permute.xlu0 %2867
        %2869 = vrot.lane.b32.xlu0 %v2864, 126
        %v2870 = vpop.permute.xlu0 %2869
        %v2873 = vadd.f32 %v2859, %v2868
        %v2874 = vadd.f32 %v2860, %v2870
        %s2875 = sld [smem:[#allocation5 + $0x15]]
        %v2876 = vld [vmem:[#allocation2 + $0x1] sm:$0xff]
        %v2877 = vld [vmem:[#allocation2 + $0x9] sm:$0xff]
        %v2878 = vstv %s2875
        %v2879 = vmul.f32 %v2878, %v2876
        %v2880 = vmul.f32 %v2878, %v2877
        %v2881 = vadd.f32 %v2873, %v2879
        %v2882 = vadd.f32 %v2874, %v2880
        %s2883 = sld [smem:[#allocation5 + $0x16]]
        %v2884 = vstv %s2883
        %v2885 = vmul.f32 %v2884, %v2876
        %v2886 = vmul.f32 %v2884, %v2877
        %2889 = vrot.lane.b32.xlu0 %v2885, 127
        %v2890 = vpop.permute.xlu0 %2889
        %2891 = vrot.lane.b32.xlu0 %v2886, 127
        %v2892 = vpop.permute.xlu0 %2891
        %v2895 = vadd.f32 %v2881, %v2890
        %v2896 = vadd.f32 %v2882, %v2892
        %s2897 = sld [smem:[#allocation5 + $0x17]]
        %v2898 = vstv %s2897
        %v2899 = vmul.f32 %v2898, %v2876
        %v2900 = vmul.f32 %v2898, %v2877
        %2903 = vrot.lane.b32.xlu0 %v2899, 126
        %v2904 = vpop.permute.xlu0 %2903
        %2905 = vrot.lane.b32.xlu0 %v2900, 126
        %v2906 = vpop.permute.xlu0 %2905
        %v2909 = vadd.f32 %v2895, %v2904
        %v2910 = vadd.f32 %v2896, %v2906
        %s2911 = sld [smem:[#allocation5 + $0x18]]
        %v2912 = vld [vmem:[#allocation2 + $0x2] sm:$0xff]
        %v2913 = vld [vmem:[#allocation2 + $0xa] sm:$0xff]
        %v2914 = vstv %s2911
        %v2915 = vmul.f32 %v2914, %v2912
        %v2916 = vmul.f32 %v2914, %v2913
        %v2917 = vadd.f32 %v2909, %v2915
        %v2918 = vadd.f32 %v2910, %v2916
        %s2919 = sld [smem:[#allocation5 + $0x19]]
        %v2920 = vstv %s2919
        %v2921 = vmul.f32 %v2920, %v2912
        %v2922 = vmul.f32 %v2920, %v2913
        %2925 = vrot.lane.b32.xlu0 %v2921, 127
        %v2926 = vpop.permute.xlu0 %2925
        %2927 = vrot.lane.b32.xlu0 %v2922, 127
        %v2928 = vpop.permute.xlu0 %2927
        %v2931 = vadd.f32 %v2917, %v2926
        %v2932 = vadd.f32 %v2918, %v2928
        %s2933 = sld [smem:[#allocation5 + $0x1a]]
        %v2934 = vstv %s2933
        %v2935 = vmul.f32 %v2934, %v2912
        %v2936 = vmul.f32 %v2934, %v2913
        %2939 = vrot.lane.b32.xlu0 %v2935, 126
        %v2940 = vpop.permute.xlu0 %2939
        %2941 = vrot.lane.b32.xlu0 %v2936, 126
        %v2942 = vpop.permute.xlu0 %2941
        %v2945 = vadd.f32 %v2931, %v2940
        %v2946 = vadd.f32 %v2932, %v2942
        %s2947 = sld [smem:[#allocation8 + $0x2]]
        %v2948 = vstv %s2947
        %v2949 = vadd.f32 %v2945, %v2948
        %v2950 = vadd.f32 %v2946, %v2948
        %s2951 = scalar_lea.vmem %s345, 48
        %v2952 = vld [vmem:[%s2951] sm:$0xff]
        %v2953 = vld [vmem:[%s2951 + $0x8] sm:$0xff]
        %2956 = vrot.lane.b32.xlu0 %v2952, 1
        %v2957 = vpop.permute.xlu0 %2956
        %2958 = vrot.lane.b32.xlu0 %v2953, 1
        %v2959 = vpop.permute.xlu0 %2958
        %2962 = vst.msk [vmem:[#allocation2 + $0x1] sm:$0xff] %vm374, %v2957
        %2963 = vst.msk [vmem:[#allocation2 + $0x9] sm:$0xff] %vm374, %v2959
        %v2964 = vld [vmem:[#allocation2] sm:$0xff]
        %v2965 = vld [vmem:[#allocation2 + $0x8] sm:$0xff]
        %s2966 = sld [smem:[#allocation5 + $0x3f]]
        %v2967 = vstv %s2966
        %v2968 = vmul.f32 %v2967, %v2964
        %v2969 = vmul.f32 %v2967, %v2965
        %v2970 = vadd.f32 %v2968, 0.0
        %v2971 = vadd.f32 %v2969, 0.0
        %s2972 = sld [smem:[#allocation5 + $0x63]]
        %v2973 = vstv %s2972
        %v2974 = vmul.f32 %v2973, %v2964
        %v2975 = vmul.f32 %v2973, %v2965
        %v2976 = vadd.f32 %v2974, 0.0
        %v2977 = vadd.f32 %v2975, 0.0
        %s2978 = sld [smem:[#allocation5 + $0x40]]
        %v2979 = vstv %s2978
        %v2980 = vmul.f32 %v2979, %v2964
        %v2981 = vmul.f32 %v2979, %v2965
        %2984 = vrot.lane.b32.xlu0 %v2980, 127
        %v2985 = vpop.permute.xlu0 %2984
        %2986 = vrot.lane.b32.xlu0 %v2981, 127
        %v2987 = vpop.permute.xlu0 %2986
        %v2990 = vadd.f32 %v2970, %v2985
        %v2991 = vadd.f32 %v2971, %v2987
        %s2992 = sld [smem:[#allocation5 + $0x64]]
        %v2993 = vstv %s2992
        %v2994 = vmul.f32 %v2993, %v2964
        %v2995 = vmul.f32 %v2993, %v2965
        %2998 = vrot.lane.b32.xlu0 %v2994, 127
        %v2999 = vpop.permute.xlu0 %2998
        %3000 = vrot.lane.b32.xlu0 %v2995, 127
        %v3001 = vpop.permute.xlu0 %3000
        %v3004 = vadd.f32 %v2976, %v2999
        %v3005 = vadd.f32 %v2977, %v3001
        %s3006 = sld [smem:[#allocation5 + $0x41]]
        %v3007 = vstv %s3006
        %v3008 = vmul.f32 %v3007, %v2964
        %v3009 = vmul.f32 %v3007, %v2965
        %3012 = vrot.lane.b32.xlu0 %v3008, 126
        %v3013 = vpop.permute.xlu0 %3012
        %3014 = vrot.lane.b32.xlu0 %v3009, 126
        %v3015 = vpop.permute.xlu0 %3014
        %v3018 = vadd.f32 %v2990, %v3013
        %v3019 = vadd.f32 %v2991, %v3015
        %s3020 = sld [smem:[#allocation5 + $0x65]]
        %v3021 = vstv %s3020
        %v3022 = vmul.f32 %v3021, %v2964
        %v3023 = vmul.f32 %v3021, %v2965
        %3026 = vrot.lane.b32.xlu0 %v3022, 126
        %v3027 = vpop.permute.xlu0 %3026
        %3028 = vrot.lane.b32.xlu0 %v3023, 126
        %v3029 = vpop.permute.xlu0 %3028
        %v3032 = vadd.f32 %v3004, %v3027
        %v3033 = vadd.f32 %v3005, %v3029
        %v3034 = vld [vmem:[#allocation2 + $0x1] sm:$0xff]
        %v3035 = vld [vmem:[#allocation2 + $0x9] sm:$0xff]
        %s3036 = sld [smem:[#allocation5 + $0x42]]
        %v3037 = vstv %s3036
        %v3038 = vmul.f32 %v3037, %v3034
        %v3039 = vmul.f32 %v3037, %v3035
        %v3040 = vadd.f32 %v3018, %v3038
        %v3041 = vadd.f32 %v3019, %v3039
        %s3042 = sld [smem:[#allocation5 + $0x66]]
        %v3043 = vstv %s3042
        %v3044 = vmul.f32 %v3043, %v3034
        %v3045 = vmul.f32 %v3043, %v3035
        %v3046 = vadd.f32 %v3032, %v3044
        %v3047 = vadd.f32 %v3033, %v3045
        %s3048 = sld [smem:[#allocation5 + $0x43]]
        %v3049 = vstv %s3048
        %v3050 = vmul.f32 %v3049, %v3034
        %v3051 = vmul.f32 %v3049, %v3035
        %3054 = vrot.lane.b32.xlu0 %v3050, 127
        %v3055 = vpop.permute.xlu0 %3054
        %3056 = vrot.lane.b32.xlu0 %v3051, 127
        %v3057 = vpop.permute.xlu0 %3056
        %v3060 = vadd.f32 %v3040, %v3055
        %v3061 = vadd.f32 %v3041, %v3057
        %s3062 = sld [smem:[#allocation5 + $0x67]]
        %v3063 = vstv %s3062
        %v3064 = vmul.f32 %v3063, %v3034
        %v3065 = vmul.f32 %v3063, %v3035
        %3068 = vrot.lane.b32.xlu0 %v3064, 127
        %v3069 = vpop.permute.xlu0 %3068
        %3070 = vrot.lane.b32.xlu0 %v3065, 127
        %v3071 = vpop.permute.xlu0 %3070
        %v3074 = vadd.f32 %v3046, %v3069
        %v3075 = vadd.f32 %v3047, %v3071
        %s3076 = sld [smem:[#allocation5 + $0x44]]
        %v3077 = vstv %s3076
        %v3078 = vmul.f32 %v3077, %v3034
        %v3079 = vmul.f32 %v3077, %v3035
        %3082 = vrot.lane.b32.xlu0 %v3078, 126
        %v3083 = vpop.permute.xlu0 %3082
        %3084 = vrot.lane.b32.xlu0 %v3079, 126
        %v3085 = vpop.permute.xlu0 %3084
        %v3088 = vadd.f32 %v3060, %v3083
        %v3089 = vadd.f32 %v3061, %v3085
        %s3090 = sld [smem:[#allocation5 + $0x68]]
        %v3091 = vstv %s3090
        %v3092 = vmul.f32 %v3091, %v3034
        %v3093 = vmul.f32 %v3091, %v3035
        %3096 = vrot.lane.b32.xlu0 %v3092, 126
        %v3097 = vpop.permute.xlu0 %3096
        %3098 = vrot.lane.b32.xlu0 %v3093, 126
        %v3099 = vpop.permute.xlu0 %3098
        %v3102 = vadd.f32 %v3074, %v3097
        %v3103 = vadd.f32 %v3075, %v3099
        %v3104 = vld [vmem:[#allocation2 + $0x2] sm:$0xff]
        %v3105 = vld [vmem:[#allocation2 + $0xa] sm:$0xff]
        %s3106 = sld [smem:[#allocation5 + $0x45]]
        %v3107 = vstv %s3106
        %v3108 = vmul.f32 %v3107, %v3104
        %v3109 = vmul.f32 %v3107, %v3105
        %v3110 = vadd.f32 %v3088, %v3108
        %v3111 = vadd.f32 %v3089, %v3109
        %s3112 = sld [smem:[#allocation5 + $0x69]]
        %v3113 = vstv %s3112
        %v3114 = vmul.f32 %v3113, %v3104
        %v3115 = vmul.f32 %v3113, %v3105
        %v3116 = vadd.f32 %v3102, %v3114
        %v3117 = vadd.f32 %v3103, %v3115
        %s3118 = sld [smem:[#allocation5 + $0x46]]
        %v3119 = vstv %s3118
        %v3120 = vmul.f32 %v3119, %v3104
        %v3121 = vmul.f32 %v3119, %v3105
        %3124 = vrot.lane.b32.xlu0 %v3120, 127
        %v3125 = vpop.permute.xlu0 %3124
        %3126 = vrot.lane.b32.xlu0 %v3121, 127
        %v3127 = vpop.permute.xlu0 %3126
        %v3130 = vadd.f32 %v3110, %v3125
        %v3131 = vadd.f32 %v3111, %v3127
        %s3132 = sld [smem:[#allocation5 + $0x6a]]
        %v3133 = vstv %s3132
        %v3134 = vmul.f32 %v3133, %v3104
        %v3135 = vmul.f32 %v3133, %v3105
        %3138 = vrot.lane.b32.xlu0 %v3134, 127
        %v3139 = vpop.permute.xlu0 %3138
        %3140 = vrot.lane.b32.xlu0 %v3135, 127
        %v3141 = vpop.permute.xlu0 %3140
        %v3144 = vadd.f32 %v3116, %v3139
        %v3145 = vadd.f32 %v3117, %v3141
        %s3146 = sld [smem:[#allocation5 + $0x47]]
        %v3147 = vstv %s3146
        %v3148 = vmul.f32 %v3147, %v3104
        %v3149 = vmul.f32 %v3147, %v3105
        %3152 = vrot.lane.b32.xlu0 %v3148, 126
        %v3153 = vpop.permute.xlu0 %3152
        %3154 = vrot.lane.b32.xlu0 %v3149, 126
        %v3155 = vpop.permute.xlu0 %3154
        %v3158 = vadd.f32 %v3130, %v3153
        %v3159 = vadd.f32 %v3131, %v3155
        %s3160 = sld [smem:[#allocation5 + $0x6b]]
        %v3161 = vstv %s3160
        %v3162 = vmul.f32 %v3161, %v3104
        %v3163 = vmul.f32 %v3161, %v3105
        %3166 = vrot.lane.b32.xlu0 %v3162, 126
        %v3167 = vpop.permute.xlu0 %3166
        %3168 = vrot.lane.b32.xlu0 %v3163, 126
        %v3169 = vpop.permute.xlu0 %3168
        %v3172 = vadd.f32 %v3144, %v3167
        %v3173 = vadd.f32 %v3145, %v3169
        %s3174 = sld [smem:[#allocation8 + $0x7]]
        %v3175 = vstv %s3174
        %v3176 = vadd.f32 %v3158, %v3175
        %v3177 = vadd.f32 %v3159, %v3175
        %s3178 = sld [smem:[#allocation8 + $0xb]]
        %v3179 = vstv %s3178
        %v3180 = vadd.f32 %v3172, %v3179
        %v3181 = vadd.f32 %v3173, %v3179
        %3182 = vmatprep.subr.mxu0 0.0
        %3183 = vmatpush1.msra.mxu0 %v3176
        %3184 = vmatprep.subr.mxu0 0.0
        %3185 = vmatpush1.msra.mxu0 %v3177
        %3186 = vmatprep.subr.mxu0 0.0
        %3187 = vmatpush1.msra.mxu0 0.0
        %3188 = vmatprep.subr.mxu0 0.0
        %3189 = vmatpush1.msra.mxu0 0.0
        %3190 = vmatprep.subr.mxu0 0.0
        %3191 = vmatpush1.msra.mxu0 0.0
        %3192 = vmatprep.subr.mxu0 0.0
        %3193 = vmatpush1.msra.mxu0 0.0
        %3194 = vmatprep.subr.mxu0 0.0
        %3195 = vmatpush1.msra.mxu0 0.0
        %3196 = vmatprep.subr.mxu0 0.0
        %3197 = vmatpush1.msra.mxu0 0.0
        %3198 = vmatprep.subr.mxu0 0.0
        %3199 = vmatpush1.msra.mxu0 0.0
        %3200 = vmatprep.subr.mxu0 0.0
        %3201 = vmatpush1.msra.mxu0 0.0
        %3202 = vmatprep.subr.mxu0 0.0
        %3203 = vmatpush1.msra.mxu0 0.0
        %3204 = vmatprep.subr.mxu0 0.0
        %3205 = vmatpush1.msra.mxu0 0.0
        %3206 = vmatprep.subr.mxu0 0.0
        %3207 = vmatpush1.msra.mxu0 0.0
        %3208 = vmatprep.subr.mxu0 0.0
        %3209 = vmatpush1.msra.mxu0 0.0
        %3210 = vmatprep.subr.mxu0 0.0
        %3211 = vmatpush1.msra.mxu0 0.0
        %3212 = vmatprep.subr.mxu0 0.0
        %3213 = vmatpush1.msra.mxu0 0.0
        %3214 = vmatprep.subr.mxu0 0.0
        %3215 = vmatpush1.msra.mxu0 0.0
        %3216 = vmatprep.subr.mxu0 0.0
        %3217 = vmatpush1.msra.mxu0 0.0
        %3218 = vmatprep.subr.mxu0 0.0
        %3219 = vmatpush1.msra.mxu0 0.0
        %3220 = vmatprep.subr.mxu0 0.0
        %3221 = vmatpush1.msra.mxu0 0.0
        %3222 = vmatprep.subr.mxu0 0.0
        %3223 = vmatpush1.msra.mxu0 0.0
        %3224 = vmatprep.subr.mxu0 0.0
        %3225 = vmatpush1.msra.mxu0 0.0
        %3226 = vmatprep.subr.mxu0 0.0
        %3227 = vmatpush1.msra.mxu0 0.0
        %3228 = vmatprep.subr.mxu0 0.0
        %3229 = vmatpush1.msra.mxu0 0.0
        %3230 = vmatprep.subr.mxu0 0.0
        %3231 = vmatpush1.msra.mxu0 0.0
        %3232 = vmatprep.subr.mxu0 0.0
        %3233 = vmatpush1.msra.mxu0 0.0
        %3234 = vmatprep.subr.mxu0 0.0
        %3235 = vmatpush1.msra.mxu0 0.0
        %3236 = vmatprep.subr.mxu0 0.0
        %3237 = vmatpush1.msra.mxu0 0.0
        %3238 = vmatprep.subr.mxu0 0.0
        %3239 = vmatpush1.msra.mxu0 0.0
        %3240 = vmatprep.subr.mxu0 0.0
        %3241 = vmatpush1.msra.mxu0 0.0
        %3242 = vmatprep.subr.mxu0 0.0
        %3243 = vmatpush1.msra.mxu0 0.0
        %3244 = vmatprep.subr.mxu0 0.0
        %3245 = vmatpush1.msra.mxu0 0.0
        %3246 = vmatprep.mubr.f32.mxu0 0.0
        %3247 = vmatmul.mubr.f32.gmra.mrb[0].mxu0 %v597
        %v3248 = vpop.f32.mrb[0].mxu0
        %v3249 = vadd.f32 0.0, %v3248
        %v3250 = vpop.f32.mrb[0].mxu0
        %3251 = vmatprep.mubr.f32.mxu0 0.0
        %3252 = vmatmul.mubr.f32.gmra.mrb[0].mxu0 %v600
        %v3253 = vpop.f32.mrb[0].mxu0
        %v3254 = vadd.f32 0.0, %v3253
        %v3255 = vpop.f32.mrb[0].mxu0
        %3256 = vmatprep.mubr.f32.mxu0 0.0
        %3257 = vmatmul.mubr.f32.gmra.mrb[0].mxu0 %v603
        %v3258 = vpop.f32.mrb[0].mxu0
        %v3259 = vadd.f32 0.0, %v3258
        %v3260 = vpop.f32.mrb[0].mxu0
        %3261 = vdwg.mxu0
        %v3263 = vsel %vm595, %v3249, 0
        %v3266 = vsel %vm595, %v3254, 0
        %v3269 = vsel %vm595, %v3259, 0
        %3271 = vmatprep.subr.mxu0 0.0
        %3272 = vmatpush1.msra.mxu0 %v357
        %3273 = vmatprep.subr.mxu0 0.0
        %3274 = vmatpush1.msra.mxu0 %v358
        %3275 = vmatprep.subr.mxu0 0.0
        %3276 = vmatpush1.msra.mxu0 0.0
        %3277 = vmatprep.subr.mxu0 0.0
        %3278 = vmatpush1.msra.mxu0 0.0
        %3279 = vmatprep.subr.mxu0 0.0
        %3280 = vmatpush1.msra.mxu0 0.0
        %3281 = vmatprep.subr.mxu0 0.0
        %3282 = vmatpush1.msra.mxu0 0.0
        %3283 = vmatprep.subr.mxu0 0.0
        %3284 = vmatpush1.msra.mxu0 0.0
        %3285 = vmatprep.subr.mxu0 0.0
        %3286 = vmatpush1.msra.mxu0 0.0
        %3287 = vmatprep.subr.mxu0 0.0
        %3288 = vmatpush1.msra.mxu0 0.0
        %3289 = vmatprep.subr.mxu0 0.0
        %3290 = vmatpush1.msra.mxu0 0.0
        %3291 = vmatprep.subr.mxu0 0.0
        %3292 = vmatpush1.msra.mxu0 0.0
        %3293 = vmatprep.subr.mxu0 0.0
        %3294 = vmatpush1.msra.mxu0 0.0
        %3295 = vmatprep.subr.mxu0 0.0
        %3296 = vmatpush1.msra.mxu0 0.0
        %3297 = vmatprep.subr.mxu0 0.0
        %3298 = vmatpush1.msra.mxu0 0.0
        %3299 = vmatprep.subr.mxu0 0.0
        %3300 = vmatpush1.msra.mxu0 0.0
        %3301 = vmatprep.subr.mxu0 0.0
        %3302 = vmatpush1.msra.mxu0 0.0
        %3303 = vmatprep.subr.mxu0 0.0
        %3304 = vmatpush1.msra.mxu0 0.0
        %3305 = vmatprep.subr.mxu0 0.0
        %3306 = vmatpush1.msra.mxu0 0.0
        %3307 = vmatprep.subr.mxu0 0.0
        %3308 = vmatpush1.msra.mxu0 0.0
        %3309 = vmatprep.subr.mxu0 0.0
        %3310 = vmatpush1.msra.mxu0 0.0
        %3311 = vmatprep.subr.mxu0 0.0
        %3312 = vmatpush1.msra.mxu0 0.0
        %3313 = vmatprep.subr.mxu0 0.0
        %3314 = vmatpush1.msra.mxu0 0.0
        %3315 = vmatprep.subr.mxu0 0.0
        %3316 = vmatpush1.msra.mxu0 0.0
        %3317 = vmatprep.subr.mxu0 0.0
        %3318 = vmatpush1.msra.mxu0 0.0
        %3319 = vmatprep.subr.mxu0 0.0
        %3320 = vmatpush1.msra.mxu0 0.0
        %3321 = vmatprep.subr.mxu0 0.0
        %3322 = vmatpush1.msra.mxu0 0.0
        %3323 = vmatprep.subr.mxu0 0.0
        %3324 = vmatpush1.msra.mxu0 0.0
        %3325 = vmatprep.subr.mxu0 0.0
        %3326 = vmatpush1.msra.mxu0 0.0
        %3327 = vmatprep.subr.mxu0 0.0
        %3328 = vmatpush1.msra.mxu0 0.0
        %3329 = vmatprep.subr.mxu0 0.0
        %3330 = vmatpush1.msra.mxu0 0.0
        %3331 = vmatprep.subr.mxu0 0.0
        %3332 = vmatpush1.msra.mxu0 0.0
        %3333 = vmatprep.subr.mxu0 0.0
        %3334 = vmatpush1.msra.mxu0 0.0
        %3335 = vmatprep.mubr.f32.mxu0 0.0
        %3336 = vmatmul.mubr.f32.gmra.mrb[0].mxu0 %v3263
        %v3337 = vpop.f32.mrb[0].mxu0
        %v3338 = vadd.f32 0.0, %v3337
        %v3339 = vpop.f32.mrb[0].mxu0
        %3340 = vmatprep.mubr.f32.mxu0 0.0
        %3341 = vmatmul.mubr.f32.gmra.mrb[0].mxu0 %v3266
        %v3342 = vpop.f32.mrb[0].mxu0
        %v3343 = vadd.f32 0.0, %v3342
        %v3344 = vpop.f32.mrb[0].mxu0
        %3345 = vmatprep.mubr.f32.mxu0 0.0
        %3346 = vmatmul.mubr.f32.gmra.mrb[0].mxu0 %v3269
        %v3347 = vpop.f32.mrb[0].mxu0
        %v3348 = vadd.f32 0.0, %v3347
        %v3349 = vpop.f32.mrb[0].mxu0
        %3350 = vdwg.mxu0
        %s3351 = scalar_lea.vmem [#allocation3], 72
        %3352 = vst.msk [vmem:[%s3351] sm:$0xff] %vm774, %v3338
        %3353 = vst.msk [vmem:[%s3351 + $0x8] sm:$0xff] %vm774, %v3343
        %3354 = vst.msk [vmem:[%s3351 + $0x10] sm:$0xf] %vm777, %v3348
        %3355 = vmatprep.subr.mxu0 0.0
        %3356 = vmatpush1.msra.mxu0 %v3180
        %3357 = vmatprep.subr.mxu0 0.0
        %3358 = vmatpush1.msra.mxu0 %v3181
        %3359 = vmatprep.subr.mxu0 0.0
        %3360 = vmatpush1.msra.mxu0 0.0
        %3361 = vmatprep.subr.mxu0 0.0
        %3362 = vmatpush1.msra.mxu0 0.0
        %3363 = vmatprep.subr.mxu0 0.0
        %3364 = vmatpush1.msra.mxu0 0.0
        %3365 = vmatprep.subr.mxu0 0.0
        %3366 = vmatpush1.msra.mxu0 0.0
        %3367 = vmatprep.subr.mxu0 0.0
        %3368 = vmatpush1.msra.mxu0 0.0
        %3369 = vmatprep.subr.mxu0 0.0
        %3370 = vmatpush1.msra.mxu0 0.0
        %3371 = vmatprep.subr.mxu0 0.0
        %3372 = vmatpush1.msra.mxu0 0.0
        %3373 = vmatprep.subr.mxu0 0.0
        %3374 = vmatpush1.msra.mxu0 0.0
        %3375 = vmatprep.subr.mxu0 0.0
        %3376 = vmatpush1.msra.mxu0 0.0
        %3377 = vmatprep.subr.mxu0 0.0
        %3378 = vmatpush1.msra.mxu0 0.0
        %3379 = vmatprep.subr.mxu0 0.0
        %3380 = vmatpush1.msra.mxu0 0.0
        %3381 = vmatprep.subr.mxu0 0.0
        %3382 = vmatpush1.msra.mxu0 0.0
        %3383 = vmatprep.subr.mxu0 0.0
        %3384 = vmatpush1.msra.mxu0 0.0
        %3385 = vmatprep.subr.mxu0 0.0
        %3386 = vmatpush1.msra.mxu0 0.0
        %3387 = vmatprep.subr.mxu0 0.0
        %3388 = vmatpush1.msra.mxu0 0.0
        %3389 = vmatprep.subr.mxu0 0.0
        %3390 = vmatpush1.msra.mxu0 0.0
        %3391 = vmatprep.subr.mxu0 0.0
        %3392 = vmatpush1.msra.mxu0 0.0
        %3393 = vmatprep.subr.mxu0 0.0
        %3394 = vmatpush1.msra.mxu0 0.0
        %3395 = vmatprep.subr.mxu0 0.0
        %3396 = vmatpush1.msra.mxu0 0.0
        %3397 = vmatprep.subr.mxu0 0.0
        %3398 = vmatpush1.msra.mxu0 0.0
        %3399 = vmatprep.subr.mxu0 0.0
        %3400 = vmatpush1.msra.mxu0 0.0
        %3401 = vmatprep.subr.mxu0 0.0
        %3402 = vmatpush1.msra.mxu0 0.0
        %3403 = vmatprep.subr.mxu0 0.0
        %3404 = vmatpush1.msra.mxu0 0.0
        %3405 = vmatprep.subr.mxu0 0.0
        %3406 = vmatpush1.msra.mxu0 0.0
        %3407 = vmatprep.subr.mxu0 0.0
        %3408 = vmatpush1.msra.mxu0 0.0
        %3409 = vmatprep.subr.mxu0 0.0
        %3410 = vmatpush1.msra.mxu0 0.0
        %3411 = vmatprep.subr.mxu0 0.0
        %3412 = vmatpush1.msra.mxu0 0.0
        %3413 = vmatprep.subr.mxu0 0.0
        %3414 = vmatpush1.msra.mxu0 0.0
        %3415 = vmatprep.subr.mxu0 0.0
        %3416 = vmatpush1.msra.mxu0 0.0
        %3417 = vmatprep.subr.mxu0 0.0
        %3418 = vmatpush1.msra.mxu0 0.0
        %3419 = vmatprep.mubr.f32.mxu0 0.0
        %3420 = vmatmul.mubr.f32.gmra.mrb[0].mxu0 %v597
        %v3421 = vpop.f32.mrb[0].mxu0
        %v3422 = vadd.f32 0.0, %v3421
        %v3423 = vpop.f32.mrb[0].mxu0
        %3424 = vmatprep.mubr.f32.mxu0 0.0
        %3425 = vmatmul.mubr.f32.gmra.mrb[0].mxu0 %v600
        %v3426 = vpop.f32.mrb[0].mxu0
        %v3427 = vadd.f32 0.0, %v3426
        %v3428 = vpop.f32.mrb[0].mxu0
        %3429 = vmatprep.mubr.f32.mxu0 0.0
        %3430 = vmatmul.mubr.f32.gmra.mrb[0].mxu0 %v603
        %v3431 = vpop.f32.mrb[0].mxu0
        %v3432 = vadd.f32 0.0, %v3431
        %v3433 = vpop.f32.mrb[0].mxu0
        %3434 = vdwg.mxu0
        %v3436 = vsel %vm595, %v3422, 0
        %v3439 = vsel %vm595, %v3427, 0
        %v3442 = vsel %vm595, %v3432, 0
        %3444 = vmatprep.subr.mxu0 0.0
        %3445 = vmatpush1.msra.mxu0 %v357
        %3446 = vmatprep.subr.mxu0 0.0
        %3447 = vmatpush1.msra.mxu0 %v358
        %3448 = vmatprep.subr.mxu0 0.0
        %3449 = vmatpush1.msra.mxu0 0.0
        %3450 = vmatprep.subr.mxu0 0.0
        %3451 = vmatpush1.msra.mxu0 0.0
        %3452 = vmatprep.subr.mxu0 0.0
        %3453 = vmatpush1.msra.mxu0 0.0
        %3454 = vmatprep.subr.mxu0 0.0
        %3455 = vmatpush1.msra.mxu0 0.0
        %3456 = vmatprep.subr.mxu0 0.0
        %3457 = vmatpush1.msra.mxu0 0.0
        %3458 = vmatprep.subr.mxu0 0.0
        %3459 = vmatpush1.msra.mxu0 0.0
        %3460 = vmatprep.subr.mxu0 0.0
        %3461 = vmatpush1.msra.mxu0 0.0
        %3462 = vmatprep.subr.mxu0 0.0
        %3463 = vmatpush1.msra.mxu0 0.0
        %3464 = vmatprep.subr.mxu0 0.0
        %3465 = vmatpush1.msra.mxu0 0.0
        %3466 = vmatprep.subr.mxu0 0.0
        %3467 = vmatpush1.msra.mxu0 0.0
        %3468 = vmatprep.subr.mxu0 0.0
        %3469 = vmatpush1.msra.mxu0 0.0
        %3470 = vmatprep.subr.mxu0 0.0
        %3471 = vmatpush1.msra.mxu0 0.0
        %3472 = vmatprep.subr.mxu0 0.0
        %3473 = vmatpush1.msra.mxu0 0.0
        %3474 = vmatprep.subr.mxu0 0.0
        %3475 = vmatpush1.msra.mxu0 0.0
        %3476 = vmatprep.subr.mxu0 0.0
        %3477 = vmatpush1.msra.mxu0 0.0
        %3478 = vmatprep.subr.mxu0 0.0
        %3479 = vmatpush1.msra.mxu0 0.0
        %3480 = vmatprep.subr.mxu0 0.0
        %3481 = vmatpush1.msra.mxu0 0.0
        %3482 = vmatprep.subr.mxu0 0.0
        %3483 = vmatpush1.msra.mxu0 0.0
        %3484 = vmatprep.subr.mxu0 0.0
        %3485 = vmatpush1.msra.mxu0 0.0
        %3486 = vmatprep.subr.mxu0 0.0
        %3487 = vmatpush1.msra.mxu0 0.0
        %3488 = vmatprep.subr.mxu0 0.0
        %3489 = vmatpush1.msra.mxu0 0.0
        %3490 = vmatprep.subr.mxu0 0.0
        %3491 = vmatpush1.msra.mxu0 0.0
        %3492 = vmatprep.subr.mxu0 0.0
        %3493 = vmatpush1.msra.mxu0 0.0
        %3494 = vmatprep.subr.mxu0 0.0
        %3495 = vmatpush1.msra.mxu0 0.0
        %3496 = vmatprep.subr.mxu0 0.0
        %3497 = vmatpush1.msra.mxu0 0.0
        %3498 = vmatprep.subr.mxu0 0.0
        %3499 = vmatpush1.msra.mxu0 0.0
        %3500 = vmatprep.subr.mxu0 0.0
        %3501 = vmatpush1.msra.mxu0 0.0
        %3502 = vmatprep.subr.mxu0 0.0
        %3503 = vmatpush1.msra.mxu0 0.0
        %3504 = vmatprep.subr.mxu0 0.0
        %3505 = vmatpush1.msra.mxu0 0.0
        %3506 = vmatprep.subr.mxu0 0.0
        %3507 = vmatpush1.msra.mxu0 0.0
        %3508 = vmatprep.mubr.f32.mxu0 0.0
        %3509 = vmatmul.mubr.f32.gmra.mrb[0].mxu0 %v3436
        %v3510 = vpop.f32.mrb[0].mxu0
        %v3511 = vadd.f32 0.0, %v3510
        %v3512 = vpop.f32.mrb[0].mxu0
        %3513 = vmatprep.mubr.f32.mxu0 0.0
        %3514 = vmatmul.mubr.f32.gmra.mrb[0].mxu0 %v3439
        %v3515 = vpop.f32.mrb[0].mxu0
        %v3516 = vadd.f32 0.0, %v3515
        %v3517 = vpop.f32.mrb[0].mxu0
        %3518 = vmatprep.mubr.f32.mxu0 0.0
        %3519 = vmatmul.mubr.f32.gmra.mrb[0].mxu0 %v3442
        %v3520 = vpop.f32.mrb[0].mxu0
        %v3521 = vadd.f32 0.0, %v3520
        %v3522 = vpop.f32.mrb[0].mxu0
        %3523 = vdwg.mxu0
        %s3524 = scalar_lea.vmem [#allocation4], 72
        %3525 = vst.msk [vmem:[%s3524] sm:$0xff] %vm774, %v3511
        %3526 = vst.msk [vmem:[%s3524 + $0x8] sm:$0xff] %vm774, %v3516
        %3527 = vst.msk [vmem:[%s3524 + $0x10] sm:$0xf] %vm777, %v3521
        %s3528 = scalar_lea.vmem %s350, 24
        %v3529 = vld [vmem:[%s3528] sm:$0xff]
        %3530 = vmatprep.subr.mxu0 0.0
        %3531 = vmatpush1.msra.mxu0 %v3529
        %3532 = vmatprep.subr.mxu0 0.0
        %3533 = vmatpush1.msra.mxu0 0.0
        %3534 = vmatprep.subr.mxu0 0.0
        %3535 = vmatpush1.msra.mxu0 0.0
        %3536 = vmatprep.subr.mxu0 0.0
        %3537 = vmatpush1.msra.mxu0 0.0
        %3538 = vmatprep.subr.mxu0 0.0
        %3539 = vmatpush1.msra.mxu0 0.0
        %3540 = vmatprep.subr.mxu0 0.0
        %3541 = vmatpush1.msra.mxu0 0.0
        %3542 = vmatprep.subr.mxu0 0.0
        %3543 = vmatpush1.msra.mxu0 0.0
        %3544 = vmatprep.subr.mxu0 0.0
        %3545 = vmatpush1.msra.mxu0 0.0
        %3546 = vmatprep.subr.mxu0 0.0
        %3547 = vmatpush1.msra.mxu0 0.0
        %3548 = vmatprep.subr.mxu0 0.0
        %3549 = vmatpush1.msra.mxu0 0.0
        %3550 = vmatprep.subr.mxu0 0.0
        %3551 = vmatpush1.msra.mxu0 0.0
        %3552 = vmatprep.subr.mxu0 0.0
        %3553 = vmatpush1.msra.mxu0 0.0
        %3554 = vmatprep.subr.mxu0 0.0
        %3555 = vmatpush1.msra.mxu0 0.0
        %3556 = vmatprep.subr.mxu0 0.0
        %3557 = vmatpush1.msra.mxu0 0.0
        %3558 = vmatprep.subr.mxu0 0.0
        %3559 = vmatpush1.msra.mxu0 0.0
        %3560 = vmatprep.subr.mxu0 0.0
        %3561 = vmatpush1.msra.mxu0 0.0
        %3562 = vmatprep.subr.mxu0 0.0
        %3563 = vmatpush1.msra.mxu0 0.0
        %3564 = vmatprep.subr.mxu0 0.0
        %3565 = vmatpush1.msra.mxu0 0.0
        %3566 = vmatprep.subr.mxu0 0.0
        %3567 = vmatpush1.msra.mxu0 0.0
        %3568 = vmatprep.subr.mxu0 0.0
        %3569 = vmatpush1.msra.mxu0 0.0
        %3570 = vmatprep.subr.mxu0 0.0
        %3571 = vmatpush1.msra.mxu0 0.0
        %3572 = vmatprep.subr.mxu0 0.0
        %3573 = vmatpush1.msra.mxu0 0.0
        %3574 = vmatprep.subr.mxu0 0.0
        %3575 = vmatpush1.msra.mxu0 0.0
        %3576 = vmatprep.subr.mxu0 0.0
        %3577 = vmatpush1.msra.mxu0 0.0
        %3578 = vmatprep.subr.mxu0 0.0
        %3579 = vmatpush1.msra.mxu0 0.0
        %3580 = vmatprep.subr.mxu0 0.0
        %3581 = vmatpush1.msra.mxu0 0.0
        %3582 = vmatprep.subr.mxu0 0.0
        %3583 = vmatpush1.msra.mxu0 0.0
        %3584 = vmatprep.subr.mxu0 0.0
        %3585 = vmatpush1.msra.mxu0 0.0
        %3586 = vmatprep.subr.mxu0 0.0
        %3587 = vmatpush1.msra.mxu0 0.0
        %3588 = vmatprep.subr.mxu0 0.0
        %3589 = vmatpush1.msra.mxu0 0.0
        %3590 = vmatprep.subr.mxu0 0.0
        %3591 = vmatpush1.msra.mxu0 0.0
        %3592 = vmatprep.subr.mxu0 0.0
        %3593 = vmatpush1.msra.mxu0 0.0
        %3594 = vmatprep.mubr.f32.mxu0 0.0
        %3595 = vmatmul.mubr.f32.gmra.mrb[0].mxu0 %v954
        %v3596 = vpop.f32.mrb[0].mxu0
        %v3597 = vadd.f32 0.0, %v3596
        %v3598 = vpop.f32.mrb[0].mxu0
        %3599 = vmatprep.mubr.f32.mxu0 0.0
        %3600 = vmatmul.mubr.f32.gmra.mrb[0].mxu0 %v957
        %v3601 = vpop.f32.mrb[0].mxu0
        %v3602 = vadd.f32 0.0, %v3601
        %v3603 = vpop.f32.mrb[0].mxu0
        %3604 = vdwg.mxu0
        %v3606 = vsel %vm952, %v3597, 0
        %v3609 = vsel %vm952, %v3602, 0
        %3611 = vmatprep.subr.mxu0 0.0
        %3612 = vmatpush1.msra.mxu0 %v353
        %3613 = vmatprep.subr.mxu0 0.0
        %3614 = vmatpush1.msra.mxu0 0.0
        %3615 = vmatprep.subr.mxu0 0.0
        %3616 = vmatpush1.msra.mxu0 0.0
        %3617 = vmatprep.subr.mxu0 0.0
        %3618 = vmatpush1.msra.mxu0 0.0
        %3619 = vmatprep.subr.mxu0 0.0
        %3620 = vmatpush1.msra.mxu0 0.0
        %3621 = vmatprep.subr.mxu0 0.0
        %3622 = vmatpush1.msra.mxu0 0.0
        %3623 = vmatprep.subr.mxu0 0.0
        %3624 = vmatpush1.msra.mxu0 0.0
        %3625 = vmatprep.subr.mxu0 0.0
        %3626 = vmatpush1.msra.mxu0 0.0
        %3627 = vmatprep.subr.mxu0 0.0
        %3628 = vmatpush1.msra.mxu0 0.0
        %3629 = vmatprep.subr.mxu0 0.0
        %3630 = vmatpush1.msra.mxu0 0.0
        %3631 = vmatprep.subr.mxu0 0.0
        %3632 = vmatpush1.msra.mxu0 0.0
        %3633 = vmatprep.subr.mxu0 0.0
        %3634 = vmatpush1.msra.mxu0 0.0
        %3635 = vmatprep.subr.mxu0 0.0
        %3636 = vmatpush1.msra.mxu0 0.0
        %3637 = vmatprep.subr.mxu0 0.0
        %3638 = vmatpush1.msra.mxu0 0.0
        %3639 = vmatprep.subr.mxu0 0.0
        %3640 = vmatpush1.msra.mxu0 0.0
        %3641 = vmatprep.subr.mxu0 0.0
        %3642 = vmatpush1.msra.mxu0 0.0
        %3643 = vmatprep.subr.mxu0 0.0
        %3644 = vmatpush1.msra.mxu0 0.0
        %3645 = vmatprep.subr.mxu0 0.0
        %3646 = vmatpush1.msra.mxu0 0.0
        %3647 = vmatprep.subr.mxu0 0.0
        %3648 = vmatpush1.msra.mxu0 0.0
        %3649 = vmatprep.subr.mxu0 0.0
        %3650 = vmatpush1.msra.mxu0 0.0
        %3651 = vmatprep.subr.mxu0 0.0
        %3652 = vmatpush1.msra.mxu0 0.0
        %3653 = vmatprep.subr.mxu0 0.0
        %3654 = vmatpush1.msra.mxu0 0.0
        %3655 = vmatprep.subr.mxu0 0.0
        %3656 = vmatpush1.msra.mxu0 0.0
        %3657 = vmatprep.subr.mxu0 0.0
        %3658 = vmatpush1.msra.mxu0 0.0
        %3659 = vmatprep.subr.mxu0 0.0
        %3660 = vmatpush1.msra.mxu0 0.0
        %3661 = vmatprep.subr.mxu0 0.0
        %3662 = vmatpush1.msra.mxu0 0.0
        %3663 = vmatprep.subr.mxu0 0.0
        %3664 = vmatpush1.msra.mxu0 0.0
        %3665 = vmatprep.subr.mxu0 0.0
        %3666 = vmatpush1.msra.mxu0 0.0
        %3667 = vmatprep.subr.mxu0 0.0
        %3668 = vmatpush1.msra.mxu0 0.0
        %3669 = vmatprep.subr.mxu0 0.0
        %3670 = vmatpush1.msra.mxu0 0.0
        %3671 = vmatprep.subr.mxu0 0.0
        %3672 = vmatpush1.msra.mxu0 0.0
        %3673 = vmatprep.subr.mxu0 0.0
        %3674 = vmatpush1.msra.mxu0 0.0
        %3675 = vmatprep.mubr.f32.mxu0 0.0
        %3676 = vmatmul.mubr.f32.gmra.mrb[0].mxu0 %v3606
        %v3677 = vpop.f32.mrb[0].mxu0
        %v3678 = vadd.f32 0.0, %v3677
        %v3679 = vpop.f32.mrb[0].mxu0
        %3680 = vmatprep.mubr.f32.mxu0 0.0
        %3681 = vmatmul.mubr.f32.gmra.mrb[0].mxu0 %v3609
        %v3682 = vpop.f32.mrb[0].mxu0
        %v3683 = vadd.f32 0.0, %v3682
        %v3684 = vpop.f32.mrb[0].mxu0
        %3685 = vdwg.mxu0
        %3688 = vrot.lane.b32.xlu0 %v3678, 1
        %v3689 = vpop.permute.xlu0 %3688
        %3690 = vrot.lane.b32.xlu0 %v3683, 1
        %v3691 = vpop.permute.xlu0 %3690
        %3694 = vst.msk [vmem:[#allocation2 + $0x1] sm:$0xff] %vm374, %v3689
        %3695 = vst.msk [vmem:[#allocation2 + $0x9] sm:$0xff] %vm374, %v3691
        %s3696 = sld [smem:[#allocation5 + $0x1b]]
        %v3697 = vld [vmem:[#allocation2] sm:$0xff]
        %v3698 = vld [vmem:[#allocation2 + $0x8] sm:$0xff]
        %v3699 = vstv %s3696
        %v3700 = vmul.f32 %v3699, %v3697
        %v3701 = vmul.f32 %v3699, %v3698
        %v3702 = vadd.f32 %v3700, 0.0
        %v3703 = vadd.f32 %v3701, 0.0
        %s3704 = sld [smem:[#allocation5 + $0x1c]]
        %v3705 = vstv %s3704
        %v3706 = vmul.f32 %v3705, %v3697
        %v3707 = vmul.f32 %v3705, %v3698
        %3710 = vrot.lane.b32.xlu0 %v3706, 127
        %v3711 = vpop.permute.xlu0 %3710
        %3712 = vrot.lane.b32.xlu0 %v3707, 127
        %v3713 = vpop.permute.xlu0 %3712
        %v3716 = vadd.f32 %v3702, %v3711
        %v3717 = vadd.f32 %v3703, %v3713
        %s3718 = sld [smem:[#allocation5 + $0x1d]]
        %v3719 = vstv %s3718
        %v3720 = vmul.f32 %v3719, %v3697
        %v3721 = vmul.f32 %v3719, %v3698
        %3724 = vrot.lane.b32.xlu0 %v3720, 126
        %v3725 = vpop.permute.xlu0 %3724
        %3726 = vrot.lane.b32.xlu0 %v3721, 126
        %v3727 = vpop.permute.xlu0 %3726
        %v3730 = vadd.f32 %v3716, %v3725
        %v3731 = vadd.f32 %v3717, %v3727
        %s3732 = sld [smem:[#allocation5 + $0x1e]]
        %v3733 = vld [vmem:[#allocation2 + $0x1] sm:$0xff]
        %v3734 = vld [vmem:[#allocation2 + $0x9] sm:$0xff]
        %v3735 = vstv %s3732
        %v3736 = vmul.f32 %v3735, %v3733
        %v3737 = vmul.f32 %v3735, %v3734
        %v3738 = vadd.f32 %v3730, %v3736
        %v3739 = vadd.f32 %v3731, %v3737
        %s3740 = sld [smem:[#allocation5 + $0x1f]]
        %v3741 = vstv %s3740
        %v3742 = vmul.f32 %v3741, %v3733
        %v3743 = vmul.f32 %v3741, %v3734
        %3746 = vrot.lane.b32.xlu0 %v3742, 127
        %v3747 = vpop.permute.xlu0 %3746
        %3748 = vrot.lane.b32.xlu0 %v3743, 127
        %v3749 = vpop.permute.xlu0 %3748
        %v3752 = vadd.f32 %v3738, %v3747
        %v3753 = vadd.f32 %v3739, %v3749
        %s3754 = sld [smem:[#allocation5 + $0x20]]
        %v3755 = vstv %s3754
        %v3756 = vmul.f32 %v3755, %v3733
        %v3757 = vmul.f32 %v3755, %v3734
        %3760 = vrot.lane.b32.xlu0 %v3756, 126
        %v3761 = vpop.permute.xlu0 %3760
        %3762 = vrot.lane.b32.xlu0 %v3757, 126
        %v3763 = vpop.permute.xlu0 %3762
        %v3766 = vadd.f32 %v3752, %v3761
        %v3767 = vadd.f32 %v3753, %v3763
        %s3768 = sld [smem:[#allocation5 + $0x21]]
        %v3769 = vld [vmem:[#allocation2 + $0x2] sm:$0xff]
        %v3770 = vld [vmem:[#allocation2 + $0xa] sm:$0xff]
        %v3771 = vstv %s3768
        %v3772 = vmul.f32 %v3771, %v3769
        %v3773 = vmul.f32 %v3771, %v3770
        %v3774 = vadd.f32 %v3766, %v3772
        %v3775 = vadd.f32 %v3767, %v3773
        %s3776 = sld [smem:[#allocation5 + $0x22]]
        %v3777 = vstv %s3776
        %v3778 = vmul.f32 %v3777, %v3769
        %v3779 = vmul.f32 %v3777, %v3770
        %3782 = vrot.lane.b32.xlu0 %v3778, 127
        %v3783 = vpop.permute.xlu0 %3782
        %3784 = vrot.lane.b32.xlu0 %v3779, 127
        %v3785 = vpop.permute.xlu0 %3784
        %v3788 = vadd.f32 %v3774, %v3783
        %v3789 = vadd.f32 %v3775, %v3785
        %s3790 = sld [smem:[#allocation5 + $0x23]]
        %v3791 = vstv %s3790
        %v3792 = vmul.f32 %v3791, %v3769
        %v3793 = vmul.f32 %v3791, %v3770
        %3796 = vrot.lane.b32.xlu0 %v3792, 126
        %v3797 = vpop.permute.xlu0 %3796
        %3798 = vrot.lane.b32.xlu0 %v3793, 126
        %v3799 = vpop.permute.xlu0 %3798
        %v3802 = vadd.f32 %v3788, %v3797
        %v3803 = vadd.f32 %v3789, %v3799
        %s3804 = sld [smem:[#allocation8 + $0x3]]
        %v3805 = vstv %s3804
        %v3806 = vadd.f32 %v3802, %v3805
        %v3807 = vadd.f32 %v3803, %v3805
        %v3808 = vld [vmem:[#allocation3] sm:$0xff]
        %v3809 = vld [vmem:[#allocation3 + $0x8] sm:$0xff]
        %v3810 = vmul.f32 %v1235, %v3808
        %v3811 = vmul.f32 %v1236, %v3809
        %v3812 = vld [vmem:[%s1637] sm:$0xff]
        %v3813 = vld [vmem:[%s1637 + $0x8] sm:$0xff]
        %v3814 = vmul.f32 %v2092, %v3812
        %v3815 = vmul.f32 %v2093, %v3813
        %v3816 = vadd.f32 %v3810, %v3814
        %v3817 = vadd.f32 %v3811, %v3815
        %v3818 = vld [vmem:[%s2494] sm:$0xff]
        %v3819 = vld [vmem:[%s2494 + $0x8] sm:$0xff]
        %v3820 = vmul.f32 %v2949, %v3818
        %v3821 = vmul.f32 %v2950, %v3819
        %v3822 = vadd.f32 %v3816, %v3820
        %v3823 = vadd.f32 %v3817, %v3821
        %v3824 = vld [vmem:[%s3351] sm:$0xff]
        %v3825 = vld [vmem:[%s3351 + $0x8] sm:$0xff]
        %v3826 = vmul.f32 %v3806, %v3824
        %v3827 = vmul.f32 %v3807, %v3825
        %v3828 = vadd.f32 %v3822, %v3826
        %v3829 = vadd.f32 %v3823, %v3827
        %3832 = vrot.lane.b32.xlu0 %v3808, 126
        %v3833 = vpop.permute.xlu0 %3832
        %3834 = vrot.lane.b32.xlu0 %v3809, 126
        %v3835 = vpop.permute.xlu0 %3834
        %v3838 = vmul.f32 %v1235, %v3833
        %v3839 = vmul.f32 %v1236, %v3835
        %3842 = vrot.lane.b32.xlu0 %v3812, 126
        %v3843 = vpop.permute.xlu0 %3842
        %3844 = vrot.lane.b32.xlu0 %v3813, 126
        %v3845 = vpop.permute.xlu0 %3844
        %v3848 = vmul.f32 %v2092, %v3843
        %v3849 = vmul.f32 %v2093, %v3845
        %v3850 = vadd.f32 %v3838, %v3848
        %v3851 = vadd.f32 %v3839, %v3849
        %3854 = vrot.lane.b32.xlu0 %v3818, 126
        %v3855 = vpop.permute.xlu0 %3854
        %3856 = vrot.lane.b32.xlu0 %v3819, 126
        %v3857 = vpop.permute.xlu0 %3856
        %v3860 = vmul.f32 %v2949, %v3855
        %v3861 = vmul.f32 %v2950, %v3857
        %v3862 = vadd.f32 %v3850, %v3860
        %v3863 = vadd.f32 %v3851, %v3861
        %3866 = vrot.lane.b32.xlu0 %v3824, 126
        %v3867 = vpop.permute.xlu0 %3866
        %3868 = vrot.lane.b32.xlu0 %v3825, 126
        %v3869 = vpop.permute.xlu0 %3868
        %v3872 = vmul.f32 %v3806, %v3867
        %v3873 = vmul.f32 %v3807, %v3869
        %v3874 = vadd.f32 %v3862, %v3872
        %v3875 = vadd.f32 %v3863, %v3873
        %3876 = vrot.lane.b32.xlu0 %v3808, 124
        %v3877 = vpop.permute.xlu0 %3876
        %3878 = vrot.lane.b32.xlu0 %v3809, 124
        %v3879 = vpop.permute.xlu0 %3878
        %v3882 = vmul.f32 %v1235, %v3877
        %v3883 = vmul.f32 %v1236, %v3879
        %3884 = vrot.lane.b32.xlu0 %v3812, 124
        %v3885 = vpop.permute.xlu0 %3884
        %3886 = vrot.lane.b32.xlu0 %v3813, 124
        %v3887 = vpop.permute.xlu0 %3886
        %v3890 = vmul.f32 %v2092, %v3885
        %v3891 = vmul.f32 %v2093, %v3887
        %v3892 = vadd.f32 %v3882, %v3890
        %v3893 = vadd.f32 %v3883, %v3891
        %3894 = vrot.lane.b32.xlu0 %v3818, 124
        %v3895 = vpop.permute.xlu0 %3894
        %3896 = vrot.lane.b32.xlu0 %v3819, 124
        %v3897 = vpop.permute.xlu0 %3896
        %v3900 = vmul.f32 %v2949, %v3895
        %v3901 = vmul.f32 %v2950, %v3897
        %v3902 = vadd.f32 %v3892, %v3900
        %v3903 = vadd.f32 %v3893, %v3901
        %3904 = vrot.lane.b32.xlu0 %v3824, 124
        %v3905 = vpop.permute.xlu0 %3904
        %3906 = vrot.lane.b32.xlu0 %v3825, 124
        %v3907 = vpop.permute.xlu0 %3906
        %v3910 = vmul.f32 %v3806, %v3905
        %v3911 = vmul.f32 %v3807, %v3907
        %v3912 = vadd.f32 %v3902, %v3910
        %v3913 = vadd.f32 %v3903, %v3911
        %v3914 = vld [vmem:[#allocation3 + $0x2] sm:$0xff]
        %v3915 = vld [vmem:[#allocation3 + $0xa] sm:$0xff]
        %v3916 = vmul.f32 %v1235, %v3914
        %v3917 = vmul.f32 %v1236, %v3915
        %v3918 = vld [vmem:[%s1637 + $0x2] sm:$0xff]
        %v3919 = vld [vmem:[%s1637 + $0xa] sm:$0xff]
        %v3920 = vmul.f32 %v2092, %v3918
        %v3921 = vmul.f32 %v2093, %v3919
        %v3922 = vadd.f32 %v3916, %v3920
        %v3923 = vadd.f32 %v3917, %v3921
        %v3924 = vld [vmem:[%s2494 + $0x2] sm:$0xff]
        %v3925 = vld [vmem:[%s2494 + $0xa] sm:$0xff]
        %v3926 = vmul.f32 %v2949, %v3924
        %v3927 = vmul.f32 %v2950, %v3925
        %v3928 = vadd.f32 %v3922, %v3926
        %v3929 = vadd.f32 %v3923, %v3927
        %v3930 = vld [vmem:[%s3351 + $0x2] sm:$0xff]
        %v3931 = vld [vmem:[%s3351 + $0xa] sm:$0xff]
        %v3932 = vmul.f32 %v3806, %v3930
        %v3933 = vmul.f32 %v3807, %v3931
        %v3934 = vadd.f32 %v3928, %v3932
        %v3935 = vadd.f32 %v3929, %v3933
        %3938 = vrot.lane.b32.xlu0 %v3914, 126
        %v3939 = vpop.permute.xlu0 %3938
        %3940 = vrot.lane.b32.xlu0 %v3915, 126
        %v3941 = vpop.permute.xlu0 %3940
        %v3944 = vmul.f32 %v1235, %v3939
        %v3945 = vmul.f32 %v1236, %v3941
        %3948 = vrot.lane.b32.xlu0 %v3918, 126
        %v3949 = vpop.permute.xlu0 %3948
        %3950 = vrot.lane.b32.xlu0 %v3919, 126
        %v3951 = vpop.permute.xlu0 %3950
        %v3954 = vmul.f32 %v2092, %v3949
        %v3955 = vmul.f32 %v2093, %v3951
        %v3956 = vadd.f32 %v3944, %v3954
        %v3957 = vadd.f32 %v3945, %v3955
        %3960 = vrot.lane.b32.xlu0 %v3924, 126
        %v3961 = vpop.permute.xlu0 %3960
        %3962 = vrot.lane.b32.xlu0 %v3925, 126
        %v3963 = vpop.permute.xlu0 %3962
        %v3966 = vmul.f32 %v2949, %v3961
        %v3967 = vmul.f32 %v2950, %v3963
        %v3968 = vadd.f32 %v3956, %v3966
        %v3969 = vadd.f32 %v3957, %v3967
        %3972 = vrot.lane.b32.xlu0 %v3930, 126
        %v3973 = vpop.permute.xlu0 %3972
        %3974 = vrot.lane.b32.xlu0 %v3931, 126
        %v3975 = vpop.permute.xlu0 %3974
        %v3978 = vmul.f32 %v3806, %v3973
        %v3979 = vmul.f32 %v3807, %v3975
        %v3980 = vadd.f32 %v3968, %v3978
        %v3981 = vadd.f32 %v3969, %v3979
        %3982 = vrot.lane.b32.xlu0 %v3914, 124
        %v3983 = vpop.permute.xlu0 %3982
        %3984 = vrot.lane.b32.xlu0 %v3915, 124
        %v3985 = vpop.permute.xlu0 %3984
        %v3988 = vmul.f32 %v1235, %v3983
        %v3989 = vmul.f32 %v1236, %v3985
        %3990 = vrot.lane.b32.xlu0 %v3918, 124
        %v3991 = vpop.permute.xlu0 %3990
        %3992 = vrot.lane.b32.xlu0 %v3919, 124
        %v3993 = vpop.permute.xlu0 %3992
        %v3996 = vmul.f32 %v2092, %v3991
        %v3997 = vmul.f32 %v2093, %v3993
        %v3998 = vadd.f32 %v3988, %v3996
        %v3999 = vadd.f32 %v3989, %v3997
        %4000 = vrot.lane.b32.xlu0 %v3924, 124
        %v4001 = vpop.permute.xlu0 %4000
        %4002 = vrot.lane.b32.xlu0 %v3925, 124
        %v4003 = vpop.permute.xlu0 %4002
        %v4006 = vmul.f32 %v2949, %v4001
        %v4007 = vmul.f32 %v2950, %v4003
        %v4008 = vadd.f32 %v3998, %v4006
        %v4009 = vadd.f32 %v3999, %v4007
        %4010 = vrot.lane.b32.xlu0 %v3930, 124
        %v4011 = vpop.permute.xlu0 %4010
        %4012 = vrot.lane.b32.xlu0 %v3931, 124
        %v4013 = vpop.permute.xlu0 %4012
        %v4016 = vmul.f32 %v3806, %v4011
        %v4017 = vmul.f32 %v3807, %v4013
        %v4018 = vadd.f32 %v4008, %v4016
        %v4019 = vadd.f32 %v4009, %v4017
        %v4020 = vld [vmem:[#allocation3 + $0x4] sm:$0xff]
        %v4021 = vld [vmem:[#allocation3 + $0xc] sm:$0xff]
        %v4022 = vmul.f32 %v1235, %v4020
        %v4023 = vmul.f32 %v1236, %v4021
        %v4024 = vld [vmem:[%s1637 + $0x4] sm:$0xff]
        %v4025 = vld [vmem:[%s1637 + $0xc] sm:$0xff]
        %v4026 = vmul.f32 %v2092, %v4024
        %v4027 = vmul.f32 %v2093, %v4025
        %v4028 = vadd.f32 %v4022, %v4026
        %v4029 = vadd.f32 %v4023, %v4027
        %v4030 = vld [vmem:[%s2494 + $0x4] sm:$0xff]
        %v4031 = vld [vmem:[%s2494 + $0xc] sm:$0xff]
        %v4032 = vmul.f32 %v2949, %v4030
        %v4033 = vmul.f32 %v2950, %v4031
        %v4034 = vadd.f32 %v4028, %v4032
        %v4035 = vadd.f32 %v4029, %v4033
        %v4036 = vld [vmem:[%s3351 + $0x4] sm:$0xff]
        %v4037 = vld [vmem:[%s3351 + $0xc] sm:$0xff]
        %v4038 = vmul.f32 %v3806, %v4036
        %v4039 = vmul.f32 %v3807, %v4037
        %v4040 = vadd.f32 %v4034, %v4038
        %v4041 = vadd.f32 %v4035, %v4039
        %4044 = vrot.lane.b32.xlu0 %v4020, 126
        %v4045 = vpop.permute.xlu0 %4044
        %4046 = vrot.lane.b32.xlu0 %v4021, 126
        %v4047 = vpop.permute.xlu0 %4046
        %v4050 = vmul.f32 %v1235, %v4045
        %v4051 = vmul.f32 %v1236, %v4047
        %4054 = vrot.lane.b32.xlu0 %v4024, 126
        %v4055 = vpop.permute.xlu0 %4054
        %4056 = vrot.lane.b32.xlu0 %v4025, 126
        %v4057 = vpop.permute.xlu0 %4056
        %v4060 = vmul.f32 %v2092, %v4055
        %v4061 = vmul.f32 %v2093, %v4057
        %v4062 = vadd.f32 %v4050, %v4060
        %v4063 = vadd.f32 %v4051, %v4061
        %4066 = vrot.lane.b32.xlu0 %v4030, 126
        %v4067 = vpop.permute.xlu0 %4066
        %4068 = vrot.lane.b32.xlu0 %v4031, 126
        %v4069 = vpop.permute.xlu0 %4068
        %v4072 = vmul.f32 %v2949, %v4067
        %v4073 = vmul.f32 %v2950, %v4069
        %v4074 = vadd.f32 %v4062, %v4072
        %v4075 = vadd.f32 %v4063, %v4073
        %4078 = vrot.lane.b32.xlu0 %v4036, 126
        %v4079 = vpop.permute.xlu0 %4078
        %4080 = vrot.lane.b32.xlu0 %v4037, 126
        %v4081 = vpop.permute.xlu0 %4080
        %v4084 = vmul.f32 %v3806, %v4079
        %v4085 = vmul.f32 %v3807, %v4081
        %v4086 = vadd.f32 %v4074, %v4084
        %v4087 = vadd.f32 %v4075, %v4085
        %4088 = vrot.lane.b32.xlu0 %v4020, 124
        %v4089 = vpop.permute.xlu0 %4088
        %4090 = vrot.lane.b32.xlu0 %v4021, 124
        %v4091 = vpop.permute.xlu0 %4090
        %v4094 = vmul.f32 %v1235, %v4089
        %v4095 = vmul.f32 %v1236, %v4091
        %4096 = vrot.lane.b32.xlu0 %v4024, 124
        %v4097 = vpop.permute.xlu0 %4096
        %4098 = vrot.lane.b32.xlu0 %v4025, 124
        %v4099 = vpop.permute.xlu0 %4098
        %v4102 = vmul.f32 %v2092, %v4097
        %v4103 = vmul.f32 %v2093, %v4099
        %v4104 = vadd.f32 %v4094, %v4102
        %v4105 = vadd.f32 %v4095, %v4103
        %4106 = vrot.lane.b32.xlu0 %v4030, 124
        %v4107 = vpop.permute.xlu0 %4106
        %4108 = vrot.lane.b32.xlu0 %v4031, 124
        %v4109 = vpop.permute.xlu0 %4108
        %v4112 = vmul.f32 %v2949, %v4107
        %v4113 = vmul.f32 %v2950, %v4109
        %v4114 = vadd.f32 %v4104, %v4112
        %v4115 = vadd.f32 %v4105, %v4113
        %4116 = vrot.lane.b32.xlu0 %v4036, 124
        %v4117 = vpop.permute.xlu0 %4116
        %4118 = vrot.lane.b32.xlu0 %v4037, 124
        %v4119 = vpop.permute.xlu0 %4118
        %v4122 = vmul.f32 %v3806, %v4117
        %v4123 = vmul.f32 %v3807, %v4119
        %v4124 = vadd.f32 %v4114, %v4122
        %v4125 = vadd.f32 %v4115, %v4123
        %v4126 = vmax.f32 %v3828, %v3874
        %v4127 = vmax.f32 %v3829, %v3875
        %v4128 = vmax.f32 %v4126, %v3912
        %v4129 = vmax.f32 %v4127, %v3913
        %v4130 = vmax.f32 %v4128, %v3934
        %v4131 = vmax.f32 %v4129, %v3935
        %v4132 = vmax.f32 %v4130, %v3980
        %v4133 = vmax.f32 %v4131, %v3981
        %v4134 = vmax.f32 %v4132, %v4018
        %v4135 = vmax.f32 %v4133, %v4019
        %v4136 = vmax.f32 %v4134, %v4040
        %v4137 = vmax.f32 %v4135, %v4041
        %v4138 = vmax.f32 %v4136, %v4086
        %v4139 = vmax.f32 %v4137, %v4087
        %v4140 = vmax.f32 %v4138, %v4124
        %v4141 = vmax.f32 %v4139, %v4125
        %v4142 = vsub.f32 %v3828, %v4140
        %v4143 = vsub.f32 %v3829, %v4141
        %v4144 = vmul.f32 %v4142, 1.442695
        %v4145 = vpow.pop %v4144
        %v4146 = vmul.f32 %v4143, 1.442695
        %v4147 = vpow.pop %v4146
        %v4148 = vadd.f32 %v4145, 0.0
        %v4149 = vadd.f32 %v4147, 0.0
        %v4150 = vld [vmem:[#allocation4] sm:$0xff]
        %v4151 = vld [vmem:[#allocation4 + $0x8] sm:$0xff]
        %v4152 = vmul.f32 %v4145, %v4150
        %v4153 = vmul.f32 %v4147, %v4151
        %v4154 = vadd.f32 %v4152, 0.0
        %v4155 = vadd.f32 %v4153, 0.0
        %v4156 = vld [vmem:[%s1810] sm:$0xff]
        %v4157 = vld [vmem:[%s1810 + $0x8] sm:$0xff]
        %v4158 = vmul.f32 %v4145, %v4156
        %v4159 = vmul.f32 %v4147, %v4157
        %v4160 = vadd.f32 %v4158, 0.0
        %v4161 = vadd.f32 %v4159, 0.0
        %v4162 = vld [vmem:[%s2667] sm:$0xff]
        %v4163 = vld [vmem:[%s2667 + $0x8] sm:$0xff]
        %v4164 = vmul.f32 %v4145, %v4162
        %v4165 = vmul.f32 %v4147, %v4163
        %v4166 = vadd.f32 %v4164, 0.0
        %v4167 = vadd.f32 %v4165, 0.0
        %v4168 = vld [vmem:[%s3524] sm:$0xff]
        %v4169 = vld [vmem:[%s3524 + $0x8] sm:$0xff]
        %v4170 = vmul.f32 %v4145, %v4168
        %v4171 = vmul.f32 %v4147, %v4169
        %v4172 = vadd.f32 %v4170, 0.0
        %v4173 = vadd.f32 %v4171, 0.0
        %v4174 = vsub.f32 %v3874, %v4140
        %v4175 = vsub.f32 %v3875, %v4141
        %v4176 = vmul.f32 %v4174, 1.442695
        %v4177 = vpow.pop %v4176
        %v4178 = vmul.f32 %v4175, 1.442695
        %v4179 = vpow.pop %v4178
        %v4180 = vadd.f32 %v4148, %v4177
        %v4181 = vadd.f32 %v4149, %v4179
        %4184 = vrot.lane.b32.xlu0 %v4150, 126
        %v4185 = vpop.permute.xlu0 %4184
        %4186 = vrot.lane.b32.xlu0 %v4151, 126
        %v4187 = vpop.permute.xlu0 %4186
        %v4190 = vmul.f32 %v4177, %v4185
        %v4191 = vmul.f32 %v4179, %v4187
        %v4192 = vadd.f32 %v4154, %v4190
        %v4193 = vadd.f32 %v4155, %v4191
        %4196 = vrot.lane.b32.xlu0 %v4156, 126
        %v4197 = vpop.permute.xlu0 %4196
        %4198 = vrot.lane.b32.xlu0 %v4157, 126
        %v4199 = vpop.permute.xlu0 %4198
        %v4202 = vmul.f32 %v4177, %v4197
        %v4203 = vmul.f32 %v4179, %v4199
        %v4204 = vadd.f32 %v4160, %v4202
        %v4205 = vadd.f32 %v4161, %v4203
        %4208 = vrot.lane.b32.xlu0 %v4162, 126
        %v4209 = vpop.permute.xlu0 %4208
        %4210 = vrot.lane.b32.xlu0 %v4163, 126
        %v4211 = vpop.permute.xlu0 %4210
        %v4214 = vmul.f32 %v4177, %v4209
        %v4215 = vmul.f32 %v4179, %v4211
        %v4216 = vadd.f32 %v4166, %v4214
        %v4217 = vadd.f32 %v4167, %v4215
        %4220 = vrot.lane.b32.xlu0 %v4168, 126
        %v4221 = vpop.permute.xlu0 %4220
        %4222 = vrot.lane.b32.xlu0 %v4169, 126
        %v4223 = vpop.permute.xlu0 %4222
        %v4226 = vmul.f32 %v4177, %v4221
        %v4227 = vmul.f32 %v4179, %v4223
        %v4228 = vadd.f32 %v4172, %v4226
        %v4229 = vadd.f32 %v4173, %v4227
        %v4230 = vsub.f32 %v3912, %v4140
        %v4231 = vsub.f32 %v3913, %v4141
        %v4232 = vmul.f32 %v4230, 1.442695
        %v4233 = vpow.pop %v4232
        %v4234 = vmul.f32 %v4231, 1.442695
        %v4235 = vpow.pop %v4234
        %v4236 = vadd.f32 %v4180, %v4233
        %v4237 = vadd.f32 %v4181, %v4235
        %4238 = vrot.lane.b32.xlu0 %v4150, 124
        %v4239 = vpop.permute.xlu0 %4238
        %4240 = vrot.lane.b32.xlu0 %v4151, 124
        %v4241 = vpop.permute.xlu0 %4240
        %v4244 = vmul.f32 %v4233, %v4239
        %v4245 = vmul.f32 %v4235, %v4241
        %v4246 = vadd.f32 %v4192, %v4244
        %v4247 = vadd.f32 %v4193, %v4245
        %4248 = vrot.lane.b32.xlu0 %v4156, 124
        %v4249 = vpop.permute.xlu0 %4248
        %4250 = vrot.lane.b32.xlu0 %v4157, 124
        %v4251 = vpop.permute.xlu0 %4250
        %v4254 = vmul.f32 %v4233, %v4249
        %v4255 = vmul.f32 %v4235, %v4251
        %v4256 = vadd.f32 %v4204, %v4254
        %v4257 = vadd.f32 %v4205, %v4255
        %4258 = vrot.lane.b32.xlu0 %v4162, 124
        %v4259 = vpop.permute.xlu0 %4258
        %4260 = vrot.lane.b32.xlu0 %v4163, 124
        %v4261 = vpop.permute.xlu0 %4260
        %v4264 = vmul.f32 %v4233, %v4259
        %v4265 = vmul.f32 %v4235, %v4261
        %v4266 = vadd.f32 %v4216, %v4264
        %v4267 = vadd.f32 %v4217, %v4265
        %4268 = vrot.lane.b32.xlu0 %v4168, 124
        %v4269 = vpop.permute.xlu0 %4268
        %4270 = vrot.lane.b32.xlu0 %v4169, 124
        %v4271 = vpop.permute.xlu0 %4270
        %v4274 = vmul.f32 %v4233, %v4269
        %v4275 = vmul.f32 %v4235, %v4271
        %v4276 = vadd.f32 %v4228, %v4274
        %v4277 = vadd.f32 %v4229, %v4275
        %v4278 = vsub.f32 %v3934, %v4140
        %v4279 = vsub.f32 %v3935, %v4141
        %v4280 = vmul.f32 %v4278, 1.442695
        %v4281 = vpow.pop %v4280
        %v4282 = vmul.f32 %v4279, 1.442695
        %v4283 = vpow.pop %v4282
        %v4284 = vadd.f32 %v4236, %v4281
        %v4285 = vadd.f32 %v4237, %v4283
        %v4286 = vld [vmem:[#allocation4 + $0x2] sm:$0xff]
        %v4287 = vld [vmem:[#allocation4 + $0xa] sm:$0xff]
        %v4288 = vmul.f32 %v4281, %v4286
        %v4289 = vmul.f32 %v4283, %v4287
        %v4290 = vadd.f32 %v4246, %v4288
        %v4291 = vadd.f32 %v4247, %v4289
        %v4292 = vld [vmem:[%s1810 + $0x2] sm:$0xff]
        %v4293 = vld [vmem:[%s1810 + $0xa] sm:$0xff]
        %v4294 = vmul.f32 %v4281, %v4292
        %v4295 = vmul.f32 %v4283, %v4293
        %v4296 = vadd.f32 %v4256, %v4294
        %v4297 = vadd.f32 %v4257, %v4295
        %v4298 = vld [vmem:[%s2667 + $0x2] sm:$0xff]
        %v4299 = vld [vmem:[%s2667 + $0xa] sm:$0xff]
        %v4300 = vmul.f32 %v4281, %v4298
        %v4301 = vmul.f32 %v4283, %v4299
        %v4302 = vadd.f32 %v4266, %v4300
        %v4303 = vadd.f32 %v4267, %v4301
        %v4304 = vld [vmem:[%s3524 + $0x2] sm:$0xff]
        %v4305 = vld [vmem:[%s3524 + $0xa] sm:$0xff]
        %v4306 = vmul.f32 %v4281, %v4304
        %v4307 = vmul.f32 %v4283, %v4305
        %v4308 = vadd.f32 %v4276, %v4306
        %v4309 = vadd.f32 %v4277, %v4307
        %v4310 = vsub.f32 %v3980, %v4140
        %v4311 = vsub.f32 %v3981, %v4141
        %v4312 = vmul.f32 %v4310, 1.442695
        %v4313 = vpow.pop %v4312
        %v4314 = vmul.f32 %v4311, 1.442695
        %v4315 = vpow.pop %v4314
        %v4316 = vadd.f32 %v4284, %v4313
        %v4317 = vadd.f32 %v4285, %v4315
        %4320 = vrot.lane.b32.xlu0 %v4286, 126
        %v4321 = vpop.permute.xlu0 %4320
        %4322 = vrot.lane.b32.xlu0 %v4287, 126
        %v4323 = vpop.permute.xlu0 %4322
        %v4326 = vmul.f32 %v4313, %v4321
        %v4327 = vmul.f32 %v4315, %v4323
        %v4328 = vadd.f32 %v4290, %v4326
        %v4329 = vadd.f32 %v4291, %v4327
        %4332 = vrot.lane.b32.xlu0 %v4292, 126
        %v4333 = vpop.permute.xlu0 %4332
        %4334 = vrot.lane.b32.xlu0 %v4293, 126
        %v4335 = vpop.permute.xlu0 %4334
        %v4338 = vmul.f32 %v4313, %v4333
        %v4339 = vmul.f32 %v4315, %v4335
        %v4340 = vadd.f32 %v4296, %v4338
        %v4341 = vadd.f32 %v4297, %v4339
        %4344 = vrot.lane.b32.xlu0 %v4298, 126
        %v4345 = vpop.permute.xlu0 %4344
        %4346 = vrot.lane.b32.xlu0 %v4299, 126
        %v4347 = vpop.permute.xlu0 %4346
        %v4350 = vmul.f32 %v4313, %v4345
        %v4351 = vmul.f32 %v4315, %v4347
        %v4352 = vadd.f32 %v4302, %v4350
        %v4353 = vadd.f32 %v4303, %v4351
        %4356 = vrot.lane.b32.xlu0 %v4304, 126
        %v4357 = vpop.permute.xlu0 %4356
        %4358 = vrot.lane.b32.xlu0 %v4305, 126
        %v4359 = vpop.permute.xlu0 %4358
        %v4362 = vmul.f32 %v4313, %v4357
        %v4363 = vmul.f32 %v4315, %v4359
        %v4364 = vadd.f32 %v4308, %v4362
        %v4365 = vadd.f32 %v4309, %v4363
        %v4366 = vsub.f32 %v4018, %v4140
        %v4367 = vsub.f32 %v4019, %v4141
        %v4368 = vmul.f32 %v4366, 1.442695
        %v4369 = vpow.pop %v4368
        %v4370 = vmul.f32 %v4367, 1.442695
        %v4371 = vpow.pop %v4370
        %v4372 = vadd.f32 %v4316, %v4369
        %v4373 = vadd.f32 %v4317, %v4371
        %4374 = vrot.lane.b32.xlu0 %v4286, 124
        %v4375 = vpop.permute.xlu0 %4374
        %4376 = vrot.lane.b32.xlu0 %v4287, 124
        %v4377 = vpop.permute.xlu0 %4376
        %v4380 = vmul.f32 %v4369, %v4375
        %v4381 = vmul.f32 %v4371, %v4377
        %v4382 = vadd.f32 %v4328, %v4380
        %v4383 = vadd.f32 %v4329, %v4381
        %4384 = vrot.lane.b32.xlu0 %v4292, 124
        %v4385 = vpop.permute.xlu0 %4384
        %4386 = vrot.lane.b32.xlu0 %v4293, 124
        %v4387 = vpop.permute.xlu0 %4386
        %v4390 = vmul.f32 %v4369, %v4385
        %v4391 = vmul.f32 %v4371, %v4387
        %v4392 = vadd.f32 %v4340, %v4390
        %v4393 = vadd.f32 %v4341, %v4391
        %4394 = vrot.lane.b32.xlu0 %v4298, 124
        %v4395 = vpop.permute.xlu0 %4394
        %4396 = vrot.lane.b32.xlu0 %v4299, 124
        %v4397 = vpop.permute.xlu0 %4396
        %v4400 = vmul.f32 %v4369, %v4395
        %v4401 = vmul.f32 %v4371, %v4397
        %v4402 = vadd.f32 %v4352, %v4400
        %v4403 = vadd.f32 %v4353, %v4401
        %4404 = vrot.lane.b32.xlu0 %v4304, 124
        %v4405 = vpop.permute.xlu0 %4404
        %4406 = vrot.lane.b32.xlu0 %v4305, 124
        %v4407 = vpop.permute.xlu0 %4406
        %v4410 = vmul.f32 %v4369, %v4405
        %v4411 = vmul.f32 %v4371, %v4407
        %v4412 = vadd.f32 %v4364, %v4410
        %v4413 = vadd.f32 %v4365, %v4411
        %v4414 = vsub.f32 %v4040, %v4140
        %v4415 = vsub.f32 %v4041, %v4141
        %v4416 = vmul.f32 %v4414, 1.442695
        %v4417 = vpow.pop %v4416
        %v4418 = vmul.f32 %v4415, 1.442695
        %v4419 = vpow.pop %v4418
        %v4420 = vadd.f32 %v4372, %v4417
        %v4421 = vadd.f32 %v4373, %v4419
        %v4422 = vld [vmem:[#allocation4 + $0x4] sm:$0xff]
        %v4423 = vld [vmem:[#allocation4 + $0xc] sm:$0xff]
        %v4424 = vmul.f32 %v4417, %v4422
        %v4425 = vmul.f32 %v4419, %v4423
        %v4426 = vadd.f32 %v4382, %v4424
        %v4427 = vadd.f32 %v4383, %v4425
        %v4428 = vld [vmem:[%s1810 + $0x4] sm:$0xff]
        %v4429 = vld [vmem:[%s1810 + $0xc] sm:$0xff]
        %v4430 = vmul.f32 %v4417, %v4428
        %v4431 = vmul.f32 %v4419, %v4429
        %v4432 = vadd.f32 %v4392, %v4430
        %v4433 = vadd.f32 %v4393, %v4431
        %v4434 = vld [vmem:[%s2667 + $0x4] sm:$0xff]
        %v4435 = vld [vmem:[%s2667 + $0xc] sm:$0xff]
        %v4436 = vmul.f32 %v4417, %v4434
        %v4437 = vmul.f32 %v4419, %v4435
        %v4438 = vadd.f32 %v4402, %v4436
        %v4439 = vadd.f32 %v4403, %v4437
        %v4440 = vld [vmem:[%s3524 + $0x4] sm:$0xff]
        %v4441 = vld [vmem:[%s3524 + $0xc] sm:$0xff]
        %v4442 = vmul.f32 %v4417, %v4440
        %v4443 = vmul.f32 %v4419, %v4441
        %v4444 = vadd.f32 %v4412, %v4442
        %v4445 = vadd.f32 %v4413, %v4443
        %v4446 = vsub.f32 %v4086, %v4140
        %v4447 = vsub.f32 %v4087, %v4141
        %v4448 = vmul.f32 %v4446, 1.442695
        %v4449 = vpow.pop %v4448
        %v4450 = vmul.f32 %v4447, 1.442695
        %v4451 = vpow.pop %v4450
        %v4452 = vadd.f32 %v4420, %v4449
        %v4453 = vadd.f32 %v4421, %v4451
        %4456 = vrot.lane.b32.xlu0 %v4422, 126
        %v4457 = vpop.permute.xlu0 %4456
        %4458 = vrot.lane.b32.xlu0 %v4423, 126
        %v4459 = vpop.permute.xlu0 %4458
        %v4462 = vmul.f32 %v4449, %v4457
        %v4463 = vmul.f32 %v4451, %v4459
        %v4464 = vadd.f32 %v4426, %v4462
        %v4465 = vadd.f32 %v4427, %v4463
        %4468 = vrot.lane.b32.xlu0 %v4428, 126
        %v4469 = vpop.permute.xlu0 %4468
        %4470 = vrot.lane.b32.xlu0 %v4429, 126
        %v4471 = vpop.permute.xlu0 %4470
        %v4474 = vmul.f32 %v4449, %v4469
        %v4475 = vmul.f32 %v4451, %v4471
        %v4476 = vadd.f32 %v4432, %v4474
        %v4477 = vadd.f32 %v4433, %v4475
        %4480 = vrot.lane.b32.xlu0 %v4434, 126
        %v4481 = vpop.permute.xlu0 %4480
        %4482 = vrot.lane.b32.xlu0 %v4435, 126
        %v4483 = vpop.permute.xlu0 %4482
        %v4486 = vmul.f32 %v4449, %v4481
        %v4487 = vmul.f32 %v4451, %v4483
        %v4488 = vadd.f32 %v4438, %v4486
        %v4489 = vadd.f32 %v4439, %v4487
        %4492 = vrot.lane.b32.xlu0 %v4440, 126
        %v4493 = vpop.permute.xlu0 %4492
        %4494 = vrot.lane.b32.xlu0 %v4441, 126
        %v4495 = vpop.permute.xlu0 %4494
        %v4498 = vmul.f32 %v4449, %v4493
        %v4499 = vmul.f32 %v4451, %v4495
        %v4500 = vadd.f32 %v4444, %v4498
        %v4501 = vadd.f32 %v4445, %v4499
        %v4502 = vsub.f32 %v4124, %v4140
        %v4503 = vsub.f32 %v4125, %v4141
        %v4504 = vmul.f32 %v4502, 1.442695
        %v4505 = vpow.pop %v4504
        %v4506 = vmul.f32 %v4503, 1.442695
        %v4507 = vpow.pop %v4506
        %v4508 = vadd.f32 %v4452, %v4505
        %v4509 = vadd.f32 %v4453, %v4507
        %4510 = vrot.lane.b32.xlu0 %v4422, 124
        %v4511 = vpop.permute.xlu0 %4510
        %4512 = vrot.lane.b32.xlu0 %v4423, 124
        %v4513 = vpop.permute.xlu0 %4512
        %v4516 = vmul.f32 %v4505, %v4511
        %v4517 = vmul.f32 %v4507, %v4513
        %v4518 = vadd.f32 %v4464, %v4516
        %v4519 = vadd.f32 %v4465, %v4517
        %4520 = vrot.lane.b32.xlu0 %v4428, 124
        %v4521 = vpop.permute.xlu0 %4520
        %4522 = vrot.lane.b32.xlu0 %v4429, 124
        %v4523 = vpop.permute.xlu0 %4522
        %v4526 = vmul.f32 %v4505, %v4521
        %v4527 = vmul.f32 %v4507, %v4523
        %v4528 = vadd.f32 %v4476, %v4526
        %v4529 = vadd.f32 %v4477, %v4527
        %4530 = vrot.lane.b32.xlu0 %v4434, 124
        %v4531 = vpop.permute.xlu0 %4530
        %4532 = vrot.lane.b32.xlu0 %v4435, 124
        %v4533 = vpop.permute.xlu0 %4532
        %v4536 = vmul.f32 %v4505, %v4531
        %v4537 = vmul.f32 %v4507, %v4533
        %v4538 = vadd.f32 %v4488, %v4536
        %v4539 = vadd.f32 %v4489, %v4537
        %4540 = vrot.lane.b32.xlu0 %v4440, 124
        %v4541 = vpop.permute.xlu0 %4540
        %4542 = vrot.lane.b32.xlu0 %v4441, 124
        %v4543 = vpop.permute.xlu0 %4542
        %v4546 = vmul.f32 %v4505, %v4541
        %v4547 = vmul.f32 %v4507, %v4543
        %v4548 = vadd.f32 %v4500, %v4546
        %v4549 = vadd.f32 %v4501, %v4547
        %v4550 = vrcp.pop %v4508
        %v4551 = vrcp.pop %v4509
        %v4552 = vmul.f32 %v4518, %v4550
        %v4553 = vmul.f32 %v4519, %v4551
        %v4554 = vadd.f32 %v1107, %v4552
        %v4555 = vadd.f32 %v1112, %v4553
        %4556 = vst.msk [vmem:[%s340] sm:$0xff] %vm595, %v4554
        %4557 = vst.msk [vmem:[%s340 + $0x8] sm:$0xff] %vm595, %v4555
        %v4558 = vmul.f32 %v4528, %v4550
        %v4559 = vmul.f32 %v4529, %v4551
        %v4560 = vadd.f32 %v1964, %v4558
        %v4561 = vadd.f32 %v1969, %v4559
        %s4562 = scalar_lea.vmem %s340, 16 [#allocation10]
        %4563 = vst.msk [vmem:[%s4562] sm:$0xff] %vm595, %v4560
        %4564 = vst.msk [vmem:[%s4562 + $0x8] sm:$0xff] %vm595, %v4561
        %v4565 = vmul.f32 %v4538, %v4550
        %v4566 = vmul.f32 %v4539, %v4551
        %v4567 = vadd.f32 %v2821, %v4565
        %v4568 = vadd.f32 %v2826, %v4566
        %s4569 = scalar_lea.vmem %s340, 32 [#allocation10]
        %4570 = vst.msk [vmem:[%s4569] sm:$0xff] %vm595, %v4567
        %4571 = vst.msk [vmem:[%s4569 + $0x8] sm:$0xff] %vm595, %v4568
        %v4572 = vmul.f32 %v4548, %v4550
        %v4573 = vmul.f32 %v4549, %v4551
        %v4574 = vadd.f32 %v3678, %v4572
        %v4575 = vadd.f32 %v3683, %v4573
        %s4576 = scalar_lea.vmem %s340, 48 [#allocation10]
        %4577 = vst.msk [vmem:[%s4576] sm:$0xff] %vm595, %v4574
        %4578 = vst.msk [vmem:[%s4576 + $0x8] sm:$0xff] %vm595, %v4575
        %s4579 = sand.u32 %s210, 1
        %s4580 = scalar_lea.sflag [#allocation6], %s4579
        %s4581 = sand.u32 %s210, 1
        %s4582 = smul.addr %s4581, 64
        %s4583 = scalar_lea.vmem [#allocation10], %s4582
        // Predicated region
        $region61: #{a_call__.1} parent=51 // pred_check
          %p4584 = pneg %p220
        $region62: #{a_call__.1} parent=51 // pred_check_branch
          %4586 = sbr.rel (%p4584) target = $region64
        $region63: #{a_call__.1} parent=51 // pred_region
          %s4588 = ssub.s32 1024, 1024
          %4589 = vsyncadd %s4580, %s4588
          %s4590 = smul.addr %s24, 8
          %s4591 = smul.addr %s4590, 128
          %s4592 = scalar_lea.hbm %s8, %s4591
          %s4593 = sshll.u32 %s4583, 4
          %s4594 = int_to_ptr.vmem [resolvable:$true] %s4593
          %4599 = dma.vmem_to_hbm [thread:$0]  %s4594, 1024, %s4592, %s4580, 128, 128, 8
        $region64: #{a_call__.1} parent=51 // pred_fallthru
          _
      $region52: #{a_call__.1} parent=5 // pred_fallthru
        _
      %p4600 = scmp.le.s32.totalorder 2, %s19
      // Predicated region
      $region65: #{a_call__.1} parent=5 // pred_check
        %p4601 = pneg %p4600
      $region66: #{a_call__.1} parent=5 // pred_check_branch
        %4603 = sbr.rel (%p4601) target = $region68
      $region67: #{a_call__.1} parent=5 // pred_region
        %s4604 = ssub.s32 %s19, 2
        // Predicated region
        $region69: #{a_call__.1} parent=67 // pred_check
          %p4605 = pneg %p226
        $region70: #{a_call__.1} parent=67 // pred_check_branch
          %4607 = sbr.rel (%p4605) target = $region72
        $region71: #{a_call__.1} parent=67 // pred_region
          %s4608 = sand.u32 %s211, 1
          %s4609 = scalar_lea.sflag [#allocation6], %s4608
          %s4610 = sand.u32 %s211, 1
          %s4611 = smul.addr %s4610, 64
          %s4612 = scalar_lea.vmem [#allocation10], %s4611
          %4613 = dma.done %s4609, 1024
        $region72: #{a_call__.1} parent=67 // pred_fallthru
          _
      $region68: #{a_call__.1} parent=5 // pred_fallthru
        _
    $region6: #{a_call__.1} parent=1 // loop_footer
      %s23 = sadd.s32 1, %s19
    $region7: #{a_call__.1} parent=1 // loop_footer_branch
      %18 = sbr.rel target = $region3
    $region8: #{a_call__.1} parent=1 // loop_exit
      _
    %4614 = vsyncpa [#allocation6], 1
    %s4615 = scalar_lea.sflag [#allocation6], 1
    %4616 = vsyncpa %s4615, 1
    %4617 = vsyncpa [#allocation7], 1
    %s4618 = scalar_lea.sflag [#allocation7], 1
    %4619 = vsyncpa %s4618, 1
    %4620 = vsyncpa [#allocation9], 1

</llo_original>
